<compile_context>
chip_gen: v7x
topology: tpu7x:2x2x1
jax: 0.10.0
libtpu: 0.0.40
codegen_flags: <defaults>
</compile_context>

<pallas_src>
import jax
import jax.numpy as jnp
from jax import lax
from jax.experimental import pallas as pl
from jax.experimental.pallas import tpu as pltpu


def _round_up(x, m):
    return ((x + m - 1) // m) * m


# ----------------------------------------------------------------------------
# Fused Pallas kernels
# ----------------------------------------------------------------------------
def _make_inorm_leaky_kernel(S, m_pad, Ms, c_pad):
    """matmul -> InstanceNorm2d(affine=False, eps=1e-5) -> LeakyReLU(0.2).

    Processes S samples per grid step; per-sample stats over their Ms rows.
    """
    inv_ms = 1.0 / float(Ms)

    def kernel(a_ref, w_ref, o_ref):
        # (S*m_pad, K) x (K, C) -> (S*m_pad, C), f32 accumulation on the MXU.
        y = jnp.dot(a_ref[...], w_ref[...], preferred_element_type=jnp.float32)
        y3 = y.reshape(S, m_pad, c_pad)
        # One-pass stats: zero-padded rows (if any) contribute 0 to both sums,
        # so dividing by the true Ms is exact regardless of padding.
        s = jnp.sum(y3, axis=1, keepdims=True)
        ss = jnp.sum(y3 * y3, axis=1, keepdims=True)
        mean = s * inv_ms
        var = jnp.maximum(ss * inv_ms - mean * mean, 0.0)   # clamp cancellation
        yn = (y3 - mean) * lax.rsqrt(var + 1e-5)
        act = jnp.where(yn > 0, yn, 0.2 * yn)                # LeakyReLU(0.2)
        o_ref[...] = act.reshape(S * m_pad, c_pad).astype(o_ref.dtype)

    return kernel


def _bias_sigmoid_kernel(a_ref, w_ref, b_ref, o_ref):
    y = jnp.dot(a_ref[...], w_ref[...], preferred_element_type=jnp.float32)
    y = y + b_ref[...]
    # Numerically stable sigmoid: never overflows, stays strictly in (0, 1).
    z = jnp.exp(-jnp.abs(y))
    sig = jnp.where(y >= 0, 1.0 / (1.0 + z), z / (1.0 + z))
    o_ref[...] = sig.astype(o_ref.dtype)


def _fused_conv_call(a, w_mat, n_samples, m_pad, Ms, s_pack, *, bias, kind,
                     out_dtype):
    """a:(N*m_pad, K) bf16, w_mat:(K, c_pad) bf16 -> (N*m_pad, c_pad) out_dtype."""
    k_dim = a.shape[1]
    c_pad = w_mat.shape[1]
    rows = s_pack * m_pad                      # rows per grid step

    in_specs = [
        pl.BlockSpec((rows, k_dim), lambda n: (n, 0)),
        pl.BlockSpec((k_dim, c_pad), lambda n: (0, 0)),
    ]
    args = [a, w_mat]
    if kind == "sigmoid":
        kernel = _bias_sigmoid_kernel
        in_specs.append(pl.BlockSpec((1, c_pad), lambda n: (0, 0)))
        args.append(bias)
    else:
        kernel = _make_inorm_leaky_kernel(s_pack, m_pad, Ms, c_pad)

    return pl.pallas_call(
        kernel,
        out_shape=jax.ShapeDtypeStruct((n_samples * m_pad, c_pad), out_dtype),
        grid_spec=pltpu.PrefetchScalarGridSpec(
            num_scalar_prefetch=0,
            grid=(n_samples // s_pack,),
            in_specs=in_specs,
            out_specs=pl.BlockSpec((rows, c_pad), lambda n: (n, 0)),
        ),
        compiler_params=pltpu.CompilerParams(
            dimension_semantics=("parallel",)),
    )(*args)


# ----------------------------------------------------------------------------
# Conv2d(k=4, s, p) lowered to im2col + fused Pallas kernel
# ----------------------------------------------------------------------------
def _im2col(x, K, stride, pad):
    """x:(N,H,W,Cin) -> patches (N, OH*OW, K*K*Cin) with (kh,kw,ci) ordering."""
    # TODO(synk): patch extraction / padding kept as XLA glue; the hot matmul +
    # norm + activation path runs inside the Pallas kernels.
    N, H, W, Cin = x.shape
    xp = jnp.pad(x, ((0, 0), (pad, pad), (pad, pad), (0, 0)))
    OH = (H + 2 * pad - K) // stride + 1
    OW = (W + 2 * pad - K) // stride + 1
    cols = []
    for kh in range(K):
        for kw in range(K):
            cols.append(xp[:, kh:kh + stride * (OH - 1) + 1:stride,
                           kw:kw + stride * (OW - 1) + 1:stride, :])
    a = jnp.concatenate(cols, axis=-1)               # (N, OH, OW, K*K*Cin)
    return a.reshape(N, OH * OW, K * K * Cin), OH, OW


def conv2d_layer(x_nhwc, w, b, *, stride, pad, kind, out_dtype):
    """x:(N,H,W,Cin) NHWC; w: PyTorch layout (Cout,Cin,K,K); b:(Cout,) or None."""
    N, H, W, Cin = x_nhwc.shape
    Cout, _, Kk, _ = w.shape

    a3, OH, OW = _im2col(x_nhwc, Kk, stride, pad)    # (N, Ms, Kdim)
    Ms = OH * OW
    Kdim = Kk * Kk * Cin

    m_pad = _round_up(Ms, 16)                        # sublane-safe rows
    c_pad = _round_up(Cout, 128)                     # lane-dense output stores
    # K is intentionally NOT padded: block K extent == full array extent.

    a = jnp.pad(a3, ((0, 0), (0, m_pad - Ms), (0, 0)))
    a = a.reshape(N * m_pad, Kdim).astype(jnp.bfloat16)

    # (Cout,Cin,kh,kw) -> (kh,kw,ci,co) -> (Kdim, Cout): rows match im2col order
    w_mat = jnp.transpose(w, (2, 3, 1, 0)).reshape(Kdim, Cout)
    w_mat = jnp.pad(w_mat, ((0, 0), (0, c_pad - Cout))).astype(jnp.bfloat16)

    bias_p = None
    if kind == "sigmoid":
        bias_p = jnp.pad(b.reshape(1, -1).astype(jnp.float32),
                         ((0, 0), (0, c_pad - Cout)))

    # Pack samples per grid step until M reaches ~256 rows (or batch exhausted)
    # so deep layers fill the MXU and don't pay per-step overhead per sample.
    s_pack = 1
    while s_pack < N and s_pack * m_pad < 256 and N % (2 * s_pack) == 0:
        s_pack *= 2

    out = _fused_conv_call(a, w_mat, N, m_pad, Ms, s_pack,
                           bias=bias_p, kind=kind, out_dtype=out_dtype)
    out = out.reshape(N, m_pad, c_pad)[:, :Ms, :Cout]
    return out.reshape(N, OH, OW, Cout)


# ----------------------------------------------------------------------------
# Discriminator
# ----------------------------------------------------------------------------
def init_discriminator_params(key, in_ch, features):
    chans = [in_ch, features * 8, features * 4, features * 2, features, 1]
    params = []
    for i in range(5):
        key, kw, kb = jax.random.split(key, 3)
        cin, cout = chans[i], chans[i + 1]
        w = jax.random.normal(kw, (cout, cin, 4, 4), jnp.float32) * 0.05
        b = jax.random.normal(kb, (cout,), jnp.float32) * 0.05
        params.append((w, b))
    return params


def discriminator_forward(x_nchw, params):
    x = jnp.transpose(x_nchw, (0, 2, 3, 1)).astype(jnp.float32)  # NCHW -> NHWC

    # TODO(synk): layers 2-5 could additionally be fused into one VMEM-resident
    # pallas_call (activations never leave VMEM); kept per-layer for robustness.
    # 4 conv blocks: Conv2d(4,2,1) + InstanceNorm2d + LeakyReLU(0.2)
    # (conv bias omitted: exactly cancelled by InstanceNorm with affine=False)
    for li in range(4):
        w, _ = params[li]
        x = conv2d_layer(x, w, None, stride=2, pad=1, kind="inorm_leaky",
                         out_dtype=jnp.bfloat16)

    # final: Conv2d(features, 1, 4, 2, 0) + Sigmoid (bias kept, f32 output)
    w, b = params[4]
    x = conv2d_layer(x, w, b, stride=2, pad=0, kind="sigmoid",
                     out_dtype=jnp.float32)

    return jnp.transpose(x, (0, 3, 1, 2))  # NHWC -> NCHW


if __name__ == "__main__":
    IN_CH, FEATURES, BATCH, IMG = 3, 8, 2, 64   # 64x64 needed for 5 stride-2 convs

    key = jax.random.PRNGKey(0)
    key, kx = jax.random.split(key)
    x = jax.random.normal(kx, (BATCH, IN_CH, IMG, IMG), jnp.float32)
    params = init_discriminator_params(key, IN_CH, FEATURES)

    out = jax.jit(discriminator_forward)(x, params)
    out = jax.block_until_ready(out)

    assert out.shape == (BATCH, 1, 1, 1), out.shape
    assert bool(jnp.all(jnp.isfinite(out)))
    assert bool(jnp.all((out > 0.0) & (out < 1.0)))   # sigmoid range
    print("KERNEL_OK")
</pallas_src>

<mosaic_0001>
module attributes {stable_mosaic.version = 11 : i64} {
  func.func @kernel(%arg0: i32, %arg1: memref<1024x48xbf16, #tpu.memory_space<vmem>>, %arg2: memref<48x128xbf16, #tpu.memory_space<vmem>>, %arg3: memref<1024x128xbf16, #tpu.memory_space<vmem>>) attributes {dimension_semantics = [#tpu.dimension_semantics<parallel>], iteration_bounds = array<i64: 2>, scalar_prefetch = 0 : i64, scratch_operands = 0 : i64, tpu.core_type = #tpu.core_type<tc>, window_params = [{transform_indices = @transform_0, window_bounds = array<i64: 1024, 48>}, {pipeline_mode = #tpu.pipeline_mode<synchronous>, transform_indices = @transform_1, window_bounds = array<i64: 48, 128>}, {transform_indices = @transform_2, window_bounds = array<i64: 1024, 128>}]} {
    %c0 = arith.constant 0 : index
    %c0_0 = arith.constant 0 : index
    %0 = vector.load %arg1[%c0, %c0_0] : memref<1024x48xbf16, #tpu.memory_space<vmem>>, vector<1024x48xbf16>
    %c0_1 = arith.constant 0 : index
    %c0_2 = arith.constant 0 : index
    %1 = vector.load %arg2[%c0_1, %c0_2] : memref<48x128xbf16, #tpu.memory_space<vmem>>, vector<48x128xbf16>
    %cst = arith.constant dense<0.000000e+00> : vector<1024x128xf32>
    %2 = tpu.matmul %0, %1, %cst {dimension_numbers = #tpu.dot_dimension_numbers<[1], [0], [0], [1], [0, 0, 1, 1], [], []>} : vector<1024x48xbf16>, vector<48x128xbf16>, vector<1024x128xf32> -> vector<1024x128xf32>
    %3 = vector.shape_cast %2 : vector<1024x128xf32> to vector<1x1024x128xf32>
    %cst_3 = arith.constant dense<0.000000e+00> : vector<1x128xf32>
    %4 = vector.multi_reduction <add>, %3, %cst_3 [1] : vector<1x1024x128xf32> to vector<1x128xf32>
    %5 = vector.shape_cast %4 : vector<1x128xf32> to vector<1x1x128xf32>
    %6 = arith.mulf %3, %3 : vector<1x1024x128xf32>
    %cst_4 = arith.constant dense<0.000000e+00> : vector<1x128xf32>
    %7 = vector.multi_reduction <add>, %6, %cst_4 [1] : vector<1x1024x128xf32> to vector<1x128xf32>
    %8 = vector.shape_cast %7 : vector<1x128xf32> to vector<1x1x128xf32>
    %cst_5 = arith.constant 9.765625E-4 : f32
    %9 = vector.broadcast %cst_5 : f32 to vector<1x1x128xf32>
    %10 = arith.mulf %5, %9 : vector<1x1x128xf32>
    %cst_6 = arith.constant 9.765625E-4 : f32
    %11 = vector.broadcast %cst_6 : f32 to vector<1x1x128xf32>
    %12 = arith.mulf %8, %11 : vector<1x1x128xf32>
    %13 = arith.mulf %10, %10 : vector<1x1x128xf32>
    %14 = arith.subf %12, %13 : vector<1x1x128xf32>
    %cst_7 = arith.constant 0.000000e+00 : f32
    %15 = vector.broadcast %cst_7 : f32 to vector<1x1x128xf32>
    %16 = arith.maximumf %14, %15 : vector<1x1x128xf32>
    %17 = vector.broadcast %10 : vector<1x1x128xf32> to vector<1x1024x128xf32>
    %18 = arith.subf %3, %17 : vector<1x1024x128xf32>
    %cst_8 = arith.constant 9.99999974E-6 : f32
    %19 = vector.broadcast %cst_8 : f32 to vector<1x1x128xf32>
    %20 = arith.addf %16, %19 : vector<1x1x128xf32>
    %21 = math.rsqrt %20 : vector<1x1x128xf32>
    %22 = vector.broadcast %21 : vector<1x1x128xf32> to vector<1x1024x128xf32>
    %23 = arith.mulf %18, %22 : vector<1x1024x128xf32>
    %cst_9 = arith.constant 0.000000e+00 : f32
    %24 = vector.broadcast %cst_9 : f32 to vector<1x1024x128xf32>
    %25 = arith.cmpf ogt, %23, %24 : vector<1x1024x128xf32>
    %cst_10 = arith.constant 2.000000e-01 : f32
    %26 = vector.broadcast %cst_10 : f32 to vector<1x1024x128xf32>
    %27 = arith.mulf %26, %23 : vector<1x1024x128xf32>
    %28 = arith.select %25, %23, %27 : vector<1x1024x128xi1>, vector<1x1024x128xf32>
    %29 = vector.shape_cast %28 : vector<1x1024x128xf32> to vector<1024x128xf32>
    %30 = arith.truncf %29 : vector<1024x128xf32> to vector<1024x128xbf16>
    %c0_11 = arith.constant 0 : index
    %c0_12 = arith.constant 0 : index
    %31 = vector.load %arg3[%c0_11, %c0_12] : memref<1024x128xbf16, #tpu.memory_space<vmem>>, vector<1024x128xbf16>
    tpu.vector_store %arg3[%c0_11, %c0_12], %30 {strides = array<i32>} : memref<1024x128xbf16, #tpu.memory_space<vmem>>, vector<1024x128xbf16>,
    return
  }
  func.func @transform_0(%arg0: i32) -> (i32, i32) {
    %c0_i32 = arith.constant 0 : i32
    %c0_i32_0 = arith.constant 0 : i32
    return %arg0, %c0_i32 : i32, i32
  }
  func.func @transform_1(%arg0: i32) -> (i32, i32) {
    %c0_i32 = arith.constant 0 : i32
    %c0_i32_0 = arith.constant 0 : i32
    %c0_i32_1 = arith.constant 0 : i32
    return %c0_i32, %c0_i32_0 : i32, i32
  }
  func.func @transform_2(%arg0: i32) -> (i32, i32) {
    %c0_i32 = arith.constant 0 : i32
    %c0_i32_0 = arith.constant 0 : i32
    return %arg0, %c0_i32 : i32, i32
  }
}

module attributes {stable_mosaic.version = 11 : i64} {
  func.func @kernel(%arg0: i32, %arg1: memref<256x1024xbf16, #tpu.memory_space<vmem>>, %arg2: memref<1024x128xbf16, #tpu.memory_space<vmem>>, %arg3: memref<256x128xbf16, #tpu.memory_space<vmem>>) attributes {dimension_semantics = [#tpu.dimension_semantics<parallel>], iteration_bounds = array<i64: 2>, scalar_prefetch = 0 : i64, scratch_operands = 0 : i64, tpu.core_type = #tpu.core_type<tc>, window_params = [{transform_indices = @transform_0, window_bounds = array<i64: 256, 1024>}, {pipeline_mode = #tpu.pipeline_mode<synchronous>, transform_indices = @transform_1, window_bounds = array<i64: 1024, 128>}, {transform_indices = @transform_2, window_bounds = array<i64: 256, 128>}]} {
    %c0 = arith.constant 0 : index
    %c0_0 = arith.constant 0 : index
    %0 = vector.load %arg1[%c0, %c0_0] : memref<256x1024xbf16, #tpu.memory_space<vmem>>, vector<256x1024xbf16>
    %c0_1 = arith.constant 0 : index
    %c0_2 = arith.constant 0 : index
    %1 = vector.load %arg2[%c0_1, %c0_2] : memref<1024x128xbf16, #tpu.memory_space<vmem>>, vector<1024x128xbf16>
    %cst = arith.constant dense<0.000000e+00> : vector<256x128xf32>
    %2 = tpu.matmul %0, %1, %cst {dimension_numbers = #tpu.dot_dimension_numbers<[1], [0], [0], [1], [0, 0, 1, 1], [], []>} : vector<256x1024xbf16>, vector<1024x128xbf16>, vector<256x128xf32> -> vector<256x128xf32>
    %3 = vector.shape_cast %2 : vector<256x128xf32> to vector<1x256x128xf32>
    %cst_3 = arith.constant dense<0.000000e+00> : vector<1x128xf32>
    %4 = vector.multi_reduction <add>, %3, %cst_3 [1] : vector<1x256x128xf32> to vector<1x128xf32>
    %5 = vector.shape_cast %4 : vector<1x128xf32> to vector<1x1x128xf32>
    %6 = arith.mulf %3, %3 : vector<1x256x128xf32>
    %cst_4 = arith.constant dense<0.000000e+00> : vector<1x128xf32>
    %7 = vector.multi_reduction <add>, %6, %cst_4 [1] : vector<1x256x128xf32> to vector<1x128xf32>
    %8 = vector.shape_cast %7 : vector<1x128xf32> to vector<1x1x128xf32>
    %cst_5 = arith.constant 3.906250e-03 : f32
    %9 = vector.broadcast %cst_5 : f32 to vector<1x1x128xf32>
    %10 = arith.mulf %5, %9 : vector<1x1x128xf32>
    %cst_6 = arith.constant 3.906250e-03 : f32
    %11 = vector.broadcast %cst_6 : f32 to vector<1x1x128xf32>
    %12 = arith.mulf %8, %11 : vector<1x1x128xf32>
    %13 = arith.mulf %10, %10 : vector<1x1x128xf32>
    %14 = arith.subf %12, %13 : vector<1x1x128xf32>
    %cst_7 = arith.constant 0.000000e+00 : f32
    %15 = vector.broadcast %cst_7 : f32 to vector<1x1x128xf32>
    %16 = arith.maximumf %14, %15 : vector<1x1x128xf32>
    %17 = vector.broadcast %10 : vector<1x1x128xf32> to vector<1x256x128xf32>
    %18 = arith.subf %3, %17 : vector<1x256x128xf32>
    %cst_8 = arith.constant 9.99999974E-6 : f32
    %19 = vector.broadcast %cst_8 : f32 to vector<1x1x128xf32>
    %20 = arith.addf %16, %19 : vector<1x1x128xf32>
    %21 = math.rsqrt %20 : vector<1x1x128xf32>
    %22 = vector.broadcast %21 : vector<1x1x128xf32> to vector<1x256x128xf32>
    %23 = arith.mulf %18, %22 : vector<1x256x128xf32>
    %cst_9 = arith.constant 0.000000e+00 : f32
    %24 = vector.broadcast %cst_9 : f32 to vector<1x256x128xf32>
    %25 = arith.cmpf ogt, %23, %24 : vector<1x256x128xf32>
    %cst_10 = arith.constant 2.000000e-01 : f32
    %26 = vector.broadcast %cst_10 : f32 to vector<1x256x128xf32>
    %27 = arith.mulf %26, %23 : vector<1x256x128xf32>
    %28 = arith.select %25, %23, %27 : vector<1x256x128xi1>, vector<1x256x128xf32>
    %29 = vector.shape_cast %28 : vector<1x256x128xf32> to vector<256x128xf32>
    %30 = arith.truncf %29 : vector<256x128xf32> to vector<256x128xbf16>
    %c0_11 = arith.constant 0 : index
    %c0_12 = arith.constant 0 : index
    %31 = vector.load %arg3[%c0_11, %c0_12] : memref<256x128xbf16, #tpu.memory_space<vmem>>, vector<256x128xbf16>
    tpu.vector_store %arg3[%c0_11, %c0_12], %30 {strides = array<i32>} : memref<256x128xbf16, #tpu.memory_space<vmem>>, vector<256x128xbf16>,
    return
  }
  func.func @transform_0(%arg0: i32) -> (i32, i32) {
    %c0_i32 = arith.constant 0 : i32
    %c0_i32_0 = arith.constant 0 : i32
    return %arg0, %c0_i32 : i32, i32
  }
  func.func @transform_1(%arg0: i32) -> (i32, i32) {
    %c0_i32 = arith.constant 0 : i32
    %c0_i32_0 = arith.constant 0 : i32
    %c0_i32_1 = arith.constant 0 : i32
    return %c0_i32, %c0_i32_0 : i32, i32
  }
  func.func @transform_2(%arg0: i32) -> (i32, i32) {
    %c0_i32 = arith.constant 0 : i32
    %c0_i32_0 = arith.constant 0 : i32
    return %arg0, %c0_i32 : i32, i32
  }
}

module attributes {stable_mosaic.version = 11 : i64} {
  func.func @kernel(%arg0: i32, %arg1: memref<128x512xbf16, #tpu.memory_space<vmem>>, %arg2: memref<512x128xbf16, #tpu.memory_space<vmem>>, %arg3: memref<128x128xbf16, #tpu.memory_space<vmem>>) attributes {dimension_semantics = [#tpu.dimension_semantics<parallel>], iteration_bounds = array<i64: 1>, scalar_prefetch = 0 : i64, scratch_operands = 0 : i64, tpu.core_type = #tpu.core_type<tc>, window_params = [{transform_indices = @transform_0, window_bounds = array<i64: 128, 512>}, {pipeline_mode = #tpu.pipeline_mode<synchronous>, transform_indices = @transform_1, window_bounds = array<i64: 512, 128>}, {transform_indices = @transform_2, window_bounds = array<i64: 128, 128>}]} {
    %c0 = arith.constant 0 : index
    %c0_0 = arith.constant 0 : index
    %0 = vector.load %arg1[%c0, %c0_0] : memref<128x512xbf16, #tpu.memory_space<vmem>>, vector<128x512xbf16>
    %c0_1 = arith.constant 0 : index
    %c0_2 = arith.constant 0 : index
    %1 = vector.load %arg2[%c0_1, %c0_2] : memref<512x128xbf16, #tpu.memory_space<vmem>>, vector<512x128xbf16>
    %cst = arith.constant dense<0.000000e+00> : vector<128x128xf32>
    %2 = tpu.matmul %0, %1, %cst {dimension_numbers = #tpu.dot_dimension_numbers<[1], [0], [0], [1], [0, 0, 1, 1], [], []>} : vector<128x512xbf16>, vector<512x128xbf16>, vector<128x128xf32> -> vector<128x128xf32>
    %3 = vector.shape_cast %2 : vector<128x128xf32> to vector<2x64x128xf32>
    %cst_3 = arith.constant dense<0.000000e+00> : vector<2x128xf32>
    %4 = vector.multi_reduction <add>, %3, %cst_3 [1] : vector<2x64x128xf32> to vector<2x128xf32>
    %5 = vector.shape_cast %4 : vector<2x128xf32> to vector<2x1x128xf32>
    %6 = arith.mulf %3, %3 : vector<2x64x128xf32>
    %cst_4 = arith.constant dense<0.000000e+00> : vector<2x128xf32>
    %7 = vector.multi_reduction <add>, %6, %cst_4 [1] : vector<2x64x128xf32> to vector<2x128xf32>
    %8 = vector.shape_cast %7 : vector<2x128xf32> to vector<2x1x128xf32>
    %cst_5 = arith.constant 1.562500e-02 : f32
    %9 = vector.broadcast %cst_5 : f32 to vector<2x1x128xf32>
    %10 = arith.mulf %5, %9 : vector<2x1x128xf32>
    %cst_6 = arith.constant 1.562500e-02 : f32
    %11 = vector.broadcast %cst_6 : f32 to vector<2x1x128xf32>
    %12 = arith.mulf %8, %11 : vector<2x1x128xf32>
    %13 = arith.mulf %10, %10 : vector<2x1x128xf32>
    %14 = arith.subf %12, %13 : vector<2x1x128xf32>
    %cst_7 = arith.constant 0.000000e+00 : f32
    %15 = vector.broadcast %cst_7 : f32 to vector<2x1x128xf32>
    %16 = arith.maximumf %14, %15 : vector<2x1x128xf32>
    %17 = vector.broadcast %10 : vector<2x1x128xf32> to vector<2x64x128xf32>
    %18 = arith.subf %3, %17 : vector<2x64x128xf32>
    %cst_8 = arith.constant 9.99999974E-6 : f32
    %19 = vector.broadcast %cst_8 : f32 to vector<2x1x128xf32>
    %20 = arith.addf %16, %19 : vector<2x1x128xf32>
    %21 = math.rsqrt %20 : vector<2x1x128xf32>
    %22 = vector.broadcast %21 : vector<2x1x128xf32> to vector<2x64x128xf32>
    %23 = arith.mulf %18, %22 : vector<2x64x128xf32>
    %cst_9 = arith.constant 0.000000e+00 : f32
    %24 = vector.broadcast %cst_9 : f32 to vector<2x64x128xf32>
    %25 = arith.cmpf ogt, %23, %24 : vector<2x64x128xf32>
    %cst_10 = arith.constant 2.000000e-01 : f32
    %26 = vector.broadcast %cst_10 : f32 to vector<2x64x128xf32>
    %27 = arith.mulf %26, %23 : vector<2x64x128xf32>
    %28 = arith.select %25, %23, %27 : vector<2x64x128xi1>, vector<2x64x128xf32>
    %29 = vector.shape_cast %28 : vector<2x64x128xf32> to vector<128x128xf32>
    %30 = arith.truncf %29 : vector<128x128xf32> to vector<128x128xbf16>
    %c0_11 = arith.constant 0 : index
    %c0_12 = arith.constant 0 : index
    %31 = vector.load %arg3[%c0_11, %c0_12] : memref<128x128xbf16, #tpu.memory_space<vmem>>, vector<128x128xbf16>
    tpu.vector_store %arg3[%c0_11, %c0_12], %30 {strides = array<i32>} : memref<128x128xbf16, #tpu.memory_space<vmem>>, vector<128x128xbf16>,
    return
  }
  func.func @transform_0(%arg0: i32) -> (i32, i32) {
    %c0_i32 = arith.constant 0 : i32
    %c0_i32_0 = arith.constant 0 : i32
    return %arg0, %c0_i32 : i32, i32
  }
  func.func @transform_1(%arg0: i32) -> (i32, i32) {
    %c0_i32 = arith.constant 0 : i32
    %c0_i32_0 = arith.constant 0 : i32
    %c0_i32_1 = arith.constant 0 : i32
    return %c0_i32, %c0_i32_0 : i32, i32
  }
  func.func @transform_2(%arg0: i32) -> (i32, i32) {
    %c0_i32 = arith.constant 0 : i32
    %c0_i32_0 = arith.constant 0 : i32
    return %arg0, %c0_i32 : i32, i32
  }
}

module attributes {stable_mosaic.version = 11 : i64} {
  func.func @kernel(%arg0: i32, %arg1: memref<32x256xbf16, #tpu.memory_space<vmem>>, %arg2: memref<256x128xbf16, #tpu.memory_space<vmem>>, %arg3: memref<32x128xbf16, #tpu.memory_space<vmem>>) attributes {dimension_semantics = [#tpu.dimension_semantics<parallel>], iteration_bounds = array<i64: 1>, scalar_prefetch = 0 : i64, scratch_operands = 0 : i64, tpu.core_type = #tpu.core_type<tc>, window_params = [{transform_indices = @transform_0, window_bounds = array<i64: 32, 256>}, {pipeline_mode = #tpu.pipeline_mode<synchronous>, transform_indices = @transform_1, window_bounds = array<i64: 256, 128>}, {transform_indices = @transform_2, window_bounds = array<i64: 32, 128>}]} {
    %c0 = arith.constant 0 : index
    %c0_0 = arith.constant 0 : index
    %0 = vector.load %arg1[%c0, %c0_0] : memref<32x256xbf16, #tpu.memory_space<vmem>>, vector<32x256xbf16>
    %c0_1 = arith.constant 0 : index
    %c0_2 = arith.constant 0 : index
    %1 = vector.load %arg2[%c0_1, %c0_2] : memref<256x128xbf16, #tpu.memory_space<vmem>>, vector<256x128xbf16>
    %cst = arith.constant dense<0.000000e+00> : vector<32x128xf32>
    %2 = tpu.matmul %0, %1, %cst {dimension_numbers = #tpu.dot_dimension_numbers<[1], [0], [0], [1], [0, 0, 1, 1], [], []>} : vector<32x256xbf16>, vector<256x128xbf16>, vector<32x128xf32> -> vector<32x128xf32>
    %3 = vector.shape_cast %2 : vector<32x128xf32> to vector<2x16x128xf32>
    %cst_3 = arith.constant dense<0.000000e+00> : vector<2x128xf32>
    %4 = vector.multi_reduction <add>, %3, %cst_3 [1] : vector<2x16x128xf32> to vector<2x128xf32>
    %5 = vector.shape_cast %4 : vector<2x128xf32> to vector<2x1x128xf32>
    %6 = arith.mulf %3, %3 : vector<2x16x128xf32>
    %cst_4 = arith.constant dense<0.000000e+00> : vector<2x128xf32>
    %7 = vector.multi_reduction <add>, %6, %cst_4 [1] : vector<2x16x128xf32> to vector<2x128xf32>
    %8 = vector.shape_cast %7 : vector<2x128xf32> to vector<2x1x128xf32>
    %cst_5 = arith.constant 6.250000e-02 : f32
    %9 = vector.broadcast %cst_5 : f32 to vector<2x1x128xf32>
    %10 = arith.mulf %5, %9 : vector<2x1x128xf32>
    %cst_6 = arith.constant 6.250000e-02 : f32
    %11 = vector.broadcast %cst_6 : f32 to vector<2x1x128xf32>
    %12 = arith.mulf %8, %11 : vector<2x1x128xf32>
    %13 = arith.mulf %10, %10 : vector<2x1x128xf32>
    %14 = arith.subf %12, %13 : vector<2x1x128xf32>
    %cst_7 = arith.constant 0.000000e+00 : f32
    %15 = vector.broadcast %cst_7 : f32 to vector<2x1x128xf32>
    %16 = arith.maximumf %14, %15 : vector<2x1x128xf32>
    %17 = vector.broadcast %10 : vector<2x1x128xf32> to vector<2x16x128xf32>
    %18 = arith.subf %3, %17 : vector<2x16x128xf32>
    %cst_8 = arith.constant 9.99999974E-6 : f32
    %19 = vector.broadcast %cst_8 : f32 to vector<2x1x128xf32>
    %20 = arith.addf %16, %19 : vector<2x1x128xf32>
    %21 = math.rsqrt %20 : vector<2x1x128xf32>
    %22 = vector.broadcast %21 : vector<2x1x128xf32> to vector<2x16x128xf32>
    %23 = arith.mulf %18, %22 : vector<2x16x128xf32>
    %cst_9 = arith.constant 0.000000e+00 : f32
    %24 = vector.broadcast %cst_9 : f32 to vector<2x16x128xf32>
    %25 = arith.cmpf ogt, %23, %24 : vector<2x16x128xf32>
    %cst_10 = arith.constant 2.000000e-01 : f32
    %26 = vector.broadcast %cst_10 : f32 to vector<2x16x128xf32>
    %27 = arith.mulf %26, %23 : vector<2x16x128xf32>
    %28 = arith.select %25, %23, %27 : vector<2x16x128xi1>, vector<2x16x128xf32>
    %29 = vector.shape_cast %28 : vector<2x16x128xf32> to vector<32x128xf32>
    %30 = arith.truncf %29 : vector<32x128xf32> to vector<32x128xbf16>
    %c0_11 = arith.constant 0 : index
    %c0_12 = arith.constant 0 : index
    %31 = vector.load %arg3[%c0_11, %c0_12] : memref<32x128xbf16, #tpu.memory_space<vmem>>, vector<32x128xbf16>
    tpu.vector_store %arg3[%c0_11, %c0_12], %30 {strides = array<i32>} : memref<32x128xbf16, #tpu.memory_space<vmem>>, vector<32x128xbf16>,
    return
  }
  func.func @transform_0(%arg0: i32) -> (i32, i32) {
    %c0_i32 = arith.constant 0 : i32
    %c0_i32_0 = arith.constant 0 : i32
    return %arg0, %c0_i32 : i32, i32
  }
  func.func @transform_1(%arg0: i32) -> (i32, i32) {
    %c0_i32 = arith.constant 0 : i32
    %c0_i32_0 = arith.constant 0 : i32
    %c0_i32_1 = arith.constant 0 : i32
    return %c0_i32, %c0_i32_0 : i32, i32
  }
  func.func @transform_2(%arg0: i32) -> (i32, i32) {
    %c0_i32 = arith.constant 0 : i32
    %c0_i32_0 = arith.constant 0 : i32
    return %arg0, %c0_i32 : i32, i32
  }
}

module attributes {stable_mosaic.version = 11 : i64} {
  func.func @_bias_sigmoid_kernel(%arg0: i32, %arg1: memref<32x128xbf16, #tpu.memory_space<vmem>>, %arg2: memref<128x128xbf16, #tpu.memory_space<vmem>>, %arg3: memref<1x128xf32, #tpu.memory_space<vmem>>, %arg4: memref<32x128xf32, #tpu.memory_space<vmem>>) attributes {dimension_semantics = [#tpu.dimension_semantics<parallel>], iteration_bounds = array<i64: 1>, scalar_prefetch = 0 : i64, scratch_operands = 0 : i64, tpu.core_type = #tpu.core_type<tc>, window_params = [{transform_indices = @transform_0, window_bounds = array<i64: 32, 128>}, {pipeline_mode = #tpu.pipeline_mode<synchronous>, transform_indices = @transform_1, window_bounds = array<i64: 128, 128>}, {pipeline_mode = #tpu.pipeline_mode<synchronous>, transform_indices = @transform_2, window_bounds = array<i64: 1, 128>}, {transform_indices = @transform_3, window_bounds = array<i64: 32, 128>}]} {
    %c0 = arith.constant 0 : index
    %c0_0 = arith.constant 0 : index
    %0 = vector.load %arg1[%c0, %c0_0] : memref<32x128xbf16, #tpu.memory_space<vmem>>, vector<32x128xbf16>
    %c0_1 = arith.constant 0 : index
    %c0_2 = arith.constant 0 : index
    %1 = vector.load %arg2[%c0_1, %c0_2] : memref<128x128xbf16, #tpu.memory_space<vmem>>, vector<128x128xbf16>
    %cst = arith.constant dense<0.000000e+00> : vector<32x128xf32>
    %2 = tpu.matmul %0, %1, %cst {dimension_numbers = #tpu.dot_dimension_numbers<[1], [0], [0], [1], [0, 0, 1, 1], [], []>} : vector<32x128xbf16>, vector<128x128xbf16>, vector<32x128xf32> -> vector<32x128xf32>
    %c0_3 = arith.constant 0 : index
    %c0_4 = arith.constant 0 : index
    %3 = vector.load %arg3[%c0_3, %c0_4] : memref<1x128xf32, #tpu.memory_space<vmem>>, vector<1x128xf32>
    %4 = vector.broadcast %3 : vector<1x128xf32> to vector<32x128xf32>
    %5 = arith.addf %2, %4 : vector<32x128xf32>
    %6 = math.absf %5 : vector<32x128xf32>
    %cst_5 = arith.constant 0.000000e+00 : f32
    %7 = vector.broadcast %cst_5 : f32 to vector<32x128xf32>
    %8 = arith.subf %7, %6 : vector<32x128xf32>
    %9 = math.exp %8 : vector<32x128xf32>
    %cst_6 = arith.constant 0.000000e+00 : f32
    %10 = vector.broadcast %cst_6 : f32 to vector<32x128xf32>
    %11 = arith.cmpf oge, %5, %10 : vector<32x128xf32>
    %cst_7 = arith.constant 1.000000e+00 : f32
    %12 = vector.broadcast %cst_7 : f32 to vector<32x128xf32>
    %13 = arith.addf %12, %9 : vector<32x128xf32>
    %cst_8 = arith.constant 1.000000e+00 : f32
    %14 = vector.broadcast %cst_8 : f32 to vector<32x128xf32>
    %15 = arith.divf %14, %13 : vector<32x128xf32>
    %cst_9 = arith.constant 1.000000e+00 : f32
    %16 = vector.broadcast %cst_9 : f32 to vector<32x128xf32>
    %17 = arith.addf %16, %9 : vector<32x128xf32>
    %18 = arith.divf %9, %17 : vector<32x128xf32>
    %19 = arith.select %11, %15, %18 : vector<32x128xi1>, vector<32x128xf32>
    %c0_10 = arith.constant 0 : index
    %c0_11 = arith.constant 0 : index
    %20 = vector.load %arg4[%c0_10, %c0_11] : memref<32x128xf32, #tpu.memory_space<vmem>>, vector<32x128xf32>
    tpu.vector_store %arg4[%c0_10, %c0_11], %19 {strides = array<i32>} : memref<32x128xf32, #tpu.memory_space<vmem>>, vector<32x128xf32>,
    return
  }
  func.func @transform_0(%arg0: i32) -> (i32, i32) {
    %c0_i32 = arith.constant 0 : i32
    %c0_i32_0 = arith.constant 0 : i32
    return %arg0, %c0_i32 : i32, i32
  }
  func.func @transform_1(%arg0: i32) -> (i32, i32) {
    %c0_i32 = arith.constant 0 : i32
    %c0_i32_0 = arith.constant 0 : i32
    %c0_i32_1 = arith.constant 0 : i32
    return %c0_i32, %c0_i32_0 : i32, i32
  }
  func.func @transform_2(%arg0: i32) -> (i32, i32) {
    %c0_i32 = arith.constant 0 : i32
    %c0_i32_0 = arith.constant 0 : i32
    %c0_i32_1 = arith.constant 0 : i32
    return %c0_i32, %c0_i32_0 : i32, i32
  }
  func.func @transform_3(%arg0: i32) -> (i32, i32) {
    %c0_i32 = arith.constant 0 : i32
    %c0_i32_0 = arith.constant 0 : i32
    return %arg0, %c0_i32 : i32, i32
  }
}

</mosaic_0001>

<llo_original>
// kernel: discriminator_forward.5
$region0: #{discriminator_forward.5}
  #allocation0 [shape = 'u32[]', space=smem, size = 0x4, offset = 0x4, fixed_abs, tag = 'smem constant byte address 0x4 - core index']
  #allocation1 [shape = 'u32[144,128]{1,0:T(1,128)}', space=vmem, size = 0x12000, scoped, tag = 'internal scratch']
  %s0 = inlined_call_operand.vmem [shape: bf16[2048,48], index: 0, kind: input, shape index: {}]
  %s1 = inlined_call_operand.vmem [shape: bf16[48,128], index: 1, kind: input, shape index: {}]
  %s2 = inlined_call_operand.vmem [shape: bf16[2048,128], index: 2, kind: output, shape index: {}]
  %s3 = sld [smem:[#allocation0]]
  $region41: #{discriminator_forward.5} parent=0
    _
  %s5 = ssub.s32 1, %s3
  %s6 = scalar_select 0, %s5, %s3
  loop: start=0, step=1, limit=4
  $region2: #{discriminator_forward.5} parent=0 // loop_pre_header
    _
  $region3: #{discriminator_forward.5} parent=0 // loop_header
    %s8 = sphi 0, %s12
    %p9 = scmp.ge.s32.totalorder %s8, 4
    %s18 = sphi 0, %s20
    %s21 = sphi 0, %s18
    %s22 = sphi 0, %s21
    %s38 = sphi 0, %s22
    %s42 = sphi 0, %s42
    %s44 = sphi 0, %s42
    %s45 = sphi 0, %s44
    %s59 = sphi 0, %s45
    %s65 = sphi 0, %s67
    %s68 = sphi 0, %s65
    %s69 = sphi 0, %s68
    %s85 = sphi 0, %s69
  $region4: #{discriminator_forward.5} parent=0 // loop_header_branch
    %11 = sbr.rel (%p9) target = $region8
  $region5: #{discriminator_forward.5} parent=0 // loop_body
    %s13 = ssub.s32 %s8, 1
    %s14 = ssub.s32 %s8, 2
    %s15 = sadd.s32 %s8, 1
    %s16 = ssub.s32 %s8, %s15
    %p17 = scmp.eq.s32.totalorder %s16, 0
    %s19 = sadd.s32 %s18, 1
    %s20 = scalar_select %p17, %s18, %s19
    %p23 = pneg %p17
    %p24 = scmp.eq.s32.totalorder %s8, 1
    %p25 = por %p23, %p24
    %p26 = scmp.ne.s32.totalorder %s18, %s21
    %p27 = scmp.eq.s32.totalorder %s8, 0
    %p28 = por %p26, %p27
    %p29 = scmp.ne.s32.totalorder %s18, %s21
    %p30 = scmp.eq.s32.totalorder %s13, 1
    %p31 = por %p29, %p30
    %p32 = scmp.ne.s32.totalorder %s21, %s22
    %p33 = scmp.eq.s32.totalorder %s13, 0
    %p34 = por %p32, %p33
    %p35 = scmp.ne.s32.totalorder %s21, %s22
    %p36 = scmp.eq.s32.totalorder %s14, 1
    %p37 = por %p35, %p36
    %p39 = scmp.ne.s32.totalorder %s22, %s38
    %p40 = scmp.eq.s32.totalorder %s14, 0
    %p41 = por %p39, %p40
    %s43 = sadd.s32 %s42, 1
    %p46 = scmp.eq.s32.totalorder %s8, 1
    %p47 = scmp.ne.s32.totalorder %s42, %s44
    %p48 = scmp.eq.s32.totalorder %s8, 0
    %p49 = por %p47, %p48
    %p50 = scmp.ne.s32.totalorder %s42, %s44
    %p51 = scmp.eq.s32.totalorder %s13, 1
    %p52 = por %p50, %p51
    %p53 = scmp.ne.s32.totalorder %s44, %s45
    %p54 = scmp.eq.s32.totalorder %s13, 0
    %p55 = por %p53, %p54
    %p56 = scmp.ne.s32.totalorder %s44, %s45
    %p57 = scmp.eq.s32.totalorder %s14, 1
    %p58 = por %p56, %p57
    %p60 = scmp.ne.s32.totalorder %s45, %s59
    %p61 = scmp.eq.s32.totalorder %s14, 0
    %p62 = por %p60, %p61
    %s63 = ssub.s32 %s8, %s15
    %p64 = scmp.eq.s32.totalorder %s63, 0
    %s66 = sadd.s32 %s65, 1
    %s67 = scalar_select %p64, %s65, %s66
    %p70 = pneg %p64
    %p71 = scmp.eq.s32.totalorder %s8, 1
    %p72 = por %p70, %p71
    %p73 = scmp.ne.s32.totalorder %s65, %s68
    %p74 = scmp.eq.s32.totalorder %s8, 0
    %p75 = por %p73, %p74
    %p76 = scmp.ne.s32.totalorder %s65, %s68
    %p77 = scmp.eq.s32.totalorder %s13, 1
    %p78 = por %p76, %p77
    %p79 = scmp.ne.s32.totalorder %s68, %s69
    %p80 = scmp.eq.s32.totalorder %s13, 0
    %p81 = por %p79, %p80
    %p82 = scmp.ne.s32.totalorder %s68, %s69
    %p83 = scmp.eq.s32.totalorder %s14, 1
    %p84 = por %p82, %p83
    %p86 = scmp.ne.s32.totalorder %s69, %s85
    %p87 = scmp.eq.s32.totalorder %s14, 0
    %p88 = por %p86, %p87
    %p89 = scmp.le.s32.totalorder 1, %s8
    %p90 = scmp.lt.s32.totalorder %s8, 3
    %p91 = pnand %p89, %p90
    %p92 = pneg %p91
    // Predicated region
    $region9: #{discriminator_forward.5} parent=5 // pred_check
      _
    $region10: #{discriminator_forward.5} parent=5 // pred_check_branch
      %94 = sbr.rel (%p91) target = $region12
    $region11: #{discriminator_forward.5} parent=5 // pred_region
      %s95 = ssub.s32 %s8, 1
      // Predicated region
      $region13: #{discriminator_forward.5} parent=11 // pred_check
        %p96 = pneg %p55
      $region14: #{discriminator_forward.5} parent=11 // pred_check_branch
        %98 = sbr.rel (%p96) target = $region16
      $region15: #{discriminator_forward.5} parent=11 // pred_region
        _
      $region16: #{discriminator_forward.5} parent=11 // pred_fallthru
        _
    $region12: #{discriminator_forward.5} parent=5 // pred_fallthru
      _
    %p99 = scmp.lt.s32.totalorder %s8, 2
    // Predicated region
    $region17: #{discriminator_forward.5} parent=5 // pred_check
      %p100 = pneg %p99
    $region18: #{discriminator_forward.5} parent=5 // pred_check_branch
      %102 = sbr.rel (%p100) target = $region20
    $region19: #{discriminator_forward.5} parent=5 // pred_region
      // Predicated region
      $region21: #{discriminator_forward.5} parent=19 // pred_check
        %p103 = pneg %p28
      $region22: #{discriminator_forward.5} parent=19 // pred_check_branch
        %105 = sbr.rel (%p103) target = $region24
      $region23: #{discriminator_forward.5} parent=19 // pred_region
        %s106 = smul.u32 128, %s8
        %p107 = scmp.lt.s32.totalorder %s106, 255
        %s108 = scalar_select %p107, %s106, 255
        %s109 = smul.addr %s108, 4
        %s110 = scalar_lea.vmem %s0, %s109
        %s111 = smul.u32 128, %s8
      $region24: #{discriminator_forward.5} parent=19 // pred_fallthru
        _
    $region20: #{discriminator_forward.5} parent=5 // pred_fallthru
      _
    %p112 = scmp.le.s32.totalorder 1, %s8
    %p113 = scmp.lt.s32.totalorder %s8, 3
    %p114 = pnand %p112, %p113
    %p115 = pneg %p114
    // Predicated region
    $region25: #{discriminator_forward.5} parent=5 // pred_check
      _
    $region26: #{discriminator_forward.5} parent=5 // pred_check_branch
      %117 = sbr.rel (%p114) target = $region28
    $region27: #{discriminator_forward.5} parent=5 // pred_region
      %s118 = ssub.s32 %s8, 1
      %s119 = smul.u32 128, %s13
      %p120 = scmp.lt.s32.totalorder %s119, 255
      %s121 = scalar_select %p120, %s119, 255
      %s122 = smul.addr %s121, 4
      %s123 = scalar_lea.vmem %s0, %s122
      %p124 = pneg %p34
      %p125 = pneg %p31
      %p126 = pneg %p55
      %p127 = pneg %p52
      %p128 = pneg %p81
      %p129 = pneg %p78
      %s130 = smul.u32 128, %s13
      %p131 = scmp.lt.s32.totalorder %s130, 255
      %s132 = scalar_select %p131, %s130, 255
      %s133 = smul.addr %s132, 4
      %s134 = scalar_lea.vmem %s2, %s133
      %s135 = smul.u32 128, %s13
      %p136 = scmp.lt.s32.totalorder %s135, 255
      %s137 = scalar_select %p136, %s135, 255
      %s138 = smul.addr %s137, 4
      %s139 = scalar_lea.vmem %s0, %s138
      %s140 = smul.u32 128, %s13
      %s141 = smul.u32 128, %s13
      %p142 = scmp.lt.s32.totalorder %s141, 255
      %s143 = scalar_select %p142, %s141, 255
      %s144 = smul.addr %s143, 4
      %s145 = scalar_lea.vmem %s2, %s144
      %s146 = smul.u32 128, %s13
      %v148 = vld [vmem:[%s139] sm:$0xf]
      %v149 = vld [vmem:[%s139 + $0x4] sm:$0xf]
      %v150 = vld [vmem:[%s139 + $0x8] sm:$0xf]
      %v151 = vld [vmem:[%s139 + $0xc] sm:$0xf]
      %v152 = vld [vmem:[%s139 + $0x10] sm:$0xf]
      %v153 = vld [vmem:[%s139 + $0x14] sm:$0xf]
      %v154 = vld [vmem:[%s139 + $0x18] sm:$0xf]
      %v155 = vld [vmem:[%s139 + $0x1c] sm:$0xf]
      %v156 = vld [vmem:[%s139 + $0x20] sm:$0xf]
      %v157 = vld [vmem:[%s139 + $0x24] sm:$0xf]
      %v158 = vld [vmem:[%s139 + $0x28] sm:$0xf]
      %v159 = vld [vmem:[%s139 + $0x2c] sm:$0xf]
      %v160 = vld [vmem:[%s139 + $0x30] sm:$0xf]
      %v161 = vld [vmem:[%s139 + $0x34] sm:$0xf]
      %v162 = vld [vmem:[%s139 + $0x38] sm:$0xf]
      %v163 = vld [vmem:[%s139 + $0x3c] sm:$0xf]
      %v164 = vld [vmem:[%s139 + $0x40] sm:$0xf]
      %v165 = vld [vmem:[%s139 + $0x44] sm:$0xf]
      %v166 = vld [vmem:[%s139 + $0x48] sm:$0xf]
      %v167 = vld [vmem:[%s139 + $0x4c] sm:$0xf]
      %v168 = vld [vmem:[%s139 + $0x50] sm:$0xf]
      %v169 = vld [vmem:[%s139 + $0x54] sm:$0xf]
      %v170 = vld [vmem:[%s139 + $0x58] sm:$0xf]
      %v171 = vld [vmem:[%s139 + $0x5c] sm:$0xf]
      %v172 = vld [vmem:[%s139 + $0x60] sm:$0xf]
      %v173 = vld [vmem:[%s139 + $0x64] sm:$0xf]
      %v174 = vld [vmem:[%s139 + $0x68] sm:$0xf]
      %v175 = vld [vmem:[%s139 + $0x6c] sm:$0xf]
      %v176 = vld [vmem:[%s139 + $0x70] sm:$0xf]
      %v177 = vld [vmem:[%s139 + $0x74] sm:$0xf]
      %v178 = vld [vmem:[%s139 + $0x78] sm:$0xf]
      %v179 = vld [vmem:[%s139 + $0x7c] sm:$0xf]
      %v180 = vld [vmem:[%s139 + $0x80] sm:$0xf]
      %v181 = vld [vmem:[%s139 + $0x84] sm:$0xf]
      %v182 = vld [vmem:[%s139 + $0x88] sm:$0xf]
      %v183 = vld [vmem:[%s139 + $0x8c] sm:$0xf]
      %v184 = vld [vmem:[%s139 + $0x90] sm:$0xf]
      %v185 = vld [vmem:[%s139 + $0x94] sm:$0xf]
      %v186 = vld [vmem:[%s139 + $0x98] sm:$0xf]
      %v187 = vld [vmem:[%s139 + $0x9c] sm:$0xf]
      %v188 = vld [vmem:[%s139 + $0xa0] sm:$0xf]
      %v189 = vld [vmem:[%s139 + $0xa4] sm:$0xf]
      %v190 = vld [vmem:[%s139 + $0xa8] sm:$0xf]
      %v191 = vld [vmem:[%s139 + $0xac] sm:$0xf]
      %v192 = vld [vmem:[%s139 + $0xb0] sm:$0xf]
      %v193 = vld [vmem:[%s139 + $0xb4] sm:$0xf]
      %v194 = vld [vmem:[%s139 + $0xb8] sm:$0xf]
      %v195 = vld [vmem:[%s139 + $0xbc] sm:$0xf]
      %v196 = vld [vmem:[%s139 + $0xc0] sm:$0xf]
      %v197 = vld [vmem:[%s139 + $0xc4] sm:$0xf]
      %v198 = vld [vmem:[%s139 + $0xc8] sm:$0xf]
      %v199 = vld [vmem:[%s139 + $0xcc] sm:$0xf]
      %v200 = vld [vmem:[%s139 + $0xd0] sm:$0xf]
      %v201 = vld [vmem:[%s139 + $0xd4] sm:$0xf]
      %v202 = vld [vmem:[%s139 + $0xd8] sm:$0xf]
      %v203 = vld [vmem:[%s139 + $0xdc] sm:$0xf]
      %v204 = vld [vmem:[%s139 + $0xe0] sm:$0xf]
      %v205 = vld [vmem:[%s139 + $0xe4] sm:$0xf]
      %v206 = vld [vmem:[%s139 + $0xe8] sm:$0xf]
      %v207 = vld [vmem:[%s139 + $0xec] sm:$0xf]
      %v208 = vld [vmem:[%s139 + $0xf0] sm:$0xf]
      %v209 = vld [vmem:[%s139 + $0xf4] sm:$0xf]
      %v210 = vld [vmem:[%s139 + $0xf8] sm:$0xf]
      %v211 = vld [vmem:[%s139 + $0xfc] sm:$0xf]
      %v212 = vld [vmem:[%s139 + $0x100] sm:$0xf]
      %v213 = vld [vmem:[%s139 + $0x104] sm:$0xf]
      %v214 = vld [vmem:[%s139 + $0x108] sm:$0xf]
      %v215 = vld [vmem:[%s139 + $0x10c] sm:$0xf]
      %v216 = vld [vmem:[%s139 + $0x110] sm:$0xf]
      %v217 = vld [vmem:[%s139 + $0x114] sm:$0xf]
      %v218 = vld [vmem:[%s139 + $0x118] sm:$0xf]
      %v219 = vld [vmem:[%s139 + $0x11c] sm:$0xf]
      %v220 = vld [vmem:[%s139 + $0x120] sm:$0xf]
      %v221 = vld [vmem:[%s139 + $0x124] sm:$0xf]
      %v222 = vld [vmem:[%s139 + $0x128] sm:$0xf]
      %v223 = vld [vmem:[%s139 + $0x12c] sm:$0xf]
      %v224 = vld [vmem:[%s139 + $0x130] sm:$0xf]
      %v225 = vld [vmem:[%s139 + $0x134] sm:$0xf]
      %v226 = vld [vmem:[%s139 + $0x138] sm:$0xf]
      %v227 = vld [vmem:[%s139 + $0x13c] sm:$0xf]
      %v228 = vld [vmem:[%s139 + $0x140] sm:$0xf]
      %v229 = vld [vmem:[%s139 + $0x144] sm:$0xf]
      %v230 = vld [vmem:[%s139 + $0x148] sm:$0xf]
      %v231 = vld [vmem:[%s139 + $0x14c] sm:$0xf]
      %v232 = vld [vmem:[%s139 + $0x150] sm:$0xf]
      %v233 = vld [vmem:[%s139 + $0x154] sm:$0xf]
      %v234 = vld [vmem:[%s139 + $0x158] sm:$0xf]
      %v235 = vld [vmem:[%s139 + $0x15c] sm:$0xf]
      %v236 = vld [vmem:[%s139 + $0x160] sm:$0xf]
      %v237 = vld [vmem:[%s139 + $0x164] sm:$0xf]
      %v238 = vld [vmem:[%s139 + $0x168] sm:$0xf]
      %v239 = vld [vmem:[%s139 + $0x16c] sm:$0xf]
      %v240 = vld [vmem:[%s139 + $0x170] sm:$0xf]
      %v241 = vld [vmem:[%s139 + $0x174] sm:$0xf]
      %v242 = vld [vmem:[%s139 + $0x178] sm:$0xf]
      %v243 = vld [vmem:[%s139 + $0x17c] sm:$0xf]
      %v244 = vld [vmem:[%s139 + $0x180] sm:$0xf]
      %v245 = vld [vmem:[%s139 + $0x184] sm:$0xf]
      %v246 = vld [vmem:[%s139 + $0x188] sm:$0xf]
      %v247 = vld [vmem:[%s139 + $0x18c] sm:$0xf]
      %v248 = vld [vmem:[%s139 + $0x190] sm:$0xf]
      %v249 = vld [vmem:[%s139 + $0x194] sm:$0xf]
      %v250 = vld [vmem:[%s139 + $0x198] sm:$0xf]
      %v251 = vld [vmem:[%s139 + $0x19c] sm:$0xf]
      %v252 = vld [vmem:[%s139 + $0x1a0] sm:$0xf]
      %v253 = vld [vmem:[%s139 + $0x1a4] sm:$0xf]
      %v254 = vld [vmem:[%s139 + $0x1a8] sm:$0xf]
      %v255 = vld [vmem:[%s139 + $0x1ac] sm:$0xf]
      %v256 = vld [vmem:[%s139 + $0x1b0] sm:$0xf]
      %v257 = vld [vmem:[%s139 + $0x1b4] sm:$0xf]
      %v258 = vld [vmem:[%s139 + $0x1b8] sm:$0xf]
      %v259 = vld [vmem:[%s139 + $0x1bc] sm:$0xf]
      %v260 = vld [vmem:[%s139 + $0x1c0] sm:$0xf]
      %v261 = vld [vmem:[%s139 + $0x1c4] sm:$0xf]
      %v262 = vld [vmem:[%s139 + $0x1c8] sm:$0xf]
      %v263 = vld [vmem:[%s139 + $0x1cc] sm:$0xf]
      %v264 = vld [vmem:[%s139 + $0x1d0] sm:$0xf]
      %v265 = vld [vmem:[%s139 + $0x1d4] sm:$0xf]
      %v266 = vld [vmem:[%s139 + $0x1d8] sm:$0xf]
      %v267 = vld [vmem:[%s139 + $0x1dc] sm:$0xf]
      %v268 = vld [vmem:[%s139 + $0x1e0] sm:$0xf]
      %v269 = vld [vmem:[%s139 + $0x1e4] sm:$0xf]
      %v270 = vld [vmem:[%s139 + $0x1e8] sm:$0xf]
      %v271 = vld [vmem:[%s139 + $0x1ec] sm:$0xf]
      %v272 = vld [vmem:[%s139 + $0x1f0] sm:$0xf]
      %v273 = vld [vmem:[%s139 + $0x1f4] sm:$0xf]
      %v274 = vld [vmem:[%s139 + $0x1f8] sm:$0xf]
      %v275 = vld [vmem:[%s139 + $0x1fc] sm:$0xf]
      %v276 = vld [vmem:[%s1] sm:$0xf]
      %v277 = vld [vmem:[%s1 + $0x4] sm:$0xf]
      %v278 = vld [vmem:[%s1 + $0x8] sm:$0xf]
      %v279 = vld [vmem:[%s1 + $0xc] sm:$0xf]
      %v280 = vld [vmem:[%s1 + $0x10] sm:$0xf]
      %v281 = vld [vmem:[%s1 + $0x14] sm:$0xf]
      %v410 = vunpack.c.l.b16 %v148
      %v411 = vunpack.c.l.b16 %v149
      %v412 = vunpack.c.l.b16 %v150
      %v413 = vunpack.c.l.b16 %v151
      %v414 = vunpack.c.l.b16 %v152
      %v415 = vunpack.c.l.b16 %v153
      %v416 = vunpack.c.l.b16 %v154
      %v417 = vunpack.c.l.b16 %v155
      %v418 = vunpack.c.l.b16 %v156
      %v419 = vunpack.c.l.b16 %v157
      %v420 = vunpack.c.l.b16 %v158
      %v421 = vunpack.c.l.b16 %v159
      %v422 = vunpack.c.l.b16 %v160
      %v423 = vunpack.c.l.b16 %v161
      %v424 = vunpack.c.l.b16 %v162
      %v425 = vunpack.c.l.b16 %v163
      %v426 = vunpack.c.l.b16 %v164
      %v427 = vunpack.c.l.b16 %v165
      %v428 = vunpack.c.l.b16 %v166
      %v429 = vunpack.c.l.b16 %v167
      %v430 = vunpack.c.l.b16 %v168
      %v431 = vunpack.c.l.b16 %v169
      %v432 = vunpack.c.l.b16 %v170
      %v433 = vunpack.c.l.b16 %v171
      %v434 = vunpack.c.l.b16 %v172
      %v435 = vunpack.c.l.b16 %v173
      %v436 = vunpack.c.l.b16 %v174
      %v437 = vunpack.c.l.b16 %v175
      %v438 = vunpack.c.l.b16 %v176
      %v439 = vunpack.c.l.b16 %v177
      %v440 = vunpack.c.l.b16 %v178
      %v441 = vunpack.c.l.b16 %v179
      %v442 = vunpack.c.l.b16 %v180
      %v443 = vunpack.c.l.b16 %v181
      %v444 = vunpack.c.l.b16 %v182
      %v445 = vunpack.c.l.b16 %v183
      %v446 = vunpack.c.l.b16 %v184
      %v447 = vunpack.c.l.b16 %v185
      %v448 = vunpack.c.l.b16 %v186
      %v449 = vunpack.c.l.b16 %v187
      %v450 = vunpack.c.l.b16 %v188
      %v451 = vunpack.c.l.b16 %v189
      %v452 = vunpack.c.l.b16 %v190
      %v453 = vunpack.c.l.b16 %v191
      %v454 = vunpack.c.l.b16 %v192
      %v455 = vunpack.c.l.b16 %v193
      %v456 = vunpack.c.l.b16 %v194
      %v457 = vunpack.c.l.b16 %v195
      %v458 = vunpack.c.l.b16 %v196
      %v459 = vunpack.c.l.b16 %v197
      %v460 = vunpack.c.l.b16 %v198
      %v461 = vunpack.c.l.b16 %v199
      %v462 = vunpack.c.l.b16 %v200
      %v463 = vunpack.c.l.b16 %v201
      %v464 = vunpack.c.l.b16 %v202
      %v465 = vunpack.c.l.b16 %v203
      %v466 = vunpack.c.l.b16 %v204
      %v467 = vunpack.c.l.b16 %v205
      %v468 = vunpack.c.l.b16 %v206
      %v469 = vunpack.c.l.b16 %v207
      %v470 = vunpack.c.l.b16 %v208
      %v471 = vunpack.c.l.b16 %v209
      %v472 = vunpack.c.l.b16 %v210
      %v473 = vunpack.c.l.b16 %v211
      %v474 = vunpack.c.l.b16 %v212
      %v475 = vunpack.c.l.b16 %v213
      %v476 = vunpack.c.l.b16 %v214
      %v477 = vunpack.c.l.b16 %v215
      %v478 = vunpack.c.l.b16 %v216
      %v479 = vunpack.c.l.b16 %v217
      %v480 = vunpack.c.l.b16 %v218
      %v481 = vunpack.c.l.b16 %v219
      %v482 = vunpack.c.l.b16 %v220
      %v483 = vunpack.c.l.b16 %v221
      %v484 = vunpack.c.l.b16 %v222
      %v485 = vunpack.c.l.b16 %v223
      %v486 = vunpack.c.l.b16 %v224
      %v487 = vunpack.c.l.b16 %v225
      %v488 = vunpack.c.l.b16 %v226
      %v489 = vunpack.c.l.b16 %v227
      %v490 = vunpack.c.l.b16 %v228
      %v491 = vunpack.c.l.b16 %v229
      %v492 = vunpack.c.l.b16 %v230
      %v493 = vunpack.c.l.b16 %v231
      %v494 = vunpack.c.l.b16 %v232
      %v495 = vunpack.c.l.b16 %v233
      %v496 = vunpack.c.l.b16 %v234
      %v497 = vunpack.c.l.b16 %v235
      %v498 = vunpack.c.l.b16 %v236
      %v499 = vunpack.c.l.b16 %v237
      %v500 = vunpack.c.l.b16 %v238
      %v501 = vunpack.c.l.b16 %v239
      %v502 = vunpack.c.l.b16 %v240
      %v503 = vunpack.c.l.b16 %v241
      %v504 = vunpack.c.l.b16 %v242
      %v505 = vunpack.c.l.b16 %v243
      %v506 = vunpack.c.l.b16 %v244
      %v507 = vunpack.c.l.b16 %v245
      %v508 = vunpack.c.l.b16 %v246
      %v509 = vunpack.c.l.b16 %v247
      %v510 = vunpack.c.l.b16 %v248
      %v511 = vunpack.c.l.b16 %v249
      %v512 = vunpack.c.l.b16 %v250
      %v513 = vunpack.c.l.b16 %v251
      %v514 = vunpack.c.l.b16 %v252
      %v515 = vunpack.c.l.b16 %v253
      %v516 = vunpack.c.l.b16 %v254
      %v517 = vunpack.c.l.b16 %v255
      %v518 = vunpack.c.l.b16 %v256
      %v519 = vunpack.c.l.b16 %v257
      %v520 = vunpack.c.l.b16 %v258
      %v521 = vunpack.c.l.b16 %v259
      %v522 = vunpack.c.l.b16 %v260
      %v523 = vunpack.c.l.b16 %v261
      %v524 = vunpack.c.l.b16 %v262
      %v525 = vunpack.c.l.b16 %v263
      %v526 = vunpack.c.l.b16 %v264
      %v527 = vunpack.c.l.b16 %v265
      %v528 = vunpack.c.l.b16 %v266
      %v529 = vunpack.c.l.b16 %v267
      %v530 = vunpack.c.l.b16 %v268
      %v531 = vunpack.c.l.b16 %v269
      %v532 = vunpack.c.l.b16 %v270
      %v533 = vunpack.c.l.b16 %v271
      %v534 = vunpack.c.l.b16 %v272
      %v535 = vunpack.c.l.b16 %v273
      %v536 = vunpack.c.l.b16 %v274
      %v537 = vunpack.c.l.b16 %v275
      %v538 = vpack.c.b16 %v411, %v410
      %v539 = vpack.c.b16 %v413, %v412
      %v540 = vpack.c.b16 %v415, %v414
      %v541 = vpack.c.b16 %v417, %v416
      %v542 = vpack.c.b16 %v419, %v418
      %v543 = vpack.c.b16 %v421, %v420
      %v544 = vpack.c.b16 %v423, %v422
      %v545 = vpack.c.b16 %v425, %v424
      %v546 = vpack.c.b16 %v427, %v426
      %v547 = vpack.c.b16 %v429, %v428
      %v548 = vpack.c.b16 %v431, %v430
      %v549 = vpack.c.b16 %v433, %v432
      %v550 = vpack.c.b16 %v435, %v434
      %v551 = vpack.c.b16 %v437, %v436
      %v552 = vpack.c.b16 %v439, %v438
      %v553 = vpack.c.b16 %v441, %v440
      %v554 = vpack.c.b16 %v443, %v442
      %v555 = vpack.c.b16 %v445, %v444
      %v556 = vpack.c.b16 %v447, %v446
      %v557 = vpack.c.b16 %v449, %v448
      %v558 = vpack.c.b16 %v451, %v450
      %v559 = vpack.c.b16 %v453, %v452
      %v560 = vpack.c.b16 %v455, %v454
      %v561 = vpack.c.b16 %v457, %v456
      %v562 = vpack.c.b16 %v459, %v458
      %v563 = vpack.c.b16 %v461, %v460
      %v564 = vpack.c.b16 %v463, %v462
      %v565 = vpack.c.b16 %v465, %v464
      %v566 = vpack.c.b16 %v467, %v466
      %v567 = vpack.c.b16 %v469, %v468
      %v568 = vpack.c.b16 %v471, %v470
      %v569 = vpack.c.b16 %v473, %v472
      %v570 = vpack.c.b16 %v475, %v474
      %v571 = vpack.c.b16 %v477, %v476
      %v572 = vpack.c.b16 %v479, %v478
      %v573 = vpack.c.b16 %v481, %v480
      %v574 = vpack.c.b16 %v483, %v482
      %v575 = vpack.c.b16 %v485, %v484
      %v576 = vpack.c.b16 %v487, %v486
      %v577 = vpack.c.b16 %v489, %v488
      %v578 = vpack.c.b16 %v491, %v490
      %v579 = vpack.c.b16 %v493, %v492
      %v580 = vpack.c.b16 %v495, %v494
      %v581 = vpack.c.b16 %v497, %v496
      %v582 = vpack.c.b16 %v499, %v498
      %v583 = vpack.c.b16 %v501, %v500
      %v584 = vpack.c.b16 %v503, %v502
      %v585 = vpack.c.b16 %v505, %v504
      %v586 = vpack.c.b16 %v507, %v506
      %v587 = vpack.c.b16 %v509, %v508
      %v588 = vpack.c.b16 %v511, %v510
      %v589 = vpack.c.b16 %v513, %v512
      %v590 = vpack.c.b16 %v515, %v514
      %v591 = vpack.c.b16 %v517, %v516
      %v592 = vpack.c.b16 %v519, %v518
      %v593 = vpack.c.b16 %v521, %v520
      %v594 = vpack.c.b16 %v523, %v522
      %v595 = vpack.c.b16 %v525, %v524
      %v596 = vpack.c.b16 %v527, %v526
      %v597 = vpack.c.b16 %v529, %v528
      %v598 = vpack.c.b16 %v531, %v530
      %v599 = vpack.c.b16 %v533, %v532
      %v600 = vpack.c.b16 %v535, %v534
      %v601 = vpack.c.b16 %v537, %v536
      %v608 = vunpack.c.l.b16 %v276
      %v609 = vunpack.c.l.b16 %v277
      %v610 = vunpack.c.l.b16 %v278
      %v611 = vunpack.c.l.b16 %v279
      %v612 = vunpack.c.l.b16 %v280
      %v613 = vunpack.c.l.b16 %v281
      %v614 = vpack.c.b16 %v609, %v608
      %v615 = vpack.c.b16 %v611, %v610
      %v616 = vpack.c.b16 %v613, %v612
      %vm620 = vcmask 392192
      %v622 = vsel %vm620, %v538, 0
      %v625 = vsel %vm620, %v539, 0
      %v628 = vsel %vm620, %v540, 0
      %v631 = vsel %vm620, %v541, 0
      %v634 = vsel %vm620, %v542, 0
      %v637 = vsel %vm620, %v543, 0
      %v640 = vsel %vm620, %v544, 0
      %v643 = vsel %vm620, %v545, 0
      %v646 = vsel %vm620, %v546, 0
      %v649 = vsel %vm620, %v547, 0
      %v652 = vsel %vm620, %v548, 0
      %v655 = vsel %vm620, %v549, 0
      %v658 = vsel %vm620, %v550, 0
      %v661 = vsel %vm620, %v551, 0
      %v664 = vsel %vm620, %v552, 0
      %v667 = vsel %vm620, %v553, 0
      %v670 = vsel %vm620, %v554, 0
      %v673 = vsel %vm620, %v555, 0
      %v676 = vsel %vm620, %v556, 0
      %v679 = vsel %vm620, %v557, 0
      %v682 = vsel %vm620, %v558, 0
      %v685 = vsel %vm620, %v559, 0
      %v688 = vsel %vm620, %v560, 0
      %v691 = vsel %vm620, %v561, 0
      %v694 = vsel %vm620, %v562, 0
      %v697 = vsel %vm620, %v563, 0
      %v700 = vsel %vm620, %v564, 0
      %v703 = vsel %vm620, %v565, 0
      %v706 = vsel %vm620, %v566, 0
      %v709 = vsel %vm620, %v567, 0
      %v712 = vsel %vm620, %v568, 0
      %v715 = vsel %vm620, %v569, 0
      %v718 = vsel %vm620, %v570, 0
      %v721 = vsel %vm620, %v571, 0
      %v724 = vsel %vm620, %v572, 0
      %v727 = vsel %vm620, %v573, 0
      %v730 = vsel %vm620, %v574, 0
      %v733 = vsel %vm620, %v575, 0
      %v736 = vsel %vm620, %v576, 0
      %v739 = vsel %vm620, %v577, 0
      %v742 = vsel %vm620, %v578, 0
      %v745 = vsel %vm620, %v579, 0
      %v748 = vsel %vm620, %v580, 0
      %v751 = vsel %vm620, %v581, 0
      %v754 = vsel %vm620, %v582, 0
      %v757 = vsel %vm620, %v583, 0
      %v760 = vsel %vm620, %v584, 0
      %v763 = vsel %vm620, %v585, 0
      %v766 = vsel %vm620, %v586, 0
      %v769 = vsel %vm620, %v587, 0
      %v772 = vsel %vm620, %v588, 0
      %v775 = vsel %vm620, %v589, 0
      %v778 = vsel %vm620, %v590, 0
      %v781 = vsel %vm620, %v591, 0
      %v784 = vsel %vm620, %v592, 0
      %v787 = vsel %vm620, %v593, 0
      %v790 = vsel %vm620, %v594, 0
      %v793 = vsel %vm620, %v595, 0
      %v796 = vsel %vm620, %v596, 0
      %v799 = vsel %vm620, %v597, 0
      %v802 = vsel %vm620, %v598, 0
      %v805 = vsel %vm620, %v599, 0
      %v808 = vsel %vm620, %v600, 0
      %v811 = vsel %vm620, %v601, 0
      %813 = vmatprep.subr.bf16.mxu0 0
      %814 = vmatpush1.bf16.msra.mxu0 %v614
      %815 = vmatprep.subr.bf16.mxu0 0
      %816 = vmatpush1.bf16.msra.mxu0 %v615
      %817 = vmatprep.subr.bf16.mxu0 0
      %818 = vmatpush1.bf16.msra.mxu0 %v616
      %819 = vmatprep.subr.bf16.mxu0 0
      %820 = vmatpush1.bf16.msra.mxu0 0
      %821 = vmatprep.subr.bf16.mxu0 0
      %822 = vmatpush1.bf16.msra.mxu0 0
      %823 = vmatprep.subr.bf16.mxu0 0
      %824 = vmatpush1.bf16.msra.mxu0 0
      %825 = vmatprep.subr.bf16.mxu0 0
      %826 = vmatpush1.bf16.msra.mxu0 0
      %827 = vmatprep.subr.bf16.mxu0 0
      %828 = vmatpush1.bf16.msra.mxu0 0
      %829 = vmatprep.subr.bf16.mxu0 0
      %830 = vmatpush1.bf16.msra.mxu0 0
      %831 = vmatprep.subr.bf16.mxu0 0
      %832 = vmatpush1.bf16.msra.mxu0 0
      %833 = vmatprep.subr.bf16.mxu0 0
      %834 = vmatpush1.bf16.msra.mxu0 0
      %835 = vmatprep.subr.bf16.mxu0 0
      %836 = vmatpush1.bf16.msra.mxu0 0
      %837 = vmatprep.subr.bf16.mxu0 0
      %838 = vmatpush1.bf16.msra.mxu0 0
      %839 = vmatprep.subr.bf16.mxu0 0
      %840 = vmatpush1.bf16.msra.mxu0 0
      %841 = vmatprep.subr.bf16.mxu0 0
      %842 = vmatpush1.bf16.msra.mxu0 0
      %843 = vmatprep.subr.bf16.mxu0 0
      %844 = vmatpush1.bf16.msra.mxu0 0
      %845 = vmatprep.mubr.bf16.mxu0 0
      %846 = vmatmul.mubr.bf16.gmra.mrb[0].mxu0 %v622
      %v847 = vpop.f32.mrb[0].mxu0
      %v848 = vadd.f32 0.0, %v847
      %v849 = vpop.f32.mrb[0].mxu0
      %v850 = vpop.f32.mrb[0].mxu0
      %v851 = vadd.f32 0.0, %v850
      %v852 = vpop.f32.mrb[0].mxu0
      %853 = vmatprep.mubr.bf16.mxu0 0
      %854 = vmatmul.mubr.bf16.gmra.mrb[0].mxu0 %v625
      %v855 = vpop.f32.mrb[0].mxu0
      %v856 = vadd.f32 0.0, %v855
      %v857 = vpop.f32.mrb[0].mxu0
      %v858 = vpop.f32.mrb[0].mxu0
      %v859 = vadd.f32 0.0, %v858
      %v860 = vpop.f32.mrb[0].mxu0
      %861 = vmatprep.mubr.bf16.mxu0 0
      %862 = vmatmul.mubr.bf16.gmra.mrb[0].mxu0 %v628
      %v863 = vpop.f32.mrb[0].mxu0
      %v864 = vadd.f32 0.0, %v863
      %v865 = vpop.f32.mrb[0].mxu0
      %v866 = vpop.f32.mrb[0].mxu0
      %v867 = vadd.f32 0.0, %v866
      %v868 = vpop.f32.mrb[0].mxu0
      %869 = vmatprep.mubr.bf16.mxu0 0
      %870 = vmatmul.mubr.bf16.gmra.mrb[0].mxu0 %v631
      %v871 = vpop.f32.mrb[0].mxu0
      %v872 = vadd.f32 0.0, %v871
      %v873 = vpop.f32.mrb[0].mxu0
      %v874 = vpop.f32.mrb[0].mxu0
      %v875 = vadd.f32 0.0, %v874
      %v876 = vpop.f32.mrb[0].mxu0
      %877 = vmatprep.mubr.bf16.mxu0 0
      %878 = vmatmul.mubr.bf16.gmra.mrb[0].mxu0 %v634
      %v879 = vpop.f32.mrb[0].mxu0
      %v880 = vadd.f32 0.0, %v879
      %v881 = vpop.f32.mrb[0].mxu0
      %v882 = vpop.f32.mrb[0].mxu0
      %v883 = vadd.f32 0.0, %v882
      %v884 = vpop.f32.mrb[0].mxu0
      %885 = vmatprep.mubr.bf16.mxu0 0
      %886 = vmatmul.mubr.bf16.gmra.mrb[0].mxu0 %v637
      %v887 = vpop.f32.mrb[0].mxu0
      %v888 = vadd.f32 0.0, %v887
      %v889 = vpop.f32.mrb[0].mxu0
      %v890 = vpop.f32.mrb[0].mxu0
      %v891 = vadd.f32 0.0, %v890
      %v892 = vpop.f32.mrb[0].mxu0
      %893 = vmatprep.mubr.bf16.mxu0 0
      %894 = vmatmul.mubr.bf16.gmra.mrb[0].mxu0 %v640
      %v895 = vpop.f32.mrb[0].mxu0
      %v896 = vadd.f32 0.0, %v895
      %v897 = vpop.f32.mrb[0].mxu0
      %v898 = vpop.f32.mrb[0].mxu0
      %v899 = vadd.f32 0.0, %v898
      %v900 = vpop.f32.mrb[0].mxu0
      %901 = vmatprep.mubr.bf16.mxu0 0
      %902 = vmatmul.mubr.bf16.gmra.mrb[0].mxu0 %v643
      %v903 = vpop.f32.mrb[0].mxu0
      %v904 = vadd.f32 0.0, %v903
      %v905 = vpop.f32.mrb[0].mxu0
      %v906 = vpop.f32.mrb[0].mxu0
      %v907 = vadd.f32 0.0, %v906
      %v908 = vpop.f32.mrb[0].mxu0
      %909 = vmatprep.mubr.bf16.mxu0 0
      %910 = vmatmul.mubr.bf16.gmra.mrb[0].mxu0 %v646
      %v911 = vpop.f32.mrb[0].mxu0
      %v912 = vadd.f32 0.0, %v911
      %v913 = vpop.f32.mrb[0].mxu0
      %v914 = vpop.f32.mrb[0].mxu0
      %v915 = vadd.f32 0.0, %v914
      %v916 = vpop.f32.mrb[0].mxu0
      %917 = vmatprep.mubr.bf16.mxu0 0
      %918 = vmatmul.mubr.bf16.gmra.mrb[0].mxu0 %v649
      %v919 = vpop.f32.mrb[0].mxu0
      %v920 = vadd.f32 0.0, %v919
      %v921 = vpop.f32.mrb[0].mxu0
      %v922 = vpop.f32.mrb[0].mxu0
      %v923 = vadd.f32 0.0, %v922
      %v924 = vpop.f32.mrb[0].mxu0
      %925 = vmatprep.mubr.bf16.mxu0 0
      %926 = vmatmul.mubr.bf16.gmra.mrb[0].mxu0 %v652
      %v927 = vpop.f32.mrb[0].mxu0
      %v928 = vadd.f32 0.0, %v927
      %v929 = vpop.f32.mrb[0].mxu0
      %v930 = vpop.f32.mrb[0].mxu0
      %v931 = vadd.f32 0.0, %v930
      %v932 = vpop.f32.mrb[0].mxu0
      %933 = vmatprep.mubr.bf16.mxu0 0
      %934 = vmatmul.mubr.bf16.gmra.mrb[0].mxu0 %v655
      %v935 = vpop.f32.mrb[0].mxu0
      %v936 = vadd.f32 0.0, %v935
      %v937 = vpop.f32.mrb[0].mxu0
      %v938 = vpop.f32.mrb[0].mxu0
      %v939 = vadd.f32 0.0, %v938
      %v940 = vpop.f32.mrb[0].mxu0
      %941 = vmatprep.mubr.bf16.mxu0 0
      %942 = vmatmul.mubr.bf16.gmra.mrb[0].mxu0 %v658
      %v943 = vpop.f32.mrb[0].mxu0
      %v944 = vadd.f32 0.0, %v943
      %v945 = vpop.f32.mrb[0].mxu0
      %v946 = vpop.f32.mrb[0].mxu0
      %v947 = vadd.f32 0.0, %v946
      %v948 = vpop.f32.mrb[0].mxu0
      %949 = vmatprep.mubr.bf16.mxu0 0
      %950 = vmatmul.mubr.bf16.gmra.mrb[0].mxu0 %v661
      %v951 = vpop.f32.mrb[0].mxu0
      %v952 = vadd.f32 0.0, %v951
      %v953 = vpop.f32.mrb[0].mxu0
      %v954 = vpop.f32.mrb[0].mxu0
      %v955 = vadd.f32 0.0, %v954
      %v956 = vpop.f32.mrb[0].mxu0
      %957 = vmatprep.mubr.bf16.mxu0 0
      %958 = vmatmul.mubr.bf16.gmra.mrb[0].mxu0 %v664
      %v959 = vpop.f32.mrb[0].mxu0
      %v960 = vadd.f32 0.0, %v959
      %v961 = vpop.f32.mrb[0].mxu0
      %v962 = vpop.f32.mrb[0].mxu0
      %v963 = vadd.f32 0.0, %v962
      %v964 = vpop.f32.mrb[0].mxu0
      %965 = vmatprep.mubr.bf16.mxu0 0
      %966 = vmatmul.mubr.bf16.gmra.mrb[0].mxu0 %v667
      %v967 = vpop.f32.mrb[0].mxu0
      %v968 = vadd.f32 0.0, %v967
      %v969 = vpop.f32.mrb[0].mxu0
      %v970 = vpop.f32.mrb[0].mxu0
      %v971 = vadd.f32 0.0, %v970
      %v972 = vpop.f32.mrb[0].mxu0
      %973 = vmatprep.mubr.bf16.mxu0 0
      %974 = vmatmul.mubr.bf16.gmra.mrb[0].mxu0 %v670
      %v975 = vpop.f32.mrb[0].mxu0
      %v976 = vadd.f32 0.0, %v975
      %v977 = vpop.f32.mrb[0].mxu0
      %v978 = vpop.f32.mrb[0].mxu0
      %v979 = vadd.f32 0.0, %v978
      %v980 = vpop.f32.mrb[0].mxu0
      %981 = vmatprep.mubr.bf16.mxu0 0
      %982 = vmatmul.mubr.bf16.gmra.mrb[0].mxu0 %v673
      %v983 = vpop.f32.mrb[0].mxu0
      %v984 = vadd.f32 0.0, %v983
      %v985 = vpop.f32.mrb[0].mxu0
      %v986 = vpop.f32.mrb[0].mxu0
      %v987 = vadd.f32 0.0, %v986
      %v988 = vpop.f32.mrb[0].mxu0
      %989 = vmatprep.mubr.bf16.mxu0 0
      %990 = vmatmul.mubr.bf16.gmra.mrb[0].mxu0 %v676
      %v991 = vpop.f32.mrb[0].mxu0
      %v992 = vadd.f32 0.0, %v991
      %v993 = vpop.f32.mrb[0].mxu0
      %v994 = vpop.f32.mrb[0].mxu0
      %v995 = vadd.f32 0.0, %v994
      %v996 = vpop.f32.mrb[0].mxu0
      %997 = vmatprep.mubr.bf16.mxu0 0
      %998 = vmatmul.mubr.bf16.gmra.mrb[0].mxu0 %v679
      %v999 = vpop.f32.mrb[0].mxu0
      %v1000 = vadd.f32 0.0, %v999
      %v1001 = vpop.f32.mrb[0].mxu0
      %v1002 = vpop.f32.mrb[0].mxu0
      %v1003 = vadd.f32 0.0, %v1002
      %v1004 = vpop.f32.mrb[0].mxu0
      %1005 = vmatprep.mubr.bf16.mxu0 0
      %1006 = vmatmul.mubr.bf16.gmra.mrb[0].mxu0 %v682
      %v1007 = vpop.f32.mrb[0].mxu0
      %v1008 = vadd.f32 0.0, %v1007
      %v1009 = vpop.f32.mrb[0].mxu0
      %v1010 = vpop.f32.mrb[0].mxu0
      %v1011 = vadd.f32 0.0, %v1010
      %v1012 = vpop.f32.mrb[0].mxu0
      %1013 = vmatprep.mubr.bf16.mxu0 0
      %1014 = vmatmul.mubr.bf16.gmra.mrb[0].mxu0 %v685
      %v1015 = vpop.f32.mrb[0].mxu0
      %v1016 = vadd.f32 0.0, %v1015
      %v1017 = vpop.f32.mrb[0].mxu0
      %v1018 = vpop.f32.mrb[0].mxu0
      %v1019 = vadd.f32 0.0, %v1018
      %v1020 = vpop.f32.mrb[0].mxu0
      %1021 = vmatprep.mubr.bf16.mxu0 0
      %1022 = vmatmul.mubr.bf16.gmra.mrb[0].mxu0 %v688
      %v1023 = vpop.f32.mrb[0].mxu0
      %v1024 = vadd.f32 0.0, %v1023
      %v1025 = vpop.f32.mrb[0].mxu0
      %v1026 = vpop.f32.mrb[0].mxu0
      %v1027 = vadd.f32 0.0, %v1026
      %v1028 = vpop.f32.mrb[0].mxu0
      %1029 = vmatprep.mubr.bf16.mxu0 0
      %1030 = vmatmul.mubr.bf16.gmra.mrb[0].mxu0 %v691
      %v1031 = vpop.f32.mrb[0].mxu0
      %v1032 = vadd.f32 0.0, %v1031
      %v1033 = vpop.f32.mrb[0].mxu0
      %v1034 = vpop.f32.mrb[0].mxu0
      %v1035 = vadd.f32 0.0, %v1034
      %v1036 = vpop.f32.mrb[0].mxu0
      %1037 = vmatprep.mubr.bf16.mxu0 0
      %1038 = vmatmul.mubr.bf16.gmra.mrb[0].mxu0 %v694
      %v1039 = vpop.f32.mrb[0].mxu0
      %v1040 = vadd.f32 0.0, %v1039
      %v1041 = vpop.f32.mrb[0].mxu0
      %v1042 = vpop.f32.mrb[0].mxu0
      %v1043 = vadd.f32 0.0, %v1042
      %v1044 = vpop.f32.mrb[0].mxu0
      %1045 = vmatprep.mubr.bf16.mxu0 0
      %1046 = vmatmul.mubr.bf16.gmra.mrb[0].mxu0 %v697
      %v1047 = vpop.f32.mrb[0].mxu0
      %v1048 = vadd.f32 0.0, %v1047
      %v1049 = vpop.f32.mrb[0].mxu0
      %v1050 = vpop.f32.mrb[0].mxu0
      %v1051 = vadd.f32 0.0, %v1050
      %v1052 = vpop.f32.mrb[0].mxu0
      %1053 = vmatprep.mubr.bf16.mxu0 0
      %1054 = vmatmul.mubr.bf16.gmra.mrb[0].mxu0 %v700
      %v1055 = vpop.f32.mrb[0].mxu0
      %v1056 = vadd.f32 0.0, %v1055
      %v1057 = vpop.f32.mrb[0].mxu0
      %v1058 = vpop.f32.mrb[0].mxu0
      %v1059 = vadd.f32 0.0, %v1058
      %v1060 = vpop.f32.mrb[0].mxu0
      %1061 = vmatprep.mubr.bf16.mxu0 0
      %1062 = vmatmul.mubr.bf16.gmra.mrb[0].mxu0 %v703
      %v1063 = vpop.f32.mrb[0].mxu0
      %v1064 = vadd.f32 0.0, %v1063
      %v1065 = vpop.f32.mrb[0].mxu0
      %v1066 = vpop.f32.mrb[0].mxu0
      %v1067 = vadd.f32 0.0, %v1066
      %v1068 = vpop.f32.mrb[0].mxu0
      %1069 = vmatprep.mubr.bf16.mxu0 0
      %1070 = vmatmul.mubr.bf16.gmra.mrb[0].mxu0 %v706
      %v1071 = vpop.f32.mrb[0].mxu0
      %v1072 = vadd.f32 0.0, %v1071
      %v1073 = vpop.f32.mrb[0].mxu0
      %v1074 = vpop.f32.mrb[0].mxu0
      %v1075 = vadd.f32 0.0, %v1074
      %v1076 = vpop.f32.mrb[0].mxu0
      %1077 = vmatprep.mubr.bf16.mxu0 0
      %1078 = vmatmul.mubr.bf16.gmra.mrb[0].mxu0 %v709
      %v1079 = vpop.f32.mrb[0].mxu0
      %v1080 = vadd.f32 0.0, %v1079
      %v1081 = vpop.f32.mrb[0].mxu0
      %v1082 = vpop.f32.mrb[0].mxu0
      %v1083 = vadd.f32 0.0, %v1082
      %v1084 = vpop.f32.mrb[0].mxu0
      %1085 = vmatprep.mubr.bf16.mxu0 0
      %1086 = vmatmul.mubr.bf16.gmra.mrb[0].mxu0 %v712
      %v1087 = vpop.f32.mrb[0].mxu0
      %v1088 = vadd.f32 0.0, %v1087
      %v1089 = vpop.f32.mrb[0].mxu0
      %v1090 = vpop.f32.mrb[0].mxu0
      %v1091 = vadd.f32 0.0, %v1090
      %v1092 = vpop.f32.mrb[0].mxu0
      %1093 = vmatprep.mubr.bf16.mxu0 0
      %1094 = vmatmul.mubr.bf16.gmra.mrb[0].mxu0 %v715
      %v1095 = vpop.f32.mrb[0].mxu0
      %v1096 = vadd.f32 0.0, %v1095
      %v1097 = vpop.f32.mrb[0].mxu0
      %v1098 = vpop.f32.mrb[0].mxu0
      %v1099 = vadd.f32 0.0, %v1098
      %v1100 = vpop.f32.mrb[0].mxu0
      %1101 = vmatprep.mubr.bf16.mxu0 0
      %1102 = vmatmul.mubr.bf16.gmra.mrb[0].mxu0 %v718
      %v1103 = vpop.f32.mrb[0].mxu0
      %v1104 = vadd.f32 0.0, %v1103
      %v1105 = vpop.f32.mrb[0].mxu0
      %v1106 = vpop.f32.mrb[0].mxu0
      %v1107 = vadd.f32 0.0, %v1106
      %v1108 = vpop.f32.mrb[0].mxu0
      %1109 = vmatprep.mubr.bf16.mxu0 0
      %1110 = vmatmul.mubr.bf16.gmra.mrb[0].mxu0 %v721
      %v1111 = vpop.f32.mrb[0].mxu0
      %v1112 = vadd.f32 0.0, %v1111
      %v1113 = vpop.f32.mrb[0].mxu0
      %v1114 = vpop.f32.mrb[0].mxu0
      %v1115 = vadd.f32 0.0, %v1114
      %v1116 = vpop.f32.mrb[0].mxu0
      %1117 = vmatprep.mubr.bf16.mxu0 0
      %1118 = vmatmul.mubr.bf16.gmra.mrb[0].mxu0 %v724
      %v1119 = vpop.f32.mrb[0].mxu0
      %v1120 = vadd.f32 0.0, %v1119
      %v1121 = vpop.f32.mrb[0].mxu0
      %v1122 = vpop.f32.mrb[0].mxu0
      %v1123 = vadd.f32 0.0, %v1122
      %v1124 = vpop.f32.mrb[0].mxu0
      %1125 = vmatprep.mubr.bf16.mxu0 0
      %1126 = vmatmul.mubr.bf16.gmra.mrb[0].mxu0 %v727
      %v1127 = vpop.f32.mrb[0].mxu0
      %v1128 = vadd.f32 0.0, %v1127
      %v1129 = vpop.f32.mrb[0].mxu0
      %v1130 = vpop.f32.mrb[0].mxu0
      %v1131 = vadd.f32 0.0, %v1130
      %v1132 = vpop.f32.mrb[0].mxu0
      %1133 = vmatprep.mubr.bf16.mxu0 0
      %1134 = vmatmul.mubr.bf16.gmra.mrb[0].mxu0 %v730
      %v1135 = vpop.f32.mrb[0].mxu0
      %v1136 = vadd.f32 0.0, %v1135
      %v1137 = vpop.f32.mrb[0].mxu0
      %v1138 = vpop.f32.mrb[0].mxu0
      %v1139 = vadd.f32 0.0, %v1138
      %v1140 = vpop.f32.mrb[0].mxu0
      %1141 = vmatprep.mubr.bf16.mxu0 0
      %1142 = vmatmul.mubr.bf16.gmra.mrb[0].mxu0 %v733
      %v1143 = vpop.f32.mrb[0].mxu0
      %v1144 = vadd.f32 0.0, %v1143
      %v1145 = vpop.f32.mrb[0].mxu0
      %v1146 = vpop.f32.mrb[0].mxu0
      %v1147 = vadd.f32 0.0, %v1146
      %v1148 = vpop.f32.mrb[0].mxu0
      %1149 = vmatprep.mubr.bf16.mxu0 0
      %1150 = vmatmul.mubr.bf16.gmra.mrb[0].mxu0 %v736
      %v1151 = vpop.f32.mrb[0].mxu0
      %v1152 = vadd.f32 0.0, %v1151
      %v1153 = vpop.f32.mrb[0].mxu0
      %v1154 = vpop.f32.mrb[0].mxu0
      %v1155 = vadd.f32 0.0, %v1154
      %v1156 = vpop.f32.mrb[0].mxu0
      %1157 = vmatprep.mubr.bf16.mxu0 0
      %1158 = vmatmul.mubr.bf16.gmra.mrb[0].mxu0 %v739
      %v1159 = vpop.f32.mrb[0].mxu0
      %v1160 = vadd.f32 0.0, %v1159
      %v1161 = vpop.f32.mrb[0].mxu0
      %v1162 = vpop.f32.mrb[0].mxu0
      %v1163 = vadd.f32 0.0, %v1162
      %v1164 = vpop.f32.mrb[0].mxu0
      %1165 = vmatprep.mubr.bf16.mxu0 0
      %1166 = vmatmul.mubr.bf16.gmra.mrb[0].mxu0 %v742
      %v1167 = vpop.f32.mrb[0].mxu0
      %v1168 = vadd.f32 0.0, %v1167
      %v1169 = vpop.f32.mrb[0].mxu0
      %v1170 = vpop.f32.mrb[0].mxu0
      %v1171 = vadd.f32 0.0, %v1170
      %v1172 = vpop.f32.mrb[0].mxu0
      %1173 = vmatprep.mubr.bf16.mxu0 0
      %1174 = vmatmul.mubr.bf16.gmra.mrb[0].mxu0 %v745
      %v1175 = vpop.f32.mrb[0].mxu0
      %v1176 = vadd.f32 0.0, %v1175
      %v1177 = vpop.f32.mrb[0].mxu0
      %v1178 = vpop.f32.mrb[0].mxu0
      %v1179 = vadd.f32 0.0, %v1178
      %v1180 = vpop.f32.mrb[0].mxu0
      %1181 = vmatprep.mubr.bf16.mxu0 0
      %1182 = vmatmul.mubr.bf16.gmra.mrb[0].mxu0 %v748
      %v1183 = vpop.f32.mrb[0].mxu0
      %v1184 = vadd.f32 0.0, %v1183
      %v1185 = vpop.f32.mrb[0].mxu0
      %v1186 = vpop.f32.mrb[0].mxu0
      %v1187 = vadd.f32 0.0, %v1186
      %v1188 = vpop.f32.mrb[0].mxu0
      %1189 = vmatprep.mubr.bf16.mxu0 0
      %1190 = vmatmul.mubr.bf16.gmra.mrb[0].mxu0 %v751
      %v1191 = vpop.f32.mrb[0].mxu0
      %v1192 = vadd.f32 0.0, %v1191
      %v1193 = vpop.f32.mrb[0].mxu0
      %v1194 = vpop.f32.mrb[0].mxu0
      %v1195 = vadd.f32 0.0, %v1194
      %v1196 = vpop.f32.mrb[0].mxu0
      %1197 = vmatprep.mubr.bf16.mxu0 0
      %1198 = vmatmul.mubr.bf16.gmra.mrb[0].mxu0 %v754
      %v1199 = vpop.f32.mrb[0].mxu0
      %v1200 = vadd.f32 0.0, %v1199
      %v1201 = vpop.f32.mrb[0].mxu0
      %v1202 = vpop.f32.mrb[0].mxu0
      %v1203 = vadd.f32 0.0, %v1202
      %v1204 = vpop.f32.mrb[0].mxu0
      %1205 = vmatprep.mubr.bf16.mxu0 0
      %1206 = vmatmul.mubr.bf16.gmra.mrb[0].mxu0 %v757
      %v1207 = vpop.f32.mrb[0].mxu0
      %v1208 = vadd.f32 0.0, %v1207
      %v1209 = vpop.f32.mrb[0].mxu0
      %v1210 = vpop.f32.mrb[0].mxu0
      %v1211 = vadd.f32 0.0, %v1210
      %v1212 = vpop.f32.mrb[0].mxu0
      %1213 = vmatprep.mubr.bf16.mxu0 0
      %1214 = vmatmul.mubr.bf16.gmra.mrb[0].mxu0 %v760
      %v1215 = vpop.f32.mrb[0].mxu0
      %v1216 = vadd.f32 0.0, %v1215
      %v1217 = vpop.f32.mrb[0].mxu0
      %v1218 = vpop.f32.mrb[0].mxu0
      %v1219 = vadd.f32 0.0, %v1218
      %v1220 = vpop.f32.mrb[0].mxu0
      %1221 = vmatprep.mubr.bf16.mxu0 0
      %1222 = vmatmul.mubr.bf16.gmra.mrb[0].mxu0 %v763
      %v1223 = vpop.f32.mrb[0].mxu0
      %v1224 = vadd.f32 0.0, %v1223
      %v1225 = vpop.f32.mrb[0].mxu0
      %v1226 = vpop.f32.mrb[0].mxu0
      %v1227 = vadd.f32 0.0, %v1226
      %v1228 = vpop.f32.mrb[0].mxu0
      %1229 = vmatprep.mubr.bf16.mxu0 0
      %1230 = vmatmul.mubr.bf16.gmra.mrb[0].mxu0 %v766
      %v1231 = vpop.f32.mrb[0].mxu0
      %v1232 = vadd.f32 0.0, %v1231
      %v1233 = vpop.f32.mrb[0].mxu0
      %v1234 = vpop.f32.mrb[0].mxu0
      %v1235 = vadd.f32 0.0, %v1234
      %v1236 = vpop.f32.mrb[0].mxu0
      %1237 = vmatprep.mubr.bf16.mxu0 0
      %1238 = vmatmul.mubr.bf16.gmra.mrb[0].mxu0 %v769
      %v1239 = vpop.f32.mrb[0].mxu0
      %v1240 = vadd.f32 0.0, %v1239
      %v1241 = vpop.f32.mrb[0].mxu0
      %v1242 = vpop.f32.mrb[0].mxu0
      %v1243 = vadd.f32 0.0, %v1242
      %v1244 = vpop.f32.mrb[0].mxu0
      %1245 = vmatprep.mubr.bf16.mxu0 0
      %1246 = vmatmul.mubr.bf16.gmra.mrb[0].mxu0 %v772
      %v1247 = vpop.f32.mrb[0].mxu0
      %v1248 = vadd.f32 0.0, %v1247
      %v1249 = vpop.f32.mrb[0].mxu0
      %v1250 = vpop.f32.mrb[0].mxu0
      %v1251 = vadd.f32 0.0, %v1250
      %v1252 = vpop.f32.mrb[0].mxu0
      %1253 = vmatprep.mubr.bf16.mxu0 0
      %1254 = vmatmul.mubr.bf16.gmra.mrb[0].mxu0 %v775
      %v1255 = vpop.f32.mrb[0].mxu0
      %v1256 = vadd.f32 0.0, %v1255
      %v1257 = vpop.f32.mrb[0].mxu0
      %v1258 = vpop.f32.mrb[0].mxu0
      %v1259 = vadd.f32 0.0, %v1258
      %v1260 = vpop.f32.mrb[0].mxu0
      %1261 = vmatprep.mubr.bf16.mxu0 0
      %1262 = vmatmul.mubr.bf16.gmra.mrb[0].mxu0 %v778
      %v1263 = vpop.f32.mrb[0].mxu0
      %v1264 = vadd.f32 0.0, %v1263
      %v1265 = vpop.f32.mrb[0].mxu0
      %v1266 = vpop.f32.mrb[0].mxu0
      %v1267 = vadd.f32 0.0, %v1266
      %v1268 = vpop.f32.mrb[0].mxu0
      %1269 = vmatprep.mubr.bf16.mxu0 0
      %1270 = vmatmul.mubr.bf16.gmra.mrb[0].mxu0 %v781
      %v1271 = vpop.f32.mrb[0].mxu0
      %v1272 = vadd.f32 0.0, %v1271
      %v1273 = vpop.f32.mrb[0].mxu0
      %v1274 = vpop.f32.mrb[0].mxu0
      %v1275 = vadd.f32 0.0, %v1274
      %v1276 = vpop.f32.mrb[0].mxu0
      %1277 = vmatprep.mubr.bf16.mxu0 0
      %1278 = vmatmul.mubr.bf16.gmra.mrb[0].mxu0 %v784
      %v1279 = vpop.f32.mrb[0].mxu0
      %v1280 = vadd.f32 0.0, %v1279
      %v1281 = vpop.f32.mrb[0].mxu0
      %v1282 = vpop.f32.mrb[0].mxu0
      %v1283 = vadd.f32 0.0, %v1282
      %v1284 = vpop.f32.mrb[0].mxu0
      %1285 = vmatprep.mubr.bf16.mxu0 0
      %1286 = vmatmul.mubr.bf16.gmra.mrb[0].mxu0 %v787
      %v1287 = vpop.f32.mrb[0].mxu0
      %v1288 = vadd.f32 0.0, %v1287
      %v1289 = vpop.f32.mrb[0].mxu0
      %v1290 = vpop.f32.mrb[0].mxu0
      %v1291 = vadd.f32 0.0, %v1290
      %v1292 = vpop.f32.mrb[0].mxu0
      %1293 = vmatprep.mubr.bf16.mxu0 0
      %1294 = vmatmul.mubr.bf16.gmra.mrb[0].mxu0 %v790
      %v1295 = vpop.f32.mrb[0].mxu0
      %v1296 = vadd.f32 0.0, %v1295
      %v1297 = vpop.f32.mrb[0].mxu0
      %v1298 = vpop.f32.mrb[0].mxu0
      %v1299 = vadd.f32 0.0, %v1298
      %v1300 = vpop.f32.mrb[0].mxu0
      %1301 = vmatprep.mubr.bf16.mxu0 0
      %1302 = vmatmul.mubr.bf16.gmra.mrb[0].mxu0 %v793
      %v1303 = vpop.f32.mrb[0].mxu0
      %v1304 = vadd.f32 0.0, %v1303
      %v1305 = vpop.f32.mrb[0].mxu0
      %v1306 = vpop.f32.mrb[0].mxu0
      %v1307 = vadd.f32 0.0, %v1306
      %v1308 = vpop.f32.mrb[0].mxu0
      %1309 = vmatprep.mubr.bf16.mxu0 0
      %1310 = vmatmul.mubr.bf16.gmra.mrb[0].mxu0 %v796
      %v1311 = vpop.f32.mrb[0].mxu0
      %v1312 = vadd.f32 0.0, %v1311
      %v1313 = vpop.f32.mrb[0].mxu0
      %v1314 = vpop.f32.mrb[0].mxu0
      %v1315 = vadd.f32 0.0, %v1314
      %v1316 = vpop.f32.mrb[0].mxu0
      %1317 = vmatprep.mubr.bf16.mxu0 0
      %1318 = vmatmul.mubr.bf16.gmra.mrb[0].mxu0 %v799
      %v1319 = vpop.f32.mrb[0].mxu0
      %v1320 = vadd.f32 0.0, %v1319
      %v1321 = vpop.f32.mrb[0].mxu0
      %v1322 = vpop.f32.mrb[0].mxu0
      %v1323 = vadd.f32 0.0, %v1322
      %v1324 = vpop.f32.mrb[0].mxu0
      %1325 = vmatprep.mubr.bf16.mxu0 0
      %1326 = vmatmul.mubr.bf16.gmra.mrb[0].mxu0 %v802
      %v1327 = vpop.f32.mrb[0].mxu0
      %v1328 = vadd.f32 0.0, %v1327
      %v1329 = vpop.f32.mrb[0].mxu0
      %v1330 = vpop.f32.mrb[0].mxu0
      %v1331 = vadd.f32 0.0, %v1330
      %v1332 = vpop.f32.mrb[0].mxu0
      %1333 = vmatprep.mubr.bf16.mxu0 0
      %1334 = vmatmul.mubr.bf16.gmra.mrb[0].mxu0 %v805
      %v1335 = vpop.f32.mrb[0].mxu0
      %v1336 = vadd.f32 0.0, %v1335
      %v1337 = vpop.f32.mrb[0].mxu0
      %v1338 = vpop.f32.mrb[0].mxu0
      %v1339 = vadd.f32 0.0, %v1338
      %v1340 = vpop.f32.mrb[0].mxu0
      %1341 = vmatprep.mubr.bf16.mxu0 0
      %1342 = vmatmul.mubr.bf16.gmra.mrb[0].mxu0 %v808
      %v1343 = vpop.f32.mrb[0].mxu0
      %v1344 = vadd.f32 0.0, %v1343
      %v1345 = vpop.f32.mrb[0].mxu0
      %v1346 = vpop.f32.mrb[0].mxu0
      %v1347 = vadd.f32 0.0, %v1346
      %v1348 = vpop.f32.mrb[0].mxu0
      %1349 = vmatprep.mubr.bf16.mxu0 0
      %1350 = vmatmul.mubr.bf16.gmra.mrb[0].mxu0 %v811
      %v1351 = vpop.f32.mrb[0].mxu0
      %v1352 = vadd.f32 0.0, %v1351
      %v1353 = vpop.f32.mrb[0].mxu0
      %v1354 = vpop.f32.mrb[0].mxu0
      %v1355 = vadd.f32 0.0, %v1354
      %v1356 = vpop.f32.mrb[0].mxu0
      %1357 = vdwg.mxu0
      %v1358 = vadd.f32 %v848, %v851
      %v1359 = vadd.f32 %v1358, %v856
      %v1360 = vadd.f32 %v1359, %v859
      %v1361 = vadd.f32 %v1360, %v864
      %v1362 = vadd.f32 %v1361, %v867
      %v1363 = vadd.f32 %v1362, %v872
      %v1364 = vadd.f32 %v1363, %v875
      %v1365 = vadd.f32 %v1364, %v880
      %v1366 = vadd.f32 %v1365, %v883
      %v1367 = vadd.f32 %v1366, %v888
      %v1368 = vadd.f32 %v1367, %v891
      %v1369 = vadd.f32 %v1368, %v896
      %v1370 = vadd.f32 %v1369, %v899
      %v1371 = vadd.f32 %v1370, %v904
      %v1372 = vadd.f32 %v1371, %v907
      %v1373 = vadd.f32 %v1372, %v912
      %v1374 = vadd.f32 %v1373, %v915
      %v1375 = vadd.f32 %v1374, %v920
      %v1376 = vadd.f32 %v1375, %v923
      %v1377 = vadd.f32 %v1376, %v928
      %v1378 = vadd.f32 %v1377, %v931
      %v1379 = vadd.f32 %v1378, %v936
      %v1380 = vadd.f32 %v1379, %v939
      %v1381 = vadd.f32 %v1380, %v944
      %v1382 = vadd.f32 %v1381, %v947
      %v1383 = vadd.f32 %v1382, %v952
      %v1384 = vadd.f32 %v1383, %v955
      %v1385 = vadd.f32 %v1384, %v960
      %v1386 = vadd.f32 %v1385, %v963
      %v1387 = vadd.f32 %v1386, %v968
      %v1388 = vadd.f32 %v1387, %v971
      %v1389 = vadd.f32 %v1388, %v976
      %v1390 = vadd.f32 %v1389, %v979
      %v1391 = vadd.f32 %v1390, %v984
      %v1392 = vadd.f32 %v1391, %v987
      %v1393 = vadd.f32 %v1392, %v992
      %v1394 = vadd.f32 %v1393, %v995
      %v1395 = vadd.f32 %v1394, %v1000
      %v1396 = vadd.f32 %v1395, %v1003
      %v1397 = vadd.f32 %v1396, %v1008
      %v1398 = vadd.f32 %v1397, %v1011
      %v1399 = vadd.f32 %v1398, %v1016
      %v1400 = vadd.f32 %v1399, %v1019
      %v1401 = vadd.f32 %v1400, %v1024
      %v1402 = vadd.f32 %v1401, %v1027
      %v1403 = vadd.f32 %v1402, %v1032
      %v1404 = vadd.f32 %v1403, %v1035
      %v1405 = vadd.f32 %v1404, %v1040
      %v1406 = vadd.f32 %v1405, %v1043
      %v1407 = vadd.f32 %v1406, %v1048
      %v1408 = vadd.f32 %v1407, %v1051
      %v1409 = vadd.f32 %v1408, %v1056
      %v1410 = vadd.f32 %v1409, %v1059
      %v1411 = vadd.f32 %v1410, %v1064
      %v1412 = vadd.f32 %v1411, %v1067
      %v1413 = vadd.f32 %v1412, %v1072
      %v1414 = vadd.f32 %v1413, %v1075
      %v1415 = vadd.f32 %v1414, %v1080
      %v1416 = vadd.f32 %v1415, %v1083
      %v1417 = vadd.f32 %v1416, %v1088
      %v1418 = vadd.f32 %v1417, %v1091
      %v1419 = vadd.f32 %v1418, %v1096
      %v1420 = vadd.f32 %v1419, %v1099
      %v1421 = vadd.f32 %v1420, %v1104
      %v1422 = vadd.f32 %v1421, %v1107
      %v1423 = vadd.f32 %v1422, %v1112
      %v1424 = vadd.f32 %v1423, %v1115
      %v1425 = vadd.f32 %v1424, %v1120
      %v1426 = vadd.f32 %v1425, %v1123
      %v1427 = vadd.f32 %v1426, %v1128
      %v1428 = vadd.f32 %v1427, %v1131
      %v1429 = vadd.f32 %v1428, %v1136
      %v1430 = vadd.f32 %v1429, %v1139
      %v1431 = vadd.f32 %v1430, %v1144
      %v1432 = vadd.f32 %v1431, %v1147
      %v1433 = vadd.f32 %v1432, %v1152
      %v1434 = vadd.f32 %v1433, %v1155
      %v1435 = vadd.f32 %v1434, %v1160
      %v1436 = vadd.f32 %v1435, %v1163
      %v1437 = vadd.f32 %v1436, %v1168
      %v1438 = vadd.f32 %v1437, %v1171
      %v1439 = vadd.f32 %v1438, %v1176
      %v1440 = vadd.f32 %v1439, %v1179
      %v1441 = vadd.f32 %v1440, %v1184
      %v1442 = vadd.f32 %v1441, %v1187
      %v1443 = vadd.f32 %v1442, %v1192
      %v1444 = vadd.f32 %v1443, %v1195
      %v1445 = vadd.f32 %v1444, %v1200
      %v1446 = vadd.f32 %v1445, %v1203
      %v1447 = vadd.f32 %v1446, %v1208
      %v1448 = vadd.f32 %v1447, %v1211
      %v1449 = vadd.f32 %v1448, %v1216
      %v1450 = vadd.f32 %v1449, %v1219
      %v1451 = vadd.f32 %v1450, %v1224
      %v1452 = vadd.f32 %v1451, %v1227
      %v1453 = vadd.f32 %v1452, %v1232
      %v1454 = vadd.f32 %v1453, %v1235
      %v1455 = vadd.f32 %v1454, %v1240
      %v1456 = vadd.f32 %v1455, %v1243
      %v1457 = vadd.f32 %v1456, %v1248
      %v1458 = vadd.f32 %v1457, %v1251
      %v1459 = vadd.f32 %v1458, %v1256
      %v1460 = vadd.f32 %v1459, %v1259
      %v1461 = vadd.f32 %v1460, %v1264
      %v1462 = vadd.f32 %v1461, %v1267
      %v1463 = vadd.f32 %v1462, %v1272
      %v1464 = vadd.f32 %v1463, %v1275
      %v1465 = vadd.f32 %v1464, %v1280
      %v1466 = vadd.f32 %v1465, %v1283
      %v1467 = vadd.f32 %v1466, %v1288
      %v1468 = vadd.f32 %v1467, %v1291
      %v1469 = vadd.f32 %v1468, %v1296
      %v1470 = vadd.f32 %v1469, %v1299
      %v1471 = vadd.f32 %v1470, %v1304
      %v1472 = vadd.f32 %v1471, %v1307
      %v1473 = vadd.f32 %v1472, %v1312
      %v1474 = vadd.f32 %v1473, %v1315
      %v1475 = vadd.f32 %v1474, %v1320
      %v1476 = vadd.f32 %v1475, %v1323
      %v1477 = vadd.f32 %v1476, %v1328
      %v1478 = vadd.f32 %v1477, %v1331
      %v1479 = vadd.f32 %v1478, %v1336
      %v1480 = vadd.f32 %v1479, %v1339
      %v1481 = vadd.f32 %v1480, %v1344
      %v1482 = vadd.f32 %v1481, %v1347
      %v1483 = vadd.f32 %v1482, %v1352
      %v1484 = vadd.f32 %v1483, %v1355
      %v1485 = vrot.slane %v1484, 4
      %v1486 = vadd.f32 %v1484, %v1485
      %v1487 = vrot.slane %v1486, 2
      %v1488 = vadd.f32 %v1486, %v1487
      %v1489 = vrot.slane %v1488, 1
      %v1490 = vadd.f32 %v1488, %v1489
      %v1491 = vmul.f32 %v848, %v848
      %v1492 = vmul.f32 %v851, %v851
      %v1493 = vmul.f32 %v856, %v856
      %v1494 = vmul.f32 %v859, %v859
      %v1495 = vmul.f32 %v864, %v864
      %v1496 = vmul.f32 %v867, %v867
      %v1497 = vmul.f32 %v872, %v872
      %v1498 = vmul.f32 %v875, %v875
      %v1499 = vmul.f32 %v880, %v880
      %v1500 = vmul.f32 %v883, %v883
      %v1501 = vmul.f32 %v888, %v888
      %v1502 = vmul.f32 %v891, %v891
      %v1503 = vmul.f32 %v896, %v896
      %v1504 = vmul.f32 %v899, %v899
      %v1505 = vmul.f32 %v904, %v904
      %v1506 = vmul.f32 %v907, %v907
      %v1507 = vmul.f32 %v912, %v912
      %v1508 = vmul.f32 %v915, %v915
      %v1509 = vmul.f32 %v920, %v920
      %v1510 = vmul.f32 %v923, %v923
      %v1511 = vmul.f32 %v928, %v928
      %v1512 = vmul.f32 %v931, %v931
      %v1513 = vmul.f32 %v936, %v936
      %v1514 = vmul.f32 %v939, %v939
      %v1515 = vmul.f32 %v944, %v944
      %v1516 = vmul.f32 %v947, %v947
      %v1517 = vmul.f32 %v952, %v952
      %v1518 = vmul.f32 %v955, %v955
      %v1519 = vmul.f32 %v960, %v960
      %v1520 = vmul.f32 %v963, %v963
      %v1521 = vmul.f32 %v968, %v968
      %v1522 = vmul.f32 %v971, %v971
      %v1523 = vmul.f32 %v976, %v976
      %v1524 = vmul.f32 %v979, %v979
      %v1525 = vmul.f32 %v984, %v984
      %v1526 = vmul.f32 %v987, %v987
      %v1527 = vmul.f32 %v992, %v992
      %v1528 = vmul.f32 %v995, %v995
      %v1529 = vmul.f32 %v1000, %v1000
      %v1530 = vmul.f32 %v1003, %v1003
      %v1531 = vmul.f32 %v1008, %v1008
      %v1532 = vmul.f32 %v1011, %v1011
      %v1533 = vmul.f32 %v1016, %v1016
      %v1534 = vmul.f32 %v1019, %v1019
      %v1535 = vmul.f32 %v1024, %v1024
      %v1536 = vmul.f32 %v1027, %v1027
      %v1537 = vmul.f32 %v1032, %v1032
      %v1538 = vmul.f32 %v1035, %v1035
      %v1539 = vmul.f32 %v1040, %v1040
      %v1540 = vmul.f32 %v1043, %v1043
      %v1541 = vmul.f32 %v1048, %v1048
      %v1542 = vmul.f32 %v1051, %v1051
      %v1543 = vmul.f32 %v1056, %v1056
      %v1544 = vmul.f32 %v1059, %v1059
      %v1545 = vmul.f32 %v1064, %v1064
      %v1546 = vmul.f32 %v1067, %v1067
      %v1547 = vmul.f32 %v1072, %v1072
      %v1548 = vmul.f32 %v1075, %v1075
      %v1549 = vmul.f32 %v1080, %v1080
      %v1550 = vmul.f32 %v1083, %v1083
      %v1551 = vmul.f32 %v1088, %v1088
      %v1552 = vmul.f32 %v1091, %v1091
      %v1553 = vmul.f32 %v1096, %v1096
      %v1554 = vmul.f32 %v1099, %v1099
      %v1555 = vmul.f32 %v1104, %v1104
      %v1556 = vmul.f32 %v1107, %v1107
      %v1557 = vmul.f32 %v1112, %v1112
      %v1558 = vmul.f32 %v1115, %v1115
      %v1559 = vmul.f32 %v1120, %v1120
      %v1560 = vmul.f32 %v1123, %v1123
      %v1561 = vmul.f32 %v1128, %v1128
      %v1562 = vmul.f32 %v1131, %v1131
      %v1563 = vmul.f32 %v1136, %v1136
      %v1564 = vmul.f32 %v1139, %v1139
      %v1565 = vmul.f32 %v1144, %v1144
      %v1566 = vmul.f32 %v1147, %v1147
      %v1567 = vmul.f32 %v1152, %v1152
      %v1568 = vmul.f32 %v1155, %v1155
      %v1569 = vmul.f32 %v1160, %v1160
      %v1570 = vmul.f32 %v1163, %v1163
      %v1571 = vmul.f32 %v1168, %v1168
      %v1572 = vmul.f32 %v1171, %v1171
      %v1573 = vmul.f32 %v1176, %v1176
      %v1574 = vmul.f32 %v1179, %v1179
      %v1575 = vmul.f32 %v1184, %v1184
      %v1576 = vmul.f32 %v1187, %v1187
      %v1577 = vmul.f32 %v1192, %v1192
      %v1578 = vmul.f32 %v1195, %v1195
      %v1579 = vmul.f32 %v1200, %v1200
      %v1580 = vmul.f32 %v1203, %v1203
      %v1581 = vmul.f32 %v1208, %v1208
      %v1582 = vmul.f32 %v1211, %v1211
      %v1583 = vmul.f32 %v1216, %v1216
      %v1584 = vmul.f32 %v1219, %v1219
      %v1585 = vmul.f32 %v1224, %v1224
      %v1586 = vmul.f32 %v1227, %v1227
      %v1587 = vmul.f32 %v1232, %v1232
      %v1588 = vmul.f32 %v1235, %v1235
      %v1589 = vmul.f32 %v1240, %v1240
      %v1590 = vmul.f32 %v1243, %v1243
      %v1591 = vmul.f32 %v1248, %v1248
      %v1592 = vmul.f32 %v1251, %v1251
      %v1593 = vmul.f32 %v1256, %v1256
      %v1594 = vmul.f32 %v1259, %v1259
      %v1595 = vmul.f32 %v1264, %v1264
      %v1596 = vmul.f32 %v1267, %v1267
      %v1597 = vmul.f32 %v1272, %v1272
      %v1598 = vmul.f32 %v1275, %v1275
      %v1599 = vmul.f32 %v1280, %v1280
      %v1600 = vmul.f32 %v1283, %v1283
      %v1601 = vmul.f32 %v1288, %v1288
      %v1602 = vmul.f32 %v1291, %v1291
      %v1603 = vmul.f32 %v1296, %v1296
      %v1604 = vmul.f32 %v1299, %v1299
      %v1605 = vmul.f32 %v1304, %v1304
      %v1606 = vmul.f32 %v1307, %v1307
      %v1607 = vmul.f32 %v1312, %v1312
      %v1608 = vmul.f32 %v1315, %v1315
      %v1609 = vmul.f32 %v1320, %v1320
      %v1610 = vmul.f32 %v1323, %v1323
      %v1611 = vmul.f32 %v1328, %v1328
      %v1612 = vmul.f32 %v1331, %v1331
      %v1613 = vmul.f32 %v1336, %v1336
      %v1614 = vmul.f32 %v1339, %v1339
      %v1615 = vmul.f32 %v1344, %v1344
      %v1616 = vmul.f32 %v1347, %v1347
      %v1617 = vmul.f32 %v1352, %v1352
      %v1618 = vmul.f32 %v1355, %v1355
      %v1619 = vadd.f32 %v1491, %v1492
      %v1620 = vadd.f32 %v1619, %v1493
      %v1621 = vadd.f32 %v1620, %v1494
      %v1622 = vadd.f32 %v1621, %v1495
      %v1623 = vadd.f32 %v1622, %v1496
      %v1624 = vadd.f32 %v1623, %v1497
      %v1625 = vadd.f32 %v1624, %v1498
      %v1626 = vadd.f32 %v1625, %v1499
      %v1627 = vadd.f32 %v1626, %v1500
      %v1628 = vadd.f32 %v1627, %v1501
      %v1629 = vadd.f32 %v1628, %v1502
      %v1630 = vadd.f32 %v1629, %v1503
      %v1631 = vadd.f32 %v1630, %v1504
      %v1632 = vadd.f32 %v1631, %v1505
      %v1633 = vadd.f32 %v1632, %v1506
      %v1634 = vadd.f32 %v1633, %v1507
      %v1635 = vadd.f32 %v1634, %v1508
      %v1636 = vadd.f32 %v1635, %v1509
      %v1637 = vadd.f32 %v1636, %v1510
      %v1638 = vadd.f32 %v1637, %v1511
      %v1639 = vadd.f32 %v1638, %v1512
      %v1640 = vadd.f32 %v1639, %v1513
      %v1641 = vadd.f32 %v1640, %v1514
      %v1642 = vadd.f32 %v1641, %v1515
      %v1643 = vadd.f32 %v1642, %v1516
      %v1644 = vadd.f32 %v1643, %v1517
      %v1645 = vadd.f32 %v1644, %v1518
      %v1646 = vadd.f32 %v1645, %v1519
      %v1647 = vadd.f32 %v1646, %v1520
      %v1648 = vadd.f32 %v1647, %v1521
      %v1649 = vadd.f32 %v1648, %v1522
      %v1650 = vadd.f32 %v1649, %v1523
      %v1651 = vadd.f32 %v1650, %v1524
      %v1652 = vadd.f32 %v1651, %v1525
      %v1653 = vadd.f32 %v1652, %v1526
      %v1654 = vadd.f32 %v1653, %v1527
      %v1655 = vadd.f32 %v1654, %v1528
      %v1656 = vadd.f32 %v1655, %v1529
      %v1657 = vadd.f32 %v1656, %v1530
      %v1658 = vadd.f32 %v1657, %v1531
      %v1659 = vadd.f32 %v1658, %v1532
      %v1660 = vadd.f32 %v1659, %v1533
      %v1661 = vadd.f32 %v1660, %v1534
      %v1662 = vadd.f32 %v1661, %v1535
      %v1663 = vadd.f32 %v1662, %v1536
      %v1664 = vadd.f32 %v1663, %v1537
      %v1665 = vadd.f32 %v1664, %v1538
      %v1666 = vadd.f32 %v1665, %v1539
      %v1667 = vadd.f32 %v1666, %v1540
      %v1668 = vadd.f32 %v1667, %v1541
      %v1669 = vadd.f32 %v1668, %v1542
      %v1670 = vadd.f32 %v1669, %v1543
      %v1671 = vadd.f32 %v1670, %v1544
      %v1672 = vadd.f32 %v1671, %v1545
      %v1673 = vadd.f32 %v1672, %v1546
      %v1674 = vadd.f32 %v1673, %v1547
      %v1675 = vadd.f32 %v1674, %v1548
      %v1676 = vadd.f32 %v1675, %v1549
      %v1677 = vadd.f32 %v1676, %v1550
      %v1678 = vadd.f32 %v1677, %v1551
      %v1679 = vadd.f32 %v1678, %v1552
      %v1680 = vadd.f32 %v1679, %v1553
      %v1681 = vadd.f32 %v1680, %v1554
      %v1682 = vadd.f32 %v1681, %v1555
      %v1683 = vadd.f32 %v1682, %v1556
      %v1684 = vadd.f32 %v1683, %v1557
      %v1685 = vadd.f32 %v1684, %v1558
      %v1686 = vadd.f32 %v1685, %v1559
      %v1687 = vadd.f32 %v1686, %v1560
      %v1688 = vadd.f32 %v1687, %v1561
      %v1689 = vadd.f32 %v1688, %v1562
      %v1690 = vadd.f32 %v1689, %v1563
      %v1691 = vadd.f32 %v1690, %v1564
      %v1692 = vadd.f32 %v1691, %v1565
      %v1693 = vadd.f32 %v1692, %v1566
      %v1694 = vadd.f32 %v1693, %v1567
      %v1695 = vadd.f32 %v1694, %v1568
      %v1696 = vadd.f32 %v1695, %v1569
      %v1697 = vadd.f32 %v1696, %v1570
      %v1698 = vadd.f32 %v1697, %v1571
      %v1699 = vadd.f32 %v1698, %v1572
      %v1700 = vadd.f32 %v1699, %v1573
      %v1701 = vadd.f32 %v1700, %v1574
      %v1702 = vadd.f32 %v1701, %v1575
      %v1703 = vadd.f32 %v1702, %v1576
      %v1704 = vadd.f32 %v1703, %v1577
      %v1705 = vadd.f32 %v1704, %v1578
      %v1706 = vadd.f32 %v1705, %v1579
      %v1707 = vadd.f32 %v1706, %v1580
      %v1708 = vadd.f32 %v1707, %v1581
      %v1709 = vadd.f32 %v1708, %v1582
      %v1710 = vadd.f32 %v1709, %v1583
      %v1711 = vadd.f32 %v1710, %v1584
      %v1712 = vadd.f32 %v1711, %v1585
      %v1713 = vadd.f32 %v1712, %v1586
      %v1714 = vadd.f32 %v1713, %v1587
      %v1715 = vadd.f32 %v1714, %v1588
      %v1716 = vadd.f32 %v1715, %v1589
      %v1717 = vadd.f32 %v1716, %v1590
      %v1718 = vadd.f32 %v1717, %v1591
      %v1719 = vadd.f32 %v1718, %v1592
      %v1720 = vadd.f32 %v1719, %v1593
      %v1721 = vadd.f32 %v1720, %v1594
      %v1722 = vadd.f32 %v1721, %v1595
      %v1723 = vadd.f32 %v1722, %v1596
      %v1724 = vadd.f32 %v1723, %v1597
      %v1725 = vadd.f32 %v1724, %v1598
      %v1726 = vadd.f32 %v1725, %v1599
      %v1727 = vadd.f32 %v1726, %v1600
      %v1728 = vadd.f32 %v1727, %v1601
      %v1729 = vadd.f32 %v1728, %v1602
      %v1730 = vadd.f32 %v1729, %v1603
      %v1731 = vadd.f32 %v1730, %v1604
      %v1732 = vadd.f32 %v1731, %v1605
      %v1733 = vadd.f32 %v1732, %v1606
      %v1734 = vadd.f32 %v1733, %v1607
      %v1735 = vadd.f32 %v1734, %v1608
      %v1736 = vadd.f32 %v1735, %v1609
      %v1737 = vadd.f32 %v1736, %v1610
      %v1738 = vadd.f32 %v1737, %v1611
      %v1739 = vadd.f32 %v1738, %v1612
      %v1740 = vadd.f32 %v1739, %v1613
      %v1741 = vadd.f32 %v1740, %v1614
      %v1742 = vadd.f32 %v1741, %v1615
      %v1743 = vadd.f32 %v1742, %v1616
      %v1744 = vadd.f32 %v1743, %v1617
      %v1745 = vadd.f32 %v1744, %v1618
      %v1746 = vrot.slane %v1745, 4
      %v1747 = vadd.f32 %v1745, %v1746
      %v1748 = vrot.slane %v1747, 2
      %v1749 = vadd.f32 %v1747, %v1748
      %v1750 = vrot.slane %v1749, 1
      %v1751 = vadd.f32 %v1749, %v1750
      %v1752 = vmul.f32 %v1490, 0.0009765625
      %v1753 = vmul.f32 %v1751, 0.0009765625
      %v1754 = vmul.f32 %v1752, %v1752
      %v1755 = vsub.f32 %v1753, %v1754
      %v1756 = vmax.f32 %v1755, 0.0
      %v1757 = vsub.f32 %v848, %v1752
      %v1758 = vsub.f32 %v851, %v1752
      %v1759 = vsub.f32 %v856, %v1752
      %v1760 = vsub.f32 %v859, %v1752
      %v1761 = vsub.f32 %v864, %v1752
      %v1762 = vsub.f32 %v867, %v1752
      %v1763 = vsub.f32 %v872, %v1752
      %v1764 = vsub.f32 %v875, %v1752
      %v1765 = vsub.f32 %v880, %v1752
      %v1766 = vsub.f32 %v883, %v1752
      %v1767 = vsub.f32 %v888, %v1752
      %v1768 = vsub.f32 %v891, %v1752
      %v1769 = vsub.f32 %v896, %v1752
      %v1770 = vsub.f32 %v899, %v1752
      %v1771 = vsub.f32 %v904, %v1752
      %v1772 = vsub.f32 %v907, %v1752
      %v1773 = vsub.f32 %v912, %v1752
      %v1774 = vsub.f32 %v915, %v1752
      %v1775 = vsub.f32 %v920, %v1752
      %v1776 = vsub.f32 %v923, %v1752
      %v1777 = vsub.f32 %v928, %v1752
      %v1778 = vsub.f32 %v931, %v1752
      %v1779 = vsub.f32 %v936, %v1752
      %v1780 = vsub.f32 %v939, %v1752
      %v1781 = vsub.f32 %v944, %v1752
      %v1782 = vsub.f32 %v947, %v1752
      %v1783 = vsub.f32 %v952, %v1752
      %v1784 = vsub.f32 %v955, %v1752
      %v1785 = vsub.f32 %v960, %v1752
      %v1786 = vsub.f32 %v963, %v1752
      %v1787 = vsub.f32 %v968, %v1752
      %v1788 = vsub.f32 %v971, %v1752
      %v1789 = vsub.f32 %v976, %v1752
      %v1790 = vsub.f32 %v979, %v1752
      %v1791 = vsub.f32 %v984, %v1752
      %v1792 = vsub.f32 %v987, %v1752
      %v1793 = vsub.f32 %v992, %v1752
      %v1794 = vsub.f32 %v995, %v1752
      %v1795 = vsub.f32 %v1000, %v1752
      %v1796 = vsub.f32 %v1003, %v1752
      %v1797 = vsub.f32 %v1008, %v1752
      %v1798 = vsub.f32 %v1011, %v1752
      %v1799 = vsub.f32 %v1016, %v1752
      %v1800 = vsub.f32 %v1019, %v1752
      %v1801 = vsub.f32 %v1024, %v1752
      %v1802 = vsub.f32 %v1027, %v1752
      %v1803 = vsub.f32 %v1032, %v1752
      %v1804 = vsub.f32 %v1035, %v1752
      %v1805 = vsub.f32 %v1040, %v1752
      %v1806 = vsub.f32 %v1043, %v1752
      %v1807 = vsub.f32 %v1048, %v1752
      %v1808 = vsub.f32 %v1051, %v1752
      %v1809 = vsub.f32 %v1056, %v1752
      %v1810 = vsub.f32 %v1059, %v1752
      %v1811 = vsub.f32 %v1064, %v1752
      %v1812 = vsub.f32 %v1067, %v1752
      %v1813 = vsub.f32 %v1072, %v1752
      %v1814 = vsub.f32 %v1075, %v1752
      %v1815 = vsub.f32 %v1080, %v1752
      %v1816 = vsub.f32 %v1083, %v1752
      %v1817 = vsub.f32 %v1088, %v1752
      %v1818 = vsub.f32 %v1091, %v1752
      %v1819 = vsub.f32 %v1096, %v1752
      %v1820 = vsub.f32 %v1099, %v1752
      %v1821 = vsub.f32 %v1104, %v1752
      %v1822 = vsub.f32 %v1107, %v1752
      %v1823 = vsub.f32 %v1112, %v1752
      %v1824 = vsub.f32 %v1115, %v1752
      %v1825 = vsub.f32 %v1120, %v1752
      %v1826 = vsub.f32 %v1123, %v1752
      %v1827 = vsub.f32 %v1128, %v1752
      %v1828 = vsub.f32 %v1131, %v1752
      %v1829 = vsub.f32 %v1136, %v1752
      %v1830 = vsub.f32 %v1139, %v1752
      %v1831 = vsub.f32 %v1144, %v1752
      %v1832 = vsub.f32 %v1147, %v1752
      %v1833 = vsub.f32 %v1152, %v1752
      %v1834 = vsub.f32 %v1155, %v1752
      %v1835 = vsub.f32 %v1160, %v1752
      %v1836 = vsub.f32 %v1163, %v1752
      %v1837 = vsub.f32 %v1168, %v1752
      %v1838 = vsub.f32 %v1171, %v1752
      %v1839 = vsub.f32 %v1176, %v1752
      %v1840 = vsub.f32 %v1179, %v1752
      %v1841 = vsub.f32 %v1184, %v1752
      %v1842 = vsub.f32 %v1187, %v1752
      %v1843 = vsub.f32 %v1192, %v1752
      %v1844 = vsub.f32 %v1195, %v1752
      %v1845 = vsub.f32 %v1200, %v1752
      %v1846 = vsub.f32 %v1203, %v1752
      %v1847 = vsub.f32 %v1208, %v1752
      %v1848 = vsub.f32 %v1211, %v1752
      %v1849 = vsub.f32 %v1216, %v1752
      %v1850 = vsub.f32 %v1219, %v1752
      %v1851 = vsub.f32 %v1224, %v1752
      %v1852 = vsub.f32 %v1227, %v1752
      %v1853 = vsub.f32 %v1232, %v1752
      %v1854 = vsub.f32 %v1235, %v1752
      %v1855 = vsub.f32 %v1240, %v1752
      %v1856 = vsub.f32 %v1243, %v1752
      %v1857 = vsub.f32 %v1248, %v1752
      %v1858 = vsub.f32 %v1251, %v1752
      %v1859 = vsub.f32 %v1256, %v1752
      %v1860 = vsub.f32 %v1259, %v1752
      %v1861 = vsub.f32 %v1264, %v1752
      %v1862 = vsub.f32 %v1267, %v1752
      %v1863 = vsub.f32 %v1272, %v1752
      %v1864 = vsub.f32 %v1275, %v1752
      %v1865 = vsub.f32 %v1280, %v1752
      %v1866 = vsub.f32 %v1283, %v1752
      %v1867 = vsub.f32 %v1288, %v1752
      %v1868 = vsub.f32 %v1291, %v1752
      %v1869 = vsub.f32 %v1296, %v1752
      %v1870 = vsub.f32 %v1299, %v1752
      %v1871 = vsub.f32 %v1304, %v1752
      %v1872 = vsub.f32 %v1307, %v1752
      %v1873 = vsub.f32 %v1312, %v1752
      %v1874 = vsub.f32 %v1315, %v1752
      %v1875 = vsub.f32 %v1320, %v1752
      %v1876 = vsub.f32 %v1323, %v1752
      %v1877 = vsub.f32 %v1328, %v1752
      %v1878 = vsub.f32 %v1331, %v1752
      %v1879 = vsub.f32 %v1336, %v1752
      %v1880 = vsub.f32 %v1339, %v1752
      %v1881 = vsub.f32 %v1344, %v1752
      %v1882 = vsub.f32 %v1347, %v1752
      %v1883 = vsub.f32 %v1352, %v1752
      %v1884 = vsub.f32 %v1355, %v1752
      %v1885 = vadd.f32 %v1756, 1e-05
      %v1886 = vrsqrt.pop %v1885
      %v1887 = vmul.f32 %v1757, %v1886
      %v1888 = vmul.f32 %v1758, %v1886
      %v1889 = vmul.f32 %v1759, %v1886
      %v1890 = vmul.f32 %v1760, %v1886
      %v1891 = vmul.f32 %v1761, %v1886
      %v1892 = vmul.f32 %v1762, %v1886
      %v1893 = vmul.f32 %v1763, %v1886
      %v1894 = vmul.f32 %v1764, %v1886
      %v1895 = vmul.f32 %v1765, %v1886
      %v1896 = vmul.f32 %v1766, %v1886
      %v1897 = vmul.f32 %v1767, %v1886
      %v1898 = vmul.f32 %v1768, %v1886
      %v1899 = vmul.f32 %v1769, %v1886
      %v1900 = vmul.f32 %v1770, %v1886
      %v1901 = vmul.f32 %v1771, %v1886
      %v1902 = vmul.f32 %v1772, %v1886
      %v1903 = vmul.f32 %v1773, %v1886
      %v1904 = vmul.f32 %v1774, %v1886
      %v1905 = vmul.f32 %v1775, %v1886
      %v1906 = vmul.f32 %v1776, %v1886
      %v1907 = vmul.f32 %v1777, %v1886
      %v1908 = vmul.f32 %v1778, %v1886
      %v1909 = vmul.f32 %v1779, %v1886
      %v1910 = vmul.f32 %v1780, %v1886
      %v1911 = vmul.f32 %v1781, %v1886
      %v1912 = vmul.f32 %v1782, %v1886
      %v1913 = vmul.f32 %v1783, %v1886
      %v1914 = vmul.f32 %v1784, %v1886
      %v1915 = vmul.f32 %v1785, %v1886
      %v1916 = vmul.f32 %v1786, %v1886
      %v1917 = vmul.f32 %v1787, %v1886
      %v1918 = vmul.f32 %v1788, %v1886
      %v1919 = vmul.f32 %v1789, %v1886
      %v1920 = vmul.f32 %v1790, %v1886
      %v1921 = vmul.f32 %v1791, %v1886
      %v1922 = vmul.f32 %v1792, %v1886
      %v1923 = vmul.f32 %v1793, %v1886
      %v1924 = vmul.f32 %v1794, %v1886
      %v1925 = vmul.f32 %v1795, %v1886
      %v1926 = vmul.f32 %v1796, %v1886
      %v1927 = vmul.f32 %v1797, %v1886
      %v1928 = vmul.f32 %v1798, %v1886
      %v1929 = vmul.f32 %v1799, %v1886
      %v1930 = vmul.f32 %v1800, %v1886
      %v1931 = vmul.f32 %v1801, %v1886
      %v1932 = vmul.f32 %v1802, %v1886
      %v1933 = vmul.f32 %v1803, %v1886
      %v1934 = vmul.f32 %v1804, %v1886
      %v1935 = vmul.f32 %v1805, %v1886
      %v1936 = vmul.f32 %v1806, %v1886
      %v1937 = vmul.f32 %v1807, %v1886
      %v1938 = vmul.f32 %v1808, %v1886
      %v1939 = vmul.f32 %v1809, %v1886
      %v1940 = vmul.f32 %v1810, %v1886
      %v1941 = vmul.f32 %v1811, %v1886
      %v1942 = vmul.f32 %v1812, %v1886
      %v1943 = vmul.f32 %v1813, %v1886
      %v1944 = vmul.f32 %v1814, %v1886
      %v1945 = vmul.f32 %v1815, %v1886
      %v1946 = vmul.f32 %v1816, %v1886
      %v1947 = vmul.f32 %v1817, %v1886
      %v1948 = vmul.f32 %v1818, %v1886
      %v1949 = vmul.f32 %v1819, %v1886
      %v1950 = vmul.f32 %v1820, %v1886
      %v1951 = vmul.f32 %v1821, %v1886
      %v1952 = vmul.f32 %v1822, %v1886
      %v1953 = vmul.f32 %v1823, %v1886
      %v1954 = vmul.f32 %v1824, %v1886
      %v1955 = vmul.f32 %v1825, %v1886
      %v1956 = vmul.f32 %v1826, %v1886
      %v1957 = vmul.f32 %v1827, %v1886
      %v1958 = vmul.f32 %v1828, %v1886
      %v1959 = vmul.f32 %v1829, %v1886
      %v1960 = vmul.f32 %v1830, %v1886
      %v1961 = vmul.f32 %v1831, %v1886
      %v1962 = vmul.f32 %v1832, %v1886
      %v1963 = vmul.f32 %v1833, %v1886
      %v1964 = vmul.f32 %v1834, %v1886
      %v1965 = vmul.f32 %v1835, %v1886
      %v1966 = vmul.f32 %v1836, %v1886
      %v1967 = vmul.f32 %v1837, %v1886
      %v1968 = vmul.f32 %v1838, %v1886
      %v1969 = vmul.f32 %v1839, %v1886
      %v1970 = vmul.f32 %v1840, %v1886
      %v1971 = vmul.f32 %v1841, %v1886
      %v1972 = vmul.f32 %v1842, %v1886
      %v1973 = vmul.f32 %v1843, %v1886
      %v1974 = vmul.f32 %v1844, %v1886
      %v1975 = vmul.f32 %v1845, %v1886
      %v1976 = vmul.f32 %v1846, %v1886
      %v1977 = vmul.f32 %v1847, %v1886
      %v1978 = vmul.f32 %v1848, %v1886
      %v1979 = vmul.f32 %v1849, %v1886
      %v1980 = vmul.f32 %v1850, %v1886
      %v1981 = vmul.f32 %v1851, %v1886
      %v1982 = vmul.f32 %v1852, %v1886
      %v1983 = vmul.f32 %v1853, %v1886
      %v1984 = vmul.f32 %v1854, %v1886
      %v1985 = vmul.f32 %v1855, %v1886
      %v1986 = vmul.f32 %v1856, %v1886
      %v1987 = vmul.f32 %v1857, %v1886
      %v1988 = vmul.f32 %v1858, %v1886
      %v1989 = vmul.f32 %v1859, %v1886
      %v1990 = vmul.f32 %v1860, %v1886
      %v1991 = vmul.f32 %v1861, %v1886
      %v1992 = vmul.f32 %v1862, %v1886
      %v1993 = vmul.f32 %v1863, %v1886
      %v1994 = vmul.f32 %v1864, %v1886
      %v1995 = vmul.f32 %v1865, %v1886
      %v1996 = vmul.f32 %v1866, %v1886
      %v1997 = vmul.f32 %v1867, %v1886
      %v1998 = vmul.f32 %v1868, %v1886
      %v1999 = vmul.f32 %v1869, %v1886
      %v2000 = vmul.f32 %v1870, %v1886
      %v2001 = vmul.f32 %v1871, %v1886
      %v2002 = vmul.f32 %v1872, %v1886
      %v2003 = vmul.f32 %v1873, %v1886
      %v2004 = vmul.f32 %v1874, %v1886
      %v2005 = vmul.f32 %v1875, %v1886
      %v2006 = vmul.f32 %v1876, %v1886
      %v2007 = vmul.f32 %v1877, %v1886
      %v2008 = vmul.f32 %v1878, %v1886
      %v2009 = vmul.f32 %v1879, %v1886
      %v2010 = vmul.f32 %v1880, %v1886
      %v2011 = vmul.f32 %v1881, %v1886
      %v2012 = vmul.f32 %v1882, %v1886
      %v2013 = vmul.f32 %v1883, %v1886
      %v2014 = vmul.f32 %v1884, %v1886
      %vm2015 = vcmp.gt.f32.partialorder %v1887, 0.0
      %vm2016 = vcmp.gt.f32.partialorder %v1888, 0.0
      %vm2017 = vcmp.gt.f32.partialorder %v1889, 0.0
      %vm2018 = vcmp.gt.f32.partialorder %v1890, 0.0
      %vm2019 = vcmp.gt.f32.partialorder %v1891, 0.0
      %vm2020 = vcmp.gt.f32.partialorder %v1892, 0.0
      %vm2021 = vcmp.gt.f32.partialorder %v1893, 0.0
      %vm2022 = vcmp.gt.f32.partialorder %v1894, 0.0
      %vm2023 = vcmp.gt.f32.partialorder %v1895, 0.0
      %vm2024 = vcmp.gt.f32.partialorder %v1896, 0.0
      %vm2025 = vcmp.gt.f32.partialorder %v1897, 0.0
      %vm2026 = vcmp.gt.f32.partialorder %v1898, 0.0
      %vm2027 = vcmp.gt.f32.partialorder %v1899, 0.0
      %vm2028 = vcmp.gt.f32.partialorder %v1900, 0.0
      %vm2029 = vcmp.gt.f32.partialorder %v1901, 0.0
      %vm2030 = vcmp.gt.f32.partialorder %v1902, 0.0
      %vm2031 = vcmp.gt.f32.partialorder %v1903, 0.0
      %vm2032 = vcmp.gt.f32.partialorder %v1904, 0.0
      %vm2033 = vcmp.gt.f32.partialorder %v1905, 0.0
      %vm2034 = vcmp.gt.f32.partialorder %v1906, 0.0
      %vm2035 = vcmp.gt.f32.partialorder %v1907, 0.0
      %vm2036 = vcmp.gt.f32.partialorder %v1908, 0.0
      %vm2037 = vcmp.gt.f32.partialorder %v1909, 0.0
      %vm2038 = vcmp.gt.f32.partialorder %v1910, 0.0
      %vm2039 = vcmp.gt.f32.partialorder %v1911, 0.0
      %vm2040 = vcmp.gt.f32.partialorder %v1912, 0.0
      %vm2041 = vcmp.gt.f32.partialorder %v1913, 0.0
      %vm2042 = vcmp.gt.f32.partialorder %v1914, 0.0
      %vm2043 = vcmp.gt.f32.partialorder %v1915, 0.0
      %vm2044 = vcmp.gt.f32.partialorder %v1916, 0.0
      %vm2045 = vcmp.gt.f32.partialorder %v1917, 0.0
      %vm2046 = vcmp.gt.f32.partialorder %v1918, 0.0
      %vm2047 = vcmp.gt.f32.partialorder %v1919, 0.0
      %vm2048 = vcmp.gt.f32.partialorder %v1920, 0.0
      %vm2049 = vcmp.gt.f32.partialorder %v1921, 0.0
      %vm2050 = vcmp.gt.f32.partialorder %v1922, 0.0
      %vm2051 = vcmp.gt.f32.partialorder %v1923, 0.0
      %vm2052 = vcmp.gt.f32.partialorder %v1924, 0.0
      %vm2053 = vcmp.gt.f32.partialorder %v1925, 0.0
      %vm2054 = vcmp.gt.f32.partialorder %v1926, 0.0
      %vm2055 = vcmp.gt.f32.partialorder %v1927, 0.0
      %vm2056 = vcmp.gt.f32.partialorder %v1928, 0.0
      %vm2057 = vcmp.gt.f32.partialorder %v1929, 0.0
      %vm2058 = vcmp.gt.f32.partialorder %v1930, 0.0
      %vm2059 = vcmp.gt.f32.partialorder %v1931, 0.0
      %vm2060 = vcmp.gt.f32.partialorder %v1932, 0.0
      %vm2061 = vcmp.gt.f32.partialorder %v1933, 0.0
      %vm2062 = vcmp.gt.f32.partialorder %v1934, 0.0
      %vm2063 = vcmp.gt.f32.partialorder %v1935, 0.0
      %vm2064 = vcmp.gt.f32.partialorder %v1936, 0.0
      %vm2065 = vcmp.gt.f32.partialorder %v1937, 0.0
      %vm2066 = vcmp.gt.f32.partialorder %v1938, 0.0
      %vm2067 = vcmp.gt.f32.partialorder %v1939, 0.0
      %vm2068 = vcmp.gt.f32.partialorder %v1940, 0.0
      %vm2069 = vcmp.gt.f32.partialorder %v1941, 0.0
      %vm2070 = vcmp.gt.f32.partialorder %v1942, 0.0
      %vm2071 = vcmp.gt.f32.partialorder %v1943, 0.0
      %vm2072 = vcmp.gt.f32.partialorder %v1944, 0.0
      %vm2073 = vcmp.gt.f32.partialorder %v1945, 0.0
      %vm2074 = vcmp.gt.f32.partialorder %v1946, 0.0
      %vm2075 = vcmp.gt.f32.partialorder %v1947, 0.0
      %vm2076 = vcmp.gt.f32.partialorder %v1948, 0.0
      %vm2077 = vcmp.gt.f32.partialorder %v1949, 0.0
      %vm2078 = vcmp.gt.f32.partialorder %v1950, 0.0
      %vm2079 = vcmp.gt.f32.partialorder %v1951, 0.0
      %vm2080 = vcmp.gt.f32.partialorder %v1952, 0.0
      %vm2081 = vcmp.gt.f32.partialorder %v1953, 0.0
      %vm2082 = vcmp.gt.f32.partialorder %v1954, 0.0
      %vm2083 = vcmp.gt.f32.partialorder %v1955, 0.0
      %vm2084 = vcmp.gt.f32.partialorder %v1956, 0.0
      %vm2085 = vcmp.gt.f32.partialorder %v1957, 0.0
      %vm2086 = vcmp.gt.f32.partialorder %v1958, 0.0
      %vm2087 = vcmp.gt.f32.partialorder %v1959, 0.0
      %vm2088 = vcmp.gt.f32.partialorder %v1960, 0.0
      %vm2089 = vcmp.gt.f32.partialorder %v1961, 0.0
      %vm2090 = vcmp.gt.f32.partialorder %v1962, 0.0
      %vm2091 = vcmp.gt.f32.partialorder %v1963, 0.0
      %vm2092 = vcmp.gt.f32.partialorder %v1964, 0.0
      %vm2093 = vcmp.gt.f32.partialorder %v1965, 0.0
      %vm2094 = vcmp.gt.f32.partialorder %v1966, 0.0
      %vm2095 = vcmp.gt.f32.partialorder %v1967, 0.0
      %vm2096 = vcmp.gt.f32.partialorder %v1968, 0.0
      %vm2097 = vcmp.gt.f32.partialorder %v1969, 0.0
      %vm2098 = vcmp.gt.f32.partialorder %v1970, 0.0
      %vm2099 = vcmp.gt.f32.partialorder %v1971, 0.0
      %vm2100 = vcmp.gt.f32.partialorder %v1972, 0.0
      %vm2101 = vcmp.gt.f32.partialorder %v1973, 0.0
      %vm2102 = vcmp.gt.f32.partialorder %v1974, 0.0
      %vm2103 = vcmp.gt.f32.partialorder %v1975, 0.0
      %vm2104 = vcmp.gt.f32.partialorder %v1976, 0.0
      %vm2105 = vcmp.gt.f32.partialorder %v1977, 0.0
      %vm2106 = vcmp.gt.f32.partialorder %v1978, 0.0
      %vm2107 = vcmp.gt.f32.partialorder %v1979, 0.0
      %vm2108 = vcmp.gt.f32.partialorder %v1980, 0.0
      %vm2109 = vcmp.gt.f32.partialorder %v1981, 0.0
      %vm2110 = vcmp.gt.f32.partialorder %v1982, 0.0
      %vm2111 = vcmp.gt.f32.partialorder %v1983, 0.0
      %vm2112 = vcmp.gt.f32.partialorder %v1984, 0.0
      %vm2113 = vcmp.gt.f32.partialorder %v1985, 0.0
      %vm2114 = vcmp.gt.f32.partialorder %v1986, 0.0
      %vm2115 = vcmp.gt.f32.partialorder %v1987, 0.0
      %vm2116 = vcmp.gt.f32.partialorder %v1988, 0.0
      %vm2117 = vcmp.gt.f32.partialorder %v1989, 0.0
      %vm2118 = vcmp.gt.f32.partialorder %v1990, 0.0
      %vm2119 = vcmp.gt.f32.partialorder %v1991, 0.0
      %vm2120 = vcmp.gt.f32.partialorder %v1992, 0.0
      %vm2121 = vcmp.gt.f32.partialorder %v1993, 0.0
      %vm2122 = vcmp.gt.f32.partialorder %v1994, 0.0
      %vm2123 = vcmp.gt.f32.partialorder %v1995, 0.0
      %vm2124 = vcmp.gt.f32.partialorder %v1996, 0.0
      %vm2125 = vcmp.gt.f32.partialorder %v1997, 0.0
      %vm2126 = vcmp.gt.f32.partialorder %v1998, 0.0
      %vm2127 = vcmp.gt.f32.partialorder %v1999, 0.0
      %vm2128 = vcmp.gt.f32.partialorder %v2000, 0.0
      %vm2129 = vcmp.gt.f32.partialorder %v2001, 0.0
      %vm2130 = vcmp.gt.f32.partialorder %v2002, 0.0
      %vm2131 = vcmp.gt.f32.partialorder %v2003, 0.0
      %vm2132 = vcmp.gt.f32.partialorder %v2004, 0.0
      %vm2133 = vcmp.gt.f32.partialorder %v2005, 0.0
      %vm2134 = vcmp.gt.f32.partialorder %v2006, 0.0
      %vm2135 = vcmp.gt.f32.partialorder %v2007, 0.0
      %vm2136 = vcmp.gt.f32.partialorder %v2008, 0.0
      %vm2137 = vcmp.gt.f32.partialorder %v2009, 0.0
      %vm2138 = vcmp.gt.f32.partialorder %v2010, 0.0
      %vm2139 = vcmp.gt.f32.partialorder %v2011, 0.0
      %vm2140 = vcmp.gt.f32.partialorder %v2012, 0.0
      %vm2141 = vcmp.gt.f32.partialorder %v2013, 0.0
      %vm2142 = vcmp.gt.f32.partialorder %v2014, 0.0
      %v2143 = vmul.f32 %v1887, 0.2
      %v2144 = vmul.f32 %v1888, 0.2
      %v2145 = vmul.f32 %v1889, 0.2
      %v2146 = vmul.f32 %v1890, 0.2
      %v2147 = vmul.f32 %v1891, 0.2
      %v2148 = vmul.f32 %v1892, 0.2
      %v2149 = vmul.f32 %v1893, 0.2
      %v2150 = vmul.f32 %v1894, 0.2
      %v2151 = vmul.f32 %v1895, 0.2
      %v2152 = vmul.f32 %v1896, 0.2
      %v2153 = vmul.f32 %v1897, 0.2
      %v2154 = vmul.f32 %v1898, 0.2
      %v2155 = vmul.f32 %v1899, 0.2
      %v2156 = vmul.f32 %v1900, 0.2
      %v2157 = vmul.f32 %v1901, 0.2
      %v2158 = vmul.f32 %v1902, 0.2
      %v2159 = vmul.f32 %v1903, 0.2
      %v2160 = vmul.f32 %v1904, 0.2
      %v2161 = vmul.f32 %v1905, 0.2
      %v2162 = vmul.f32 %v1906, 0.2
      %v2163 = vmul.f32 %v1907, 0.2
      %v2164 = vmul.f32 %v1908, 0.2
      %v2165 = vmul.f32 %v1909, 0.2
      %v2166 = vmul.f32 %v1910, 0.2
      %v2167 = vmul.f32 %v1911, 0.2
      %v2168 = vmul.f32 %v1912, 0.2
      %v2169 = vmul.f32 %v1913, 0.2
      %v2170 = vmul.f32 %v1914, 0.2
      %v2171 = vmul.f32 %v1915, 0.2
      %v2172 = vmul.f32 %v1916, 0.2
      %v2173 = vmul.f32 %v1917, 0.2
      %v2174 = vmul.f32 %v1918, 0.2
      %v2175 = vmul.f32 %v1919, 0.2
      %v2176 = vmul.f32 %v1920, 0.2
      %v2177 = vmul.f32 %v1921, 0.2
      %v2178 = vmul.f32 %v1922, 0.2
      %v2179 = vmul.f32 %v1923, 0.2
      %v2180 = vmul.f32 %v1924, 0.2
      %v2181 = vmul.f32 %v1925, 0.2
      %v2182 = vmul.f32 %v1926, 0.2
      %v2183 = vmul.f32 %v1927, 0.2
      %v2184 = vmul.f32 %v1928, 0.2
      %v2185 = vmul.f32 %v1929, 0.2
      %v2186 = vmul.f32 %v1930, 0.2
      %v2187 = vmul.f32 %v1931, 0.2
      %v2188 = vmul.f32 %v1932, 0.2
      %v2189 = vmul.f32 %v1933, 0.2
      %v2190 = vmul.f32 %v1934, 0.2
      %v2191 = vmul.f32 %v1935, 0.2
      %v2192 = vmul.f32 %v1936, 0.2
      %v2193 = vmul.f32 %v1937, 0.2
      %v2194 = vmul.f32 %v1938, 0.2
      %v2195 = vmul.f32 %v1939, 0.2
      %v2196 = vmul.f32 %v1940, 0.2
      %v2197 = vmul.f32 %v1941, 0.2
      %v2198 = vmul.f32 %v1942, 0.2
      %v2199 = vmul.f32 %v1943, 0.2
      %v2200 = vmul.f32 %v1944, 0.2
      %v2201 = vmul.f32 %v1945, 0.2
      %v2202 = vmul.f32 %v1946, 0.2
      %v2203 = vmul.f32 %v1947, 0.2
      %v2204 = vmul.f32 %v1948, 0.2
      %v2205 = vmul.f32 %v1949, 0.2
      %v2206 = vmul.f32 %v1950, 0.2
      %v2207 = vmul.f32 %v1951, 0.2
      %v2208 = vmul.f32 %v1952, 0.2
      %v2209 = vmul.f32 %v1953, 0.2
      %v2210 = vmul.f32 %v1954, 0.2
      %v2211 = vmul.f32 %v1955, 0.2
      %v2212 = vmul.f32 %v1956, 0.2
      %v2213 = vmul.f32 %v1957, 0.2
      %v2214 = vmul.f32 %v1958, 0.2
      %v2215 = vmul.f32 %v1959, 0.2
      %v2216 = vmul.f32 %v1960, 0.2
      %v2217 = vmul.f32 %v1961, 0.2
      %v2218 = vmul.f32 %v1962, 0.2
      %v2219 = vmul.f32 %v1963, 0.2
      %v2220 = vmul.f32 %v1964, 0.2
      %v2221 = vmul.f32 %v1965, 0.2
      %v2222 = vmul.f32 %v1966, 0.2
      %v2223 = vmul.f32 %v1967, 0.2
      %v2224 = vmul.f32 %v1968, 0.2
      %v2225 = vmul.f32 %v1969, 0.2
      %v2226 = vmul.f32 %v1970, 0.2
      %v2227 = vmul.f32 %v1971, 0.2
      %v2228 = vmul.f32 %v1972, 0.2
      %v2229 = vmul.f32 %v1973, 0.2
      %v2230 = vmul.f32 %v1974, 0.2
      %v2231 = vmul.f32 %v1975, 0.2
      %v2232 = vmul.f32 %v1976, 0.2
      %v2233 = vmul.f32 %v1977, 0.2
      %v2234 = vmul.f32 %v1978, 0.2
      %v2235 = vmul.f32 %v1979, 0.2
      %v2236 = vmul.f32 %v1980, 0.2
      %v2237 = vmul.f32 %v1981, 0.2
      %v2238 = vmul.f32 %v1982, 0.2
      %v2239 = vmul.f32 %v1983, 0.2
      %v2240 = vmul.f32 %v1984, 0.2
      %v2241 = vmul.f32 %v1985, 0.2
      %v2242 = vmul.f32 %v1986, 0.2
      %v2243 = vmul.f32 %v1987, 0.2
      %v2244 = vmul.f32 %v1988, 0.2
      %v2245 = vmul.f32 %v1989, 0.2
      %v2246 = vmul.f32 %v1990, 0.2
      %v2247 = vmul.f32 %v1991, 0.2
      %v2248 = vmul.f32 %v1992, 0.2
      %v2249 = vmul.f32 %v1993, 0.2
      %v2250 = vmul.f32 %v1994, 0.2
      %v2251 = vmul.f32 %v1995, 0.2
      %v2252 = vmul.f32 %v1996, 0.2
      %v2253 = vmul.f32 %v1997, 0.2
      %v2254 = vmul.f32 %v1998, 0.2
      %v2255 = vmul.f32 %v1999, 0.2
      %v2256 = vmul.f32 %v2000, 0.2
      %v2257 = vmul.f32 %v2001, 0.2
      %v2258 = vmul.f32 %v2002, 0.2
      %v2259 = vmul.f32 %v2003, 0.2
      %v2260 = vmul.f32 %v2004, 0.2
      %v2261 = vmul.f32 %v2005, 0.2
      %v2262 = vmul.f32 %v2006, 0.2
      %v2263 = vmul.f32 %v2007, 0.2
      %v2264 = vmul.f32 %v2008, 0.2
      %v2265 = vmul.f32 %v2009, 0.2
      %v2266 = vmul.f32 %v2010, 0.2
      %v2267 = vmul.f32 %v2011, 0.2
      %v2268 = vmul.f32 %v2012, 0.2
      %v2269 = vmul.f32 %v2013, 0.2
      %v2270 = vmul.f32 %v2014, 0.2
      %v2271 = vsel %vm2015, %v1887, %v2143
      %v2272 = vsel %vm2016, %v1888, %v2144
      %v2273 = vsel %vm2017, %v1889, %v2145
      %v2274 = vsel %vm2018, %v1890, %v2146
      %v2275 = vsel %vm2019, %v1891, %v2147
      %v2276 = vsel %vm2020, %v1892, %v2148
      %v2277 = vsel %vm2021, %v1893, %v2149
      %v2278 = vsel %vm2022, %v1894, %v2150
      %v2279 = vsel %vm2023, %v1895, %v2151
      %v2280 = vsel %vm2024, %v1896, %v2152
      %v2281 = vsel %vm2025, %v1897, %v2153
      %v2282 = vsel %vm2026, %v1898, %v2154
      %v2283 = vsel %vm2027, %v1899, %v2155
      %v2284 = vsel %vm2028, %v1900, %v2156
      %v2285 = vsel %vm2029, %v1901, %v2157
      %v2286 = vsel %vm2030, %v1902, %v2158
      %v2287 = vsel %vm2031, %v1903, %v2159
      %v2288 = vsel %vm2032, %v1904, %v2160
      %v2289 = vsel %vm2033, %v1905, %v2161
      %v2290 = vsel %vm2034, %v1906, %v2162
      %v2291 = vsel %vm2035, %v1907, %v2163
      %v2292 = vsel %vm2036, %v1908, %v2164
      %v2293 = vsel %vm2037, %v1909, %v2165
      %v2294 = vsel %vm2038, %v1910, %v2166
      %v2295 = vsel %vm2039, %v1911, %v2167
      %v2296 = vsel %vm2040, %v1912, %v2168
      %v2297 = vsel %vm2041, %v1913, %v2169
      %v2298 = vsel %vm2042, %v1914, %v2170
      %v2299 = vsel %vm2043, %v1915, %v2171
      %v2300 = vsel %vm2044, %v1916, %v2172
      %v2301 = vsel %vm2045, %v1917, %v2173
      %v2302 = vsel %vm2046, %v1918, %v2174
      %v2303 = vsel %vm2047, %v1919, %v2175
      %v2304 = vsel %vm2048, %v1920, %v2176
      %v2305 = vsel %vm2049, %v1921, %v2177
      %v2306 = vsel %vm2050, %v1922, %v2178
      %v2307 = vsel %vm2051, %v1923, %v2179
      %v2308 = vsel %vm2052, %v1924, %v2180
      %v2309 = vsel %vm2053, %v1925, %v2181
      %v2310 = vsel %vm2054, %v1926, %v2182
      %v2311 = vsel %vm2055, %v1927, %v2183
      %v2312 = vsel %vm2056, %v1928, %v2184
      %v2313 = vsel %vm2057, %v1929, %v2185
      %v2314 = vsel %vm2058, %v1930, %v2186
      %v2315 = vsel %vm2059, %v1931, %v2187
      %v2316 = vsel %vm2060, %v1932, %v2188
      %v2317 = vsel %vm2061, %v1933, %v2189
      %v2318 = vsel %vm2062, %v1934, %v2190
      %v2319 = vsel %vm2063, %v1935, %v2191
      %v2320 = vsel %vm2064, %v1936, %v2192
      %v2321 = vsel %vm2065, %v1937, %v2193
      %v2322 = vsel %vm2066, %v1938, %v2194
      %v2323 = vsel %vm2067, %v1939, %v2195
      %v2324 = vsel %vm2068, %v1940, %v2196
      %v2325 = vsel %vm2069, %v1941, %v2197
      %v2326 = vsel %vm2070, %v1942, %v2198
      %v2327 = vsel %vm2071, %v1943, %v2199
      %v2328 = vsel %vm2072, %v1944, %v2200
      %v2329 = vsel %vm2073, %v1945, %v2201
      %v2330 = vsel %vm2074, %v1946, %v2202
      %v2331 = vsel %vm2075, %v1947, %v2203
      %v2332 = vsel %vm2076, %v1948, %v2204
      %v2333 = vsel %vm2077, %v1949, %v2205
      %v2334 = vsel %vm2078, %v1950, %v2206
      %v2335 = vsel %vm2079, %v1951, %v2207
      %v2336 = vsel %vm2080, %v1952, %v2208
      %v2337 = vsel %vm2081, %v1953, %v2209
      %v2338 = vsel %vm2082, %v1954, %v2210
      %v2339 = vsel %vm2083, %v1955, %v2211
      %v2340 = vsel %vm2084, %v1956, %v2212
      %v2341 = vsel %vm2085, %v1957, %v2213
      %v2342 = vsel %vm2086, %v1958, %v2214
      %v2343 = vsel %vm2087, %v1959, %v2215
      %v2344 = vsel %vm2088, %v1960, %v2216
      %v2345 = vsel %vm2089, %v1961, %v2217
      %v2346 = vsel %vm2090, %v1962, %v2218
      %v2347 = vsel %vm2091, %v1963, %v2219
      %v2348 = vsel %vm2092, %v1964, %v2220
      %v2349 = vsel %vm2093, %v1965, %v2221
      %v2350 = vsel %vm2094, %v1966, %v2222
      %v2351 = vsel %vm2095, %v1967, %v2223
      %v2352 = vsel %vm2096, %v1968, %v2224
      %v2353 = vsel %vm2097, %v1969, %v2225
      %v2354 = vsel %vm2098, %v1970, %v2226
      %v2355 = vsel %vm2099, %v1971, %v2227
      %v2356 = vsel %vm2100, %v1972, %v2228
      %v2357 = vsel %vm2101, %v1973, %v2229
      %v2358 = vsel %vm2102, %v1974, %v2230
      %v2359 = vsel %vm2103, %v1975, %v2231
      %v2360 = vsel %vm2104, %v1976, %v2232
      %v2361 = vsel %vm2105, %v1977, %v2233
      %v2362 = vsel %vm2106, %v1978, %v2234
      %v2363 = vsel %vm2107, %v1979, %v2235
      %v2364 = vsel %vm2108, %v1980, %v2236
      %v2365 = vsel %vm2109, %v1981, %v2237
      %v2366 = vsel %vm2110, %v1982, %v2238
      %v2367 = vsel %vm2111, %v1983, %v2239
      %v2368 = vsel %vm2112, %v1984, %v2240
      %v2369 = vsel %vm2113, %v1985, %v2241
      %v2370 = vsel %vm2114, %v1986, %v2242
      %v2371 = vsel %vm2115, %v1987, %v2243
      %v2372 = vsel %vm2116, %v1988, %v2244
      %v2373 = vsel %vm2117, %v1989, %v2245
      %v2374 = vsel %vm2118, %v1990, %v2246
      %v2375 = vsel %vm2119, %v1991, %v2247
      %v2376 = vsel %vm2120, %v1992, %v2248
      %v2377 = vsel %vm2121, %v1993, %v2249
      %v2378 = vsel %vm2122, %v1994, %v2250
      %v2379 = vsel %vm2123, %v1995, %v2251
      %v2380 = vsel %vm2124, %v1996, %v2252
      %v2381 = vsel %vm2125, %v1997, %v2253
      %v2382 = vsel %vm2126, %v1998, %v2254
      %v2383 = vsel %vm2127, %v1999, %v2255
      %v2384 = vsel %vm2128, %v2000, %v2256
      %v2385 = vsel %vm2129, %v2001, %v2257
      %v2386 = vsel %vm2130, %v2002, %v2258
      %v2387 = vsel %vm2131, %v2003, %v2259
      %v2388 = vsel %vm2132, %v2004, %v2260
      %v2389 = vsel %vm2133, %v2005, %v2261
      %v2390 = vsel %vm2134, %v2006, %v2262
      %v2391 = vsel %vm2135, %v2007, %v2263
      %v2392 = vsel %vm2136, %v2008, %v2264
      %v2393 = vsel %vm2137, %v2009, %v2265
      %v2394 = vsel %vm2138, %v2010, %v2266
      %v2395 = vsel %vm2139, %v2011, %v2267
      %v2396 = vsel %vm2140, %v2012, %v2268
      %v2397 = vsel %vm2141, %v2013, %v2269
      %v2398 = vsel %vm2142, %v2014, %v2270
      %v2399 = vpack.c.bf16 %v2272, %v2271
      %v2400 = vpack.c.bf16 %v2274, %v2273
      %v2401 = vpack.c.bf16 %v2276, %v2275
      %v2402 = vpack.c.bf16 %v2278, %v2277
      %v2403 = vpack.c.bf16 %v2280, %v2279
      %v2404 = vpack.c.bf16 %v2282, %v2281
      %v2405 = vpack.c.bf16 %v2284, %v2283
      %v2406 = vpack.c.bf16 %v2286, %v2285
      %v2407 = vpack.c.bf16 %v2288, %v2287
      %v2408 = vpack.c.bf16 %v2290, %v2289
      %v2409 = vpack.c.bf16 %v2292, %v2291
      %v2410 = vpack.c.bf16 %v2294, %v2293
      %v2411 = vpack.c.bf16 %v2296, %v2295
      %v2412 = vpack.c.bf16 %v2298, %v2297
      %v2413 = vpack.c.bf16 %v2300, %v2299
      %v2414 = vpack.c.bf16 %v2302, %v2301
      %v2415 = vpack.c.bf16 %v2304, %v2303
      %v2416 = vpack.c.bf16 %v2306, %v2305
      %v2417 = vpack.c.bf16 %v2308, %v2307
      %v2418 = vpack.c.bf16 %v2310, %v2309
      %v2419 = vpack.c.bf16 %v2312, %v2311
      %v2420 = vpack.c.bf16 %v2314, %v2313
      %v2421 = vpack.c.bf16 %v2316, %v2315
      %v2422 = vpack.c.bf16 %v2318, %v2317
      %v2423 = vpack.c.bf16 %v2320, %v2319
      %v2424 = vpack.c.bf16 %v2322, %v2321
      %v2425 = vpack.c.bf16 %v2324, %v2323
      %v2426 = vpack.c.bf16 %v2326, %v2325
      %v2427 = vpack.c.bf16 %v2328, %v2327
      %v2428 = vpack.c.bf16 %v2330, %v2329
      %v2429 = vpack.c.bf16 %v2332, %v2331
      %v2430 = vpack.c.bf16 %v2334, %v2333
      %v2431 = vpack.c.bf16 %v2336, %v2335
      %v2432 = vpack.c.bf16 %v2338, %v2337
      %v2433 = vpack.c.bf16 %v2340, %v2339
      %v2434 = vpack.c.bf16 %v2342, %v2341
      %v2435 = vpack.c.bf16 %v2344, %v2343
      %v2436 = vpack.c.bf16 %v2346, %v2345
      %v2437 = vpack.c.bf16 %v2348, %v2347
      %v2438 = vpack.c.bf16 %v2350, %v2349
      %v2439 = vpack.c.bf16 %v2352, %v2351
      %v2440 = vpack.c.bf16 %v2354, %v2353
      %v2441 = vpack.c.bf16 %v2356, %v2355
      %v2442 = vpack.c.bf16 %v2358, %v2357
      %v2443 = vpack.c.bf16 %v2360, %v2359
      %v2444 = vpack.c.bf16 %v2362, %v2361
      %v2445 = vpack.c.bf16 %v2364, %v2363
      %v2446 = vpack.c.bf16 %v2366, %v2365
      %v2447 = vpack.c.bf16 %v2368, %v2367
      %v2448 = vpack.c.bf16 %v2370, %v2369
      %v2449 = vpack.c.bf16 %v2372, %v2371
      %v2450 = vpack.c.bf16 %v2374, %v2373
      %v2451 = vpack.c.bf16 %v2376, %v2375
      %v2452 = vpack.c.bf16 %v2378, %v2377
      %v2453 = vpack.c.bf16 %v2380, %v2379
      %v2454 = vpack.c.bf16 %v2382, %v2381
      %v2455 = vpack.c.bf16 %v2384, %v2383
      %v2456 = vpack.c.bf16 %v2386, %v2385
      %v2457 = vpack.c.bf16 %v2388, %v2387
      %v2458 = vpack.c.bf16 %v2390, %v2389
      %v2459 = vpack.c.bf16 %v2392, %v2391
      %v2460 = vpack.c.bf16 %v2394, %v2393
      %v2461 = vpack.c.bf16 %v2396, %v2395
      %v2462 = vpack.c.bf16 %v2398, %v2397
      %v2527 = vunpack.c.l.b16 %v2399
      %v2528 = vunpack.c.h.b16 %v2399
      %v2529 = vunpack.c.l.b16 %v2400
      %v2530 = vunpack.c.h.b16 %v2400
      %v2531 = vunpack.c.l.b16 %v2401
      %v2532 = vunpack.c.h.b16 %v2401
      %v2533 = vunpack.c.l.b16 %v2402
      %v2534 = vunpack.c.h.b16 %v2402
      %v2535 = vunpack.c.l.b16 %v2403
      %v2536 = vunpack.c.h.b16 %v2403
      %v2537 = vunpack.c.l.b16 %v2404
      %v2538 = vunpack.c.h.b16 %v2404
      %v2539 = vunpack.c.l.b16 %v2405
      %v2540 = vunpack.c.h.b16 %v2405
      %v2541 = vunpack.c.l.b16 %v2406
      %v2542 = vunpack.c.h.b16 %v2406
      %v2543 = vunpack.c.l.b16 %v2407
      %v2544 = vunpack.c.h.b16 %v2407
      %v2545 = vunpack.c.l.b16 %v2408
      %v2546 = vunpack.c.h.b16 %v2408
      %v2547 = vunpack.c.l.b16 %v2409
      %v2548 = vunpack.c.h.b16 %v2409
      %v2549 = vunpack.c.l.b16 %v2410
      %v2550 = vunpack.c.h.b16 %v2410
      %v2551 = vunpack.c.l.b16 %v2411
      %v2552 = vunpack.c.h.b16 %v2411
      %v2553 = vunpack.c.l.b16 %v2412
      %v2554 = vunpack.c.h.b16 %v2412
      %v2555 = vunpack.c.l.b16 %v2413
      %v2556 = vunpack.c.h.b16 %v2413
      %v2557 = vunpack.c.l.b16 %v2414
      %v2558 = vunpack.c.h.b16 %v2414
      %v2559 = vunpack.c.l.b16 %v2415
      %v2560 = vunpack.c.h.b16 %v2415
      %v2561 = vunpack.c.l.b16 %v2416
      %v2562 = vunpack.c.h.b16 %v2416
      %v2563 = vunpack.c.l.b16 %v2417
      %v2564 = vunpack.c.h.b16 %v2417
      %v2565 = vunpack.c.l.b16 %v2418
      %v2566 = vunpack.c.h.b16 %v2418
      %v2567 = vunpack.c.l.b16 %v2419
      %v2568 = vunpack.c.h.b16 %v2419
      %v2569 = vunpack.c.l.b16 %v2420
      %v2570 = vunpack.c.h.b16 %v2420
      %v2571 = vunpack.c.l.b16 %v2421
      %v2572 = vunpack.c.h.b16 %v2421
      %v2573 = vunpack.c.l.b16 %v2422
      %v2574 = vunpack.c.h.b16 %v2422
      %v2575 = vunpack.c.l.b16 %v2423
      %v2576 = vunpack.c.h.b16 %v2423
      %v2577 = vunpack.c.l.b16 %v2424
      %v2578 = vunpack.c.h.b16 %v2424
      %v2579 = vunpack.c.l.b16 %v2425
      %v2580 = vunpack.c.h.b16 %v2425
      %v2581 = vunpack.c.l.b16 %v2426
      %v2582 = vunpack.c.h.b16 %v2426
      %v2583 = vunpack.c.l.b16 %v2427
      %v2584 = vunpack.c.h.b16 %v2427
      %v2585 = vunpack.c.l.b16 %v2428
      %v2586 = vunpack.c.h.b16 %v2428
      %v2587 = vunpack.c.l.b16 %v2429
      %v2588 = vunpack.c.h.b16 %v2429
      %v2589 = vunpack.c.l.b16 %v2430
      %v2590 = vunpack.c.h.b16 %v2430
      %v2591 = vunpack.c.l.b16 %v2431
      %v2592 = vunpack.c.h.b16 %v2431
      %v2593 = vunpack.c.l.b16 %v2432
      %v2594 = vunpack.c.h.b16 %v2432
      %v2595 = vunpack.c.l.b16 %v2433
      %v2596 = vunpack.c.h.b16 %v2433
      %v2597 = vunpack.c.l.b16 %v2434
      %v2598 = vunpack.c.h.b16 %v2434
      %v2599 = vunpack.c.l.b16 %v2435
      %v2600 = vunpack.c.h.b16 %v2435
      %v2601 = vunpack.c.l.b16 %v2436
      %v2602 = vunpack.c.h.b16 %v2436
      %v2603 = vunpack.c.l.b16 %v2437
      %v2604 = vunpack.c.h.b16 %v2437
      %v2605 = vunpack.c.l.b16 %v2438
      %v2606 = vunpack.c.h.b16 %v2438
      %v2607 = vunpack.c.l.b16 %v2439
      %v2608 = vunpack.c.h.b16 %v2439
      %v2609 = vunpack.c.l.b16 %v2440
      %v2610 = vunpack.c.h.b16 %v2440
      %v2611 = vunpack.c.l.b16 %v2441
      %v2612 = vunpack.c.h.b16 %v2441
      %v2613 = vunpack.c.l.b16 %v2442
      %v2614 = vunpack.c.h.b16 %v2442
      %v2615 = vunpack.c.l.b16 %v2443
      %v2616 = vunpack.c.h.b16 %v2443
      %v2617 = vunpack.c.l.b16 %v2444
      %v2618 = vunpack.c.h.b16 %v2444
      %v2619 = vunpack.c.l.b16 %v2445
      %v2620 = vunpack.c.h.b16 %v2445
      %v2621 = vunpack.c.l.b16 %v2446
      %v2622 = vunpack.c.h.b16 %v2446
      %v2623 = vunpack.c.l.b16 %v2447
      %v2624 = vunpack.c.h.b16 %v2447
      %v2625 = vunpack.c.l.b16 %v2448
      %v2626 = vunpack.c.h.b16 %v2448
      %v2627 = vunpack.c.l.b16 %v2449
      %v2628 = vunpack.c.h.b16 %v2449
      %v2629 = vunpack.c.l.b16 %v2450
      %v2630 = vunpack.c.h.b16 %v2450
      %v2631 = vunpack.c.l.b16 %v2451
      %v2632 = vunpack.c.h.b16 %v2451
      %v2633 = vunpack.c.l.b16 %v2452
      %v2634 = vunpack.c.h.b16 %v2452
      %v2635 = vunpack.c.l.b16 %v2453
      %v2636 = vunpack.c.h.b16 %v2453
      %v2637 = vunpack.c.l.b16 %v2454
      %v2638 = vunpack.c.h.b16 %v2454
      %v2639 = vunpack.c.l.b16 %v2455
      %v2640 = vunpack.c.h.b16 %v2455
      %v2641 = vunpack.c.l.b16 %v2456
      %v2642 = vunpack.c.h.b16 %v2456
      %v2643 = vunpack.c.l.b16 %v2457
      %v2644 = vunpack.c.h.b16 %v2457
      %v2645 = vunpack.c.l.b16 %v2458
      %v2646 = vunpack.c.h.b16 %v2458
      %v2647 = vunpack.c.l.b16 %v2459
      %v2648 = vunpack.c.h.b16 %v2459
      %v2649 = vunpack.c.l.b16 %v2460
      %v2650 = vunpack.c.h.b16 %v2460
      %v2651 = vunpack.c.l.b16 %v2461
      %v2652 = vunpack.c.h.b16 %v2461
      %v2653 = vunpack.c.l.b16 %v2462
      %v2654 = vunpack.c.h.b16 %v2462
      %v2655 = vpack.c.b16 %v2527, %v2527
      %v2656 = vpack.c.b16 %v2528, %v2528
      %v2657 = vpack.c.b16 %v2529, %v2529
      %v2658 = vpack.c.b16 %v2530, %v2530
      %v2659 = vpack.c.b16 %v2531, %v2531
      %v2660 = vpack.c.b16 %v2532, %v2532
      %v2661 = vpack.c.b16 %v2533, %v2533
      %v2662 = vpack.c.b16 %v2534, %v2534
      %v2663 = vpack.c.b16 %v2535, %v2535
      %v2664 = vpack.c.b16 %v2536, %v2536
      %v2665 = vpack.c.b16 %v2537, %v2537
      %v2666 = vpack.c.b16 %v2538, %v2538
      %v2667 = vpack.c.b16 %v2539, %v2539
      %v2668 = vpack.c.b16 %v2540, %v2540
      %v2669 = vpack.c.b16 %v2541, %v2541
      %v2670 = vpack.c.b16 %v2542, %v2542
      %v2671 = vpack.c.b16 %v2543, %v2543
      %v2672 = vpack.c.b16 %v2544, %v2544
      %v2673 = vpack.c.b16 %v2545, %v2545
      %v2674 = vpack.c.b16 %v2546, %v2546
      %v2675 = vpack.c.b16 %v2547, %v2547
      %v2676 = vpack.c.b16 %v2548, %v2548
      %v2677 = vpack.c.b16 %v2549, %v2549
      %v2678 = vpack.c.b16 %v2550, %v2550
      %v2679 = vpack.c.b16 %v2551, %v2551
      %v2680 = vpack.c.b16 %v2552, %v2552
      %v2681 = vpack.c.b16 %v2553, %v2553
      %v2682 = vpack.c.b16 %v2554, %v2554
      %v2683 = vpack.c.b16 %v2555, %v2555
      %v2684 = vpack.c.b16 %v2556, %v2556
      %v2685 = vpack.c.b16 %v2557, %v2557
      %v2686 = vpack.c.b16 %v2558, %v2558
      %v2687 = vpack.c.b16 %v2559, %v2559
      %v2688 = vpack.c.b16 %v2560, %v2560
      %v2689 = vpack.c.b16 %v2561, %v2561
      %v2690 = vpack.c.b16 %v2562, %v2562
      %v2691 = vpack.c.b16 %v2563, %v2563
      %v2692 = vpack.c.b16 %v2564, %v2564
      %v2693 = vpack.c.b16 %v2565, %v2565
      %v2694 = vpack.c.b16 %v2566, %v2566
      %v2695 = vpack.c.b16 %v2567, %v2567
      %v2696 = vpack.c.b16 %v2568, %v2568
      %v2697 = vpack.c.b16 %v2569, %v2569
      %v2698 = vpack.c.b16 %v2570, %v2570
      %v2699 = vpack.c.b16 %v2571, %v2571
      %v2700 = vpack.c.b16 %v2572, %v2572
      %v2701 = vpack.c.b16 %v2573, %v2573
      %v2702 = vpack.c.b16 %v2574, %v2574
      %v2703 = vpack.c.b16 %v2575, %v2575
      %v2704 = vpack.c.b16 %v2576, %v2576
      %v2705 = vpack.c.b16 %v2577, %v2577
      %v2706 = vpack.c.b16 %v2578, %v2578
      %v2707 = vpack.c.b16 %v2579, %v2579
      %v2708 = vpack.c.b16 %v2580, %v2580
      %v2709 = vpack.c.b16 %v2581, %v2581
      %v2710 = vpack.c.b16 %v2582, %v2582
      %v2711 = vpack.c.b16 %v2583, %v2583
      %v2712 = vpack.c.b16 %v2584, %v2584
      %v2713 = vpack.c.b16 %v2585, %v2585
      %v2714 = vpack.c.b16 %v2586, %v2586
      %v2715 = vpack.c.b16 %v2587, %v2587
      %v2716 = vpack.c.b16 %v2588, %v2588
      %v2717 = vpack.c.b16 %v2589, %v2589
      %v2718 = vpack.c.b16 %v2590, %v2590
      %v2719 = vpack.c.b16 %v2591, %v2591
      %v2720 = vpack.c.b16 %v2592, %v2592
      %v2721 = vpack.c.b16 %v2593, %v2593
      %v2722 = vpack.c.b16 %v2594, %v2594
      %v2723 = vpack.c.b16 %v2595, %v2595
      %v2724 = vpack.c.b16 %v2596, %v2596
      %v2725 = vpack.c.b16 %v2597, %v2597
      %v2726 = vpack.c.b16 %v2598, %v2598
      %v2727 = vpack.c.b16 %v2599, %v2599
      %v2728 = vpack.c.b16 %v2600, %v2600
      %v2729 = vpack.c.b16 %v2601, %v2601
      %v2730 = vpack.c.b16 %v2602, %v2602
      %v2731 = vpack.c.b16 %v2603, %v2603
      %v2732 = vpack.c.b16 %v2604, %v2604
      %v2733 = vpack.c.b16 %v2605, %v2605
      %v2734 = vpack.c.b16 %v2606, %v2606
      %v2735 = vpack.c.b16 %v2607, %v2607
      %v2736 = vpack.c.b16 %v2608, %v2608
      %v2737 = vpack.c.b16 %v2609, %v2609
      %v2738 = vpack.c.b16 %v2610, %v2610
      %v2739 = vpack.c.b16 %v2611, %v2611
      %v2740 = vpack.c.b16 %v2612, %v2612
      %v2741 = vpack.c.b16 %v2613, %v2613
      %v2742 = vpack.c.b16 %v2614, %v2614
      %v2743 = vpack.c.b16 %v2615, %v2615
      %v2744 = vpack.c.b16 %v2616, %v2616
      %v2745 = vpack.c.b16 %v2617, %v2617
      %v2746 = vpack.c.b16 %v2618, %v2618
      %v2747 = vpack.c.b16 %v2619, %v2619
      %v2748 = vpack.c.b16 %v2620, %v2620
      %v2749 = vpack.c.b16 %v2621, %v2621
      %v2750 = vpack.c.b16 %v2622, %v2622
      %v2751 = vpack.c.b16 %v2623, %v2623
      %v2752 = vpack.c.b16 %v2624, %v2624
      %v2753 = vpack.c.b16 %v2625, %v2625
      %v2754 = vpack.c.b16 %v2626, %v2626
      %v2755 = vpack.c.b16 %v2627, %v2627
      %v2756 = vpack.c.b16 %v2628, %v2628
      %v2757 = vpack.c.b16 %v2629, %v2629
      %v2758 = vpack.c.b16 %v2630, %v2630
      %v2759 = vpack.c.b16 %v2631, %v2631
      %v2760 = vpack.c.b16 %v2632, %v2632
      %v2761 = vpack.c.b16 %v2633, %v2633
      %v2762 = vpack.c.b16 %v2634, %v2634
      %v2763 = vpack.c.b16 %v2635, %v2635
      %v2764 = vpack.c.b16 %v2636, %v2636
      %v2765 = vpack.c.b16 %v2637, %v2637
      %v2766 = vpack.c.b16 %v2638, %v2638
      %v2767 = vpack.c.b16 %v2639, %v2639
      %v2768 = vpack.c.b16 %v2640, %v2640
      %v2769 = vpack.c.b16 %v2641, %v2641
      %v2770 = vpack.c.b16 %v2642, %v2642
      %v2771 = vpack.c.b16 %v2643, %v2643
      %v2772 = vpack.c.b16 %v2644, %v2644
      %v2773 = vpack.c.b16 %v2645, %v2645
      %v2774 = vpack.c.b16 %v2646, %v2646
      %v2775 = vpack.c.b16 %v2647, %v2647
      %v2776 = vpack.c.b16 %v2648, %v2648
      %v2777 = vpack.c.b16 %v2649, %v2649
      %v2778 = vpack.c.b16 %v2650, %v2650
      %v2779 = vpack.c.b16 %v2651, %v2651
      %v2780 = vpack.c.b16 %v2652, %v2652
      %v2781 = vpack.c.b16 %v2653, %v2653
      %v2782 = vpack.c.b16 %v2654, %v2654
      %2911 = vst [vmem:[%s145] sm:$0xf] %v2655
      %2912 = vst [vmem:[%s145 + $0x4] sm:$0xf] %v2656
      %2913 = vst [vmem:[%s145 + $0x8] sm:$0xf] %v2657
      %2914 = vst [vmem:[%s145 + $0xc] sm:$0xf] %v2658
      %2915 = vst [vmem:[%s145 + $0x10] sm:$0xf] %v2659
      %2916 = vst [vmem:[%s145 + $0x14] sm:$0xf] %v2660
      %2917 = vst [vmem:[%s145 + $0x18] sm:$0xf] %v2661
      %2918 = vst [vmem:[%s145 + $0x1c] sm:$0xf] %v2662
      %2919 = vst [vmem:[%s145 + $0x20] sm:$0xf] %v2663
      %2920 = vst [vmem:[%s145 + $0x24] sm:$0xf] %v2664
      %2921 = vst [vmem:[%s145 + $0x28] sm:$0xf] %v2665
      %2922 = vst [vmem:[%s145 + $0x2c] sm:$0xf] %v2666
      %2923 = vst [vmem:[%s145 + $0x30] sm:$0xf] %v2667
      %2924 = vst [vmem:[%s145 + $0x34] sm:$0xf] %v2668
      %2925 = vst [vmem:[%s145 + $0x38] sm:$0xf] %v2669
      %2926 = vst [vmem:[%s145 + $0x3c] sm:$0xf] %v2670
      %2927 = vst [vmem:[%s145 + $0x40] sm:$0xf] %v2671
      %2928 = vst [vmem:[%s145 + $0x44] sm:$0xf] %v2672
      %2929 = vst [vmem:[%s145 + $0x48] sm:$0xf] %v2673
      %2930 = vst [vmem:[%s145 + $0x4c] sm:$0xf] %v2674
      %2931 = vst [vmem:[%s145 + $0x50] sm:$0xf] %v2675
      %2932 = vst [vmem:[%s145 + $0x54] sm:$0xf] %v2676
      %2933 = vst [vmem:[%s145 + $0x58] sm:$0xf] %v2677
      %2934 = vst [vmem:[%s145 + $0x5c] sm:$0xf] %v2678
      %2935 = vst [vmem:[%s145 + $0x60] sm:$0xf] %v2679
      %2936 = vst [vmem:[%s145 + $0x64] sm:$0xf] %v2680
      %2937 = vst [vmem:[%s145 + $0x68] sm:$0xf] %v2681
      %2938 = vst [vmem:[%s145 + $0x6c] sm:$0xf] %v2682
      %2939 = vst [vmem:[%s145 + $0x70] sm:$0xf] %v2683
      %2940 = vst [vmem:[%s145 + $0x74] sm:$0xf] %v2684
      %2941 = vst [vmem:[%s145 + $0x78] sm:$0xf] %v2685
      %2942 = vst [vmem:[%s145 + $0x7c] sm:$0xf] %v2686
      %2943 = vst [vmem:[%s145 + $0x80] sm:$0xf] %v2687
      %2944 = vst [vmem:[%s145 + $0x84] sm:$0xf] %v2688
      %2945 = vst [vmem:[%s145 + $0x88] sm:$0xf] %v2689
      %2946 = vst [vmem:[%s145 + $0x8c] sm:$0xf] %v2690
      %2947 = vst [vmem:[%s145 + $0x90] sm:$0xf] %v2691
      %2948 = vst [vmem:[%s145 + $0x94] sm:$0xf] %v2692
      %2949 = vst [vmem:[%s145 + $0x98] sm:$0xf] %v2693
      %2950 = vst [vmem:[%s145 + $0x9c] sm:$0xf] %v2694
      %2951 = vst [vmem:[%s145 + $0xa0] sm:$0xf] %v2695
      %2952 = vst [vmem:[%s145 + $0xa4] sm:$0xf] %v2696
      %2953 = vst [vmem:[%s145 + $0xa8] sm:$0xf] %v2697
      %2954 = vst [vmem:[%s145 + $0xac] sm:$0xf] %v2698
      %2955 = vst [vmem:[%s145 + $0xb0] sm:$0xf] %v2699
      %2956 = vst [vmem:[%s145 + $0xb4] sm:$0xf] %v2700
      %2957 = vst [vmem:[%s145 + $0xb8] sm:$0xf] %v2701
      %2958 = vst [vmem:[%s145 + $0xbc] sm:$0xf] %v2702
      %2959 = vst [vmem:[%s145 + $0xc0] sm:$0xf] %v2703
      %2960 = vst [vmem:[%s145 + $0xc4] sm:$0xf] %v2704
      %2961 = vst [vmem:[%s145 + $0xc8] sm:$0xf] %v2705
      %2962 = vst [vmem:[%s145 + $0xcc] sm:$0xf] %v2706
      %2963 = vst [vmem:[%s145 + $0xd0] sm:$0xf] %v2707
      %2964 = vst [vmem:[%s145 + $0xd4] sm:$0xf] %v2708
      %2965 = vst [vmem:[%s145 + $0xd8] sm:$0xf] %v2709
      %2966 = vst [vmem:[%s145 + $0xdc] sm:$0xf] %v2710
      %2967 = vst [vmem:[%s145 + $0xe0] sm:$0xf] %v2711
      %2968 = vst [vmem:[%s145 + $0xe4] sm:$0xf] %v2712
      %2969 = vst [vmem:[%s145 + $0xe8] sm:$0xf] %v2713
      %2970 = vst [vmem:[%s145 + $0xec] sm:$0xf] %v2714
      %2971 = vst [vmem:[%s145 + $0xf0] sm:$0xf] %v2715
      %2972 = vst [vmem:[%s145 + $0xf4] sm:$0xf] %v2716
      %2973 = vst [vmem:[%s145 + $0xf8] sm:$0xf] %v2717
      %2974 = vst [vmem:[%s145 + $0xfc] sm:$0xf] %v2718
      %2975 = vst [vmem:[%s145 + $0x100] sm:$0xf] %v2719
      %2976 = vst [vmem:[%s145 + $0x104] sm:$0xf] %v2720
      %2977 = vst [vmem:[%s145 + $0x108] sm:$0xf] %v2721
      %2978 = vst [vmem:[%s145 + $0x10c] sm:$0xf] %v2722
      %2979 = vst [vmem:[%s145 + $0x110] sm:$0xf] %v2723
      %2980 = vst [vmem:[%s145 + $0x114] sm:$0xf] %v2724
      %2981 = vst [vmem:[%s145 + $0x118] sm:$0xf] %v2725
      %2982 = vst [vmem:[%s145 + $0x11c] sm:$0xf] %v2726
      %2983 = vst [vmem:[%s145 + $0x120] sm:$0xf] %v2727
      %2984 = vst [vmem:[%s145 + $0x124] sm:$0xf] %v2728
      %2985 = vst [vmem:[%s145 + $0x128] sm:$0xf] %v2729
      %2986 = vst [vmem:[%s145 + $0x12c] sm:$0xf] %v2730
      %2987 = vst [vmem:[%s145 + $0x130] sm:$0xf] %v2731
      %2988 = vst [vmem:[%s145 + $0x134] sm:$0xf] %v2732
      %2989 = vst [vmem:[%s145 + $0x138] sm:$0xf] %v2733
      %2990 = vst [vmem:[%s145 + $0x13c] sm:$0xf] %v2734
      %2991 = vst [vmem:[%s145 + $0x140] sm:$0xf] %v2735
      %2992 = vst [vmem:[%s145 + $0x144] sm:$0xf] %v2736
      %2993 = vst [vmem:[%s145 + $0x148] sm:$0xf] %v2737
      %2994 = vst [vmem:[%s145 + $0x14c] sm:$0xf] %v2738
      %2995 = vst [vmem:[%s145 + $0x150] sm:$0xf] %v2739
      %2996 = vst [vmem:[%s145 + $0x154] sm:$0xf] %v2740
      %2997 = vst [vmem:[%s145 + $0x158] sm:$0xf] %v2741
      %2998 = vst [vmem:[%s145 + $0x15c] sm:$0xf] %v2742
      %2999 = vst [vmem:[%s145 + $0x160] sm:$0xf] %v2743
      %3000 = vst [vmem:[%s145 + $0x164] sm:$0xf] %v2744
      %3001 = vst [vmem:[%s145 + $0x168] sm:$0xf] %v2745
      %3002 = vst [vmem:[%s145 + $0x16c] sm:$0xf] %v2746
      %3003 = vst [vmem:[%s145 + $0x170] sm:$0xf] %v2747
      %3004 = vst [vmem:[%s145 + $0x174] sm:$0xf] %v2748
      %3005 = vst [vmem:[%s145 + $0x178] sm:$0xf] %v2749
      %3006 = vst [vmem:[%s145 + $0x17c] sm:$0xf] %v2750
      %3007 = vst [vmem:[%s145 + $0x180] sm:$0xf] %v2751
      %3008 = vst [vmem:[%s145 + $0x184] sm:$0xf] %v2752
      %3009 = vst [vmem:[%s145 + $0x188] sm:$0xf] %v2753
      %3010 = vst [vmem:[%s145 + $0x18c] sm:$0xf] %v2754
      %3011 = vst [vmem:[%s145 + $0x190] sm:$0xf] %v2755
      %3012 = vst [vmem:[%s145 + $0x194] sm:$0xf] %v2756
      %3013 = vst [vmem:[%s145 + $0x198] sm:$0xf] %v2757
      %3014 = vst [vmem:[%s145 + $0x19c] sm:$0xf] %v2758
      %3015 = vst [vmem:[%s145 + $0x1a0] sm:$0xf] %v2759
      %3016 = vst [vmem:[%s145 + $0x1a4] sm:$0xf] %v2760
      %3017 = vst [vmem:[%s145 + $0x1a8] sm:$0xf] %v2761
      %3018 = vst [vmem:[%s145 + $0x1ac] sm:$0xf] %v2762
      %3019 = vst [vmem:[%s145 + $0x1b0] sm:$0xf] %v2763
      %3020 = vst [vmem:[%s145 + $0x1b4] sm:$0xf] %v2764
      %3021 = vst [vmem:[%s145 + $0x1b8] sm:$0xf] %v2765
      %3022 = vst [vmem:[%s145 + $0x1bc] sm:$0xf] %v2766
      %3023 = vst [vmem:[%s145 + $0x1c0] sm:$0xf] %v2767
      %3024 = vst [vmem:[%s145 + $0x1c4] sm:$0xf] %v2768
      %3025 = vst [vmem:[%s145 + $0x1c8] sm:$0xf] %v2769
      %3026 = vst [vmem:[%s145 + $0x1cc] sm:$0xf] %v2770
      %3027 = vst [vmem:[%s145 + $0x1d0] sm:$0xf] %v2771
      %3028 = vst [vmem:[%s145 + $0x1d4] sm:$0xf] %v2772
      %3029 = vst [vmem:[%s145 + $0x1d8] sm:$0xf] %v2773
      %3030 = vst [vmem:[%s145 + $0x1dc] sm:$0xf] %v2774
      %3031 = vst [vmem:[%s145 + $0x1e0] sm:$0xf] %v2775
      %3032 = vst [vmem:[%s145 + $0x1e4] sm:$0xf] %v2776
      %3033 = vst [vmem:[%s145 + $0x1e8] sm:$0xf] %v2777
      %3034 = vst [vmem:[%s145 + $0x1ec] sm:$0xf] %v2778
      %3035 = vst [vmem:[%s145 + $0x1f0] sm:$0xf] %v2779
      %3036 = vst [vmem:[%s145 + $0x1f4] sm:$0xf] %v2780
      %3037 = vst [vmem:[%s145 + $0x1f8] sm:$0xf] %v2781
      %3038 = vst [vmem:[%s145 + $0x1fc] sm:$0xf] %v2782
      %s3039 = smul.u32 128, %s13
      %p3040 = scmp.lt.s32.totalorder %s3039, 255
      %s3041 = scalar_select %p3040, %s3039, 255
      %s3042 = smul.addr %s3041, 4
      %s3043 = scalar_lea.vmem %s2, %s3042
      // Predicated region
      $region29: #{discriminator_forward.5} parent=27 // pred_check
        %p3044 = pneg %p78
      $region30: #{discriminator_forward.5} parent=27 // pred_check_branch
        %3046 = sbr.rel (%p3044) target = $region32
      $region31: #{discriminator_forward.5} parent=27 // pred_region
        %s3047 = smul.u32 128, %s13
      $region32: #{discriminator_forward.5} parent=27 // pred_fallthru
        _
    $region28: #{discriminator_forward.5} parent=5 // pred_fallthru
      _
    %p3048 = scmp.le.s32.totalorder 2, %s8
    // Predicated region
    $region33: #{discriminator_forward.5} parent=5 // pred_check
      %p3049 = pneg %p3048
    $region34: #{discriminator_forward.5} parent=5 // pred_check_branch
      %3051 = sbr.rel (%p3049) target = $region36
    $region35: #{discriminator_forward.5} parent=5 // pred_region
      %s3052 = ssub.s32 %s8, 2
      // Predicated region
      $region37: #{discriminator_forward.5} parent=35 // pred_check
        %p3053 = pneg %p84
      $region38: #{discriminator_forward.5} parent=35 // pred_check_branch
        %3055 = sbr.rel (%p3053) target = $region40
      $region39: #{discriminator_forward.5} parent=35 // pred_region
        %s3056 = smul.u32 128, %s14
        %p3057 = scmp.lt.s32.totalorder %s3056, 255
        %s3058 = scalar_select %p3057, %s3056, 255
        %s3059 = smul.addr %s3058, 4
        %s3060 = scalar_lea.vmem %s2, %s3059
      $region40: #{discriminator_forward.5} parent=35 // pred_fallthru
        _
    $region36: #{discriminator_forward.5} parent=5 // pred_fallthru
      _
  $region6: #{discriminator_forward.5} parent=0 // loop_footer
    %s12 = sadd.s32 1, %s8
  $region7: #{discriminator_forward.5} parent=0 // loop_footer_branch
    %7 = sbr.rel target = $region3
  $region8: #{discriminator_forward.5} parent=0 // loop_exit
    _

// kernel: discriminator_forward.6
$region0: #{discriminator_forward.6}
  #allocation0 [shape = 'u32[]', space=smem, size = 0x4, offset = 0x4, fixed_abs, tag = 'smem constant byte address 0x4 - core index']
  #allocation1 [shape = 'u32[144,128]{1,0:T(1,128)}', space=vmem, size = 0x12000, scoped, tag = 'internal scratch']
  %s0 = inlined_call_operand.vmem [shape: bf16[512,1024], index: 0, kind: input, shape index: {}]
  %s1 = inlined_call_operand.vmem [shape: bf16[1024,128], index: 1, kind: input, shape index: {}]
  %s2 = inlined_call_operand.vmem [shape: bf16[512,128], index: 2, kind: output, shape index: {}]
  %s3 = sld [smem:[#allocation0]]
  $region41: #{discriminator_forward.6} parent=0
    _
  %s5 = ssub.s32 1, %s3
  %s6 = scalar_select 0, %s5, %s3
  loop: start=0, step=1, limit=4
  $region2: #{discriminator_forward.6} parent=0 // loop_pre_header
    _
  $region3: #{discriminator_forward.6} parent=0 // loop_header
    %s8 = sphi 0, %s12
    %p9 = scmp.ge.s32.totalorder %s8, 4
    %s18 = sphi 0, %s20
    %s21 = sphi 0, %s18
    %s22 = sphi 0, %s21
    %s38 = sphi 0, %s22
    %s42 = sphi 0, %s42
    %s44 = sphi 0, %s42
    %s45 = sphi 0, %s44
    %s59 = sphi 0, %s45
    %s65 = sphi 0, %s67
    %s68 = sphi 0, %s65
    %s69 = sphi 0, %s68
    %s85 = sphi 0, %s69
  $region4: #{discriminator_forward.6} parent=0 // loop_header_branch
    %11 = sbr.rel (%p9) target = $region8
  $region5: #{discriminator_forward.6} parent=0 // loop_body
    %s13 = ssub.s32 %s8, 1
    %s14 = ssub.s32 %s8, 2
    %s15 = sadd.s32 %s8, 1
    %s16 = ssub.s32 %s8, %s15
    %p17 = scmp.eq.s32.totalorder %s16, 0
    %s19 = sadd.s32 %s18, 1
    %s20 = scalar_select %p17, %s18, %s19
    %p23 = pneg %p17
    %p24 = scmp.eq.s32.totalorder %s8, 1
    %p25 = por %p23, %p24
    %p26 = scmp.ne.s32.totalorder %s18, %s21
    %p27 = scmp.eq.s32.totalorder %s8, 0
    %p28 = por %p26, %p27
    %p29 = scmp.ne.s32.totalorder %s18, %s21
    %p30 = scmp.eq.s32.totalorder %s13, 1
    %p31 = por %p29, %p30
    %p32 = scmp.ne.s32.totalorder %s21, %s22
    %p33 = scmp.eq.s32.totalorder %s13, 0
    %p34 = por %p32, %p33
    %p35 = scmp.ne.s32.totalorder %s21, %s22
    %p36 = scmp.eq.s32.totalorder %s14, 1
    %p37 = por %p35, %p36
    %p39 = scmp.ne.s32.totalorder %s22, %s38
    %p40 = scmp.eq.s32.totalorder %s14, 0
    %p41 = por %p39, %p40
    %s43 = sadd.s32 %s42, 1
    %p46 = scmp.eq.s32.totalorder %s8, 1
    %p47 = scmp.ne.s32.totalorder %s42, %s44
    %p48 = scmp.eq.s32.totalorder %s8, 0
    %p49 = por %p47, %p48
    %p50 = scmp.ne.s32.totalorder %s42, %s44
    %p51 = scmp.eq.s32.totalorder %s13, 1
    %p52 = por %p50, %p51
    %p53 = scmp.ne.s32.totalorder %s44, %s45
    %p54 = scmp.eq.s32.totalorder %s13, 0
    %p55 = por %p53, %p54
    %p56 = scmp.ne.s32.totalorder %s44, %s45
    %p57 = scmp.eq.s32.totalorder %s14, 1
    %p58 = por %p56, %p57
    %p60 = scmp.ne.s32.totalorder %s45, %s59
    %p61 = scmp.eq.s32.totalorder %s14, 0
    %p62 = por %p60, %p61
    %s63 = ssub.s32 %s8, %s15
    %p64 = scmp.eq.s32.totalorder %s63, 0
    %s66 = sadd.s32 %s65, 1
    %s67 = scalar_select %p64, %s65, %s66
    %p70 = pneg %p64
    %p71 = scmp.eq.s32.totalorder %s8, 1
    %p72 = por %p70, %p71
    %p73 = scmp.ne.s32.totalorder %s65, %s68
    %p74 = scmp.eq.s32.totalorder %s8, 0
    %p75 = por %p73, %p74
    %p76 = scmp.ne.s32.totalorder %s65, %s68
    %p77 = scmp.eq.s32.totalorder %s13, 1
    %p78 = por %p76, %p77
    %p79 = scmp.ne.s32.totalorder %s68, %s69
    %p80 = scmp.eq.s32.totalorder %s13, 0
    %p81 = por %p79, %p80
    %p82 = scmp.ne.s32.totalorder %s68, %s69
    %p83 = scmp.eq.s32.totalorder %s14, 1
    %p84 = por %p82, %p83
    %p86 = scmp.ne.s32.totalorder %s69, %s85
    %p87 = scmp.eq.s32.totalorder %s14, 0
    %p88 = por %p86, %p87
    %p89 = scmp.le.s32.totalorder 1, %s8
    %p90 = scmp.lt.s32.totalorder %s8, 3
    %p91 = pnand %p89, %p90
    %p92 = pneg %p91
    // Predicated region
    $region9: #{discriminator_forward.6} parent=5 // pred_check
      _
    $region10: #{discriminator_forward.6} parent=5 // pred_check_branch
      %94 = sbr.rel (%p91) target = $region12
    $region11: #{discriminator_forward.6} parent=5 // pred_region
      %s95 = ssub.s32 %s8, 1
      // Predicated region
      $region13: #{discriminator_forward.6} parent=11 // pred_check
        %p96 = pneg %p55
      $region14: #{discriminator_forward.6} parent=11 // pred_check_branch
        %98 = sbr.rel (%p96) target = $region16
      $region15: #{discriminator_forward.6} parent=11 // pred_region
        _
      $region16: #{discriminator_forward.6} parent=11 // pred_fallthru
        _
    $region12: #{discriminator_forward.6} parent=5 // pred_fallthru
      _
    %p99 = scmp.lt.s32.totalorder %s8, 2
    // Predicated region
    $region17: #{discriminator_forward.6} parent=5 // pred_check
      %p100 = pneg %p99
    $region18: #{discriminator_forward.6} parent=5 // pred_check_branch
      %102 = sbr.rel (%p100) target = $region20
    $region19: #{discriminator_forward.6} parent=5 // pred_region
      // Predicated region
      $region21: #{discriminator_forward.6} parent=19 // pred_check
        %p103 = pneg %p28
      $region22: #{discriminator_forward.6} parent=19 // pred_check_branch
        %105 = sbr.rel (%p103) target = $region24
      $region23: #{discriminator_forward.6} parent=19 // pred_region
        %s106 = smul.u32 32, %s8
        %p107 = scmp.lt.s32.totalorder %s106, 63
        %s108 = scalar_select %p107, %s106, 63
        %s109 = smul.addr %s108, 8
        %s110 = smul.addr %s109, 4
        %s111 = scalar_lea.vmem %s0, %s110
        %s112 = smul.u32 32, %s8
      $region24: #{discriminator_forward.6} parent=19 // pred_fallthru
        _
    $region20: #{discriminator_forward.6} parent=5 // pred_fallthru
      _
    %p113 = scmp.le.s32.totalorder 1, %s8
    %p114 = scmp.lt.s32.totalorder %s8, 3
    %p115 = pnand %p113, %p114
    %p116 = pneg %p115
    // Predicated region
    $region25: #{discriminator_forward.6} parent=5 // pred_check
      _
    $region26: #{discriminator_forward.6} parent=5 // pred_check_branch
      %118 = sbr.rel (%p115) target = $region28
    $region27: #{discriminator_forward.6} parent=5 // pred_region
      %s119 = ssub.s32 %s8, 1
      %s120 = smul.u32 32, %s13
      %p121 = scmp.lt.s32.totalorder %s120, 63
      %s122 = scalar_select %p121, %s120, 63
      %s123 = smul.addr %s122, 8
      %s124 = smul.addr %s123, 4
      %s125 = scalar_lea.vmem %s0, %s124
      %p126 = pneg %p34
      %p127 = pneg %p31
      %p128 = pneg %p55
      %p129 = pneg %p52
      %p130 = pneg %p81
      %p131 = pneg %p78
      %s132 = smul.u32 32, %s13
      %p133 = scmp.lt.s32.totalorder %s132, 63
      %s134 = scalar_select %p133, %s132, 63
      %s135 = smul.addr %s134, 4
      %s136 = scalar_lea.vmem %s2, %s135
      %s137 = smul.u32 32, %s13
      %p138 = scmp.lt.s32.totalorder %s137, 63
      %s139 = scalar_select %p138, %s137, 63
      %s140 = smul.addr %s139, 8
      %s141 = smul.addr %s140, 4
      %s142 = scalar_lea.vmem %s0, %s141
      %s143 = smul.u32 32, %s13
      %s144 = smul.u32 32, %s13
      %p145 = scmp.lt.s32.totalorder %s144, 63
      %s146 = scalar_select %p145, %s144, 63
      %s147 = smul.addr %s146, 4
      %s148 = scalar_lea.vmem %s2, %s147
      %s149 = smul.u32 32, %s13
      %v151 = vld [vmem:[%s142] sm:$0xff]
      %v152 = vld [vmem:[%s142 + $0x8] sm:$0xff]
      %v153 = vld [vmem:[%s142 + $0x10] sm:$0xff]
      %v154 = vld [vmem:[%s142 + $0x18] sm:$0xff]
      %v155 = vld [vmem:[%s142 + $0x20] sm:$0xff]
      %v156 = vld [vmem:[%s142 + $0x28] sm:$0xff]
      %v157 = vld [vmem:[%s142 + $0x30] sm:$0xff]
      %v158 = vld [vmem:[%s142 + $0x38] sm:$0xff]
      %v159 = vld [vmem:[%s142 + $0x40] sm:$0xff]
      %v160 = vld [vmem:[%s142 + $0x48] sm:$0xff]
      %v161 = vld [vmem:[%s142 + $0x50] sm:$0xff]
      %v162 = vld [vmem:[%s142 + $0x58] sm:$0xff]
      %v163 = vld [vmem:[%s142 + $0x60] sm:$0xff]
      %v164 = vld [vmem:[%s142 + $0x68] sm:$0xff]
      %v165 = vld [vmem:[%s142 + $0x70] sm:$0xff]
      %v166 = vld [vmem:[%s142 + $0x78] sm:$0xff]
      %v167 = vld [vmem:[%s142 + $0x80] sm:$0xff]
      %v168 = vld [vmem:[%s142 + $0x88] sm:$0xff]
      %v169 = vld [vmem:[%s142 + $0x90] sm:$0xff]
      %v170 = vld [vmem:[%s142 + $0x98] sm:$0xff]
      %v171 = vld [vmem:[%s142 + $0xa0] sm:$0xff]
      %v172 = vld [vmem:[%s142 + $0xa8] sm:$0xff]
      %v173 = vld [vmem:[%s142 + $0xb0] sm:$0xff]
      %v174 = vld [vmem:[%s142 + $0xb8] sm:$0xff]
      %v175 = vld [vmem:[%s142 + $0xc0] sm:$0xff]
      %v176 = vld [vmem:[%s142 + $0xc8] sm:$0xff]
      %v177 = vld [vmem:[%s142 + $0xd0] sm:$0xff]
      %v178 = vld [vmem:[%s142 + $0xd8] sm:$0xff]
      %v179 = vld [vmem:[%s142 + $0xe0] sm:$0xff]
      %v180 = vld [vmem:[%s142 + $0xe8] sm:$0xff]
      %v181 = vld [vmem:[%s142 + $0xf0] sm:$0xff]
      %v182 = vld [vmem:[%s142 + $0xf8] sm:$0xff]
      %v183 = vld [vmem:[%s142 + $0x100] sm:$0xff]
      %v184 = vld [vmem:[%s142 + $0x108] sm:$0xff]
      %v185 = vld [vmem:[%s142 + $0x110] sm:$0xff]
      %v186 = vld [vmem:[%s142 + $0x118] sm:$0xff]
      %v187 = vld [vmem:[%s142 + $0x120] sm:$0xff]
      %v188 = vld [vmem:[%s142 + $0x128] sm:$0xff]
      %v189 = vld [vmem:[%s142 + $0x130] sm:$0xff]
      %v190 = vld [vmem:[%s142 + $0x138] sm:$0xff]
      %v191 = vld [vmem:[%s142 + $0x140] sm:$0xff]
      %v192 = vld [vmem:[%s142 + $0x148] sm:$0xff]
      %v193 = vld [vmem:[%s142 + $0x150] sm:$0xff]
      %v194 = vld [vmem:[%s142 + $0x158] sm:$0xff]
      %v195 = vld [vmem:[%s142 + $0x160] sm:$0xff]
      %v196 = vld [vmem:[%s142 + $0x168] sm:$0xff]
      %v197 = vld [vmem:[%s142 + $0x170] sm:$0xff]
      %v198 = vld [vmem:[%s142 + $0x178] sm:$0xff]
      %v199 = vld [vmem:[%s142 + $0x180] sm:$0xff]
      %v200 = vld [vmem:[%s142 + $0x188] sm:$0xff]
      %v201 = vld [vmem:[%s142 + $0x190] sm:$0xff]
      %v202 = vld [vmem:[%s142 + $0x198] sm:$0xff]
      %v203 = vld [vmem:[%s142 + $0x1a0] sm:$0xff]
      %v204 = vld [vmem:[%s142 + $0x1a8] sm:$0xff]
      %v205 = vld [vmem:[%s142 + $0x1b0] sm:$0xff]
      %v206 = vld [vmem:[%s142 + $0x1b8] sm:$0xff]
      %v207 = vld [vmem:[%s142 + $0x1c0] sm:$0xff]
      %v208 = vld [vmem:[%s142 + $0x1c8] sm:$0xff]
      %v209 = vld [vmem:[%s142 + $0x1d0] sm:$0xff]
      %v210 = vld [vmem:[%s142 + $0x1d8] sm:$0xff]
      %v211 = vld [vmem:[%s142 + $0x1e0] sm:$0xff]
      %v212 = vld [vmem:[%s142 + $0x1e8] sm:$0xff]
      %v213 = vld [vmem:[%s142 + $0x1f0] sm:$0xff]
      %v214 = vld [vmem:[%s142 + $0x1f8] sm:$0xff]
      %v215 = vld [vmem:[%s142 + $0x200] sm:$0xff]
      %v216 = vld [vmem:[%s142 + $0x208] sm:$0xff]
      %v217 = vld [vmem:[%s142 + $0x210] sm:$0xff]
      %v218 = vld [vmem:[%s142 + $0x218] sm:$0xff]
      %v219 = vld [vmem:[%s142 + $0x220] sm:$0xff]
      %v220 = vld [vmem:[%s142 + $0x228] sm:$0xff]
      %v221 = vld [vmem:[%s142 + $0x230] sm:$0xff]
      %v222 = vld [vmem:[%s142 + $0x238] sm:$0xff]
      %v223 = vld [vmem:[%s142 + $0x240] sm:$0xff]
      %v224 = vld [vmem:[%s142 + $0x248] sm:$0xff]
      %v225 = vld [vmem:[%s142 + $0x250] sm:$0xff]
      %v226 = vld [vmem:[%s142 + $0x258] sm:$0xff]
      %v227 = vld [vmem:[%s142 + $0x260] sm:$0xff]
      %v228 = vld [vmem:[%s142 + $0x268] sm:$0xff]
      %v229 = vld [vmem:[%s142 + $0x270] sm:$0xff]
      %v230 = vld [vmem:[%s142 + $0x278] sm:$0xff]
      %v231 = vld [vmem:[%s142 + $0x280] sm:$0xff]
      %v232 = vld [vmem:[%s142 + $0x288] sm:$0xff]
      %v233 = vld [vmem:[%s142 + $0x290] sm:$0xff]
      %v234 = vld [vmem:[%s142 + $0x298] sm:$0xff]
      %v235 = vld [vmem:[%s142 + $0x2a0] sm:$0xff]
      %v236 = vld [vmem:[%s142 + $0x2a8] sm:$0xff]
      %v237 = vld [vmem:[%s142 + $0x2b0] sm:$0xff]
      %v238 = vld [vmem:[%s142 + $0x2b8] sm:$0xff]
      %v239 = vld [vmem:[%s142 + $0x2c0] sm:$0xff]
      %v240 = vld [vmem:[%s142 + $0x2c8] sm:$0xff]
      %v241 = vld [vmem:[%s142 + $0x2d0] sm:$0xff]
      %v242 = vld [vmem:[%s142 + $0x2d8] sm:$0xff]
      %v243 = vld [vmem:[%s142 + $0x2e0] sm:$0xff]
      %v244 = vld [vmem:[%s142 + $0x2e8] sm:$0xff]
      %v245 = vld [vmem:[%s142 + $0x2f0] sm:$0xff]
      %v246 = vld [vmem:[%s142 + $0x2f8] sm:$0xff]
      %v247 = vld [vmem:[%s142 + $0x300] sm:$0xff]
      %v248 = vld [vmem:[%s142 + $0x308] sm:$0xff]
      %v249 = vld [vmem:[%s142 + $0x310] sm:$0xff]
      %v250 = vld [vmem:[%s142 + $0x318] sm:$0xff]
      %v251 = vld [vmem:[%s142 + $0x320] sm:$0xff]
      %v252 = vld [vmem:[%s142 + $0x328] sm:$0xff]
      %v253 = vld [vmem:[%s142 + $0x330] sm:$0xff]
      %v254 = vld [vmem:[%s142 + $0x338] sm:$0xff]
      %v255 = vld [vmem:[%s142 + $0x340] sm:$0xff]
      %v256 = vld [vmem:[%s142 + $0x348] sm:$0xff]
      %v257 = vld [vmem:[%s142 + $0x350] sm:$0xff]
      %v258 = vld [vmem:[%s142 + $0x358] sm:$0xff]
      %v259 = vld [vmem:[%s142 + $0x360] sm:$0xff]
      %v260 = vld [vmem:[%s142 + $0x368] sm:$0xff]
      %v261 = vld [vmem:[%s142 + $0x370] sm:$0xff]
      %v262 = vld [vmem:[%s142 + $0x378] sm:$0xff]
      %v263 = vld [vmem:[%s142 + $0x380] sm:$0xff]
      %v264 = vld [vmem:[%s142 + $0x388] sm:$0xff]
      %v265 = vld [vmem:[%s142 + $0x390] sm:$0xff]
      %v266 = vld [vmem:[%s142 + $0x398] sm:$0xff]
      %v267 = vld [vmem:[%s142 + $0x3a0] sm:$0xff]
      %v268 = vld [vmem:[%s142 + $0x3a8] sm:$0xff]
      %v269 = vld [vmem:[%s142 + $0x3b0] sm:$0xff]
      %v270 = vld [vmem:[%s142 + $0x3b8] sm:$0xff]
      %v271 = vld [vmem:[%s142 + $0x3c0] sm:$0xff]
      %v272 = vld [vmem:[%s142 + $0x3c8] sm:$0xff]
      %v273 = vld [vmem:[%s142 + $0x3d0] sm:$0xff]
      %v274 = vld [vmem:[%s142 + $0x3d8] sm:$0xff]
      %v275 = vld [vmem:[%s142 + $0x3e0] sm:$0xff]
      %v276 = vld [vmem:[%s142 + $0x3e8] sm:$0xff]
      %v277 = vld [vmem:[%s142 + $0x3f0] sm:$0xff]
      %v278 = vld [vmem:[%s142 + $0x3f8] sm:$0xff]
      %v279 = vld [vmem:[%s1] sm:$0xf]
      %v280 = vld [vmem:[%s1 + $0x4] sm:$0xf]
      %v281 = vld [vmem:[%s1 + $0x8] sm:$0xf]
      %v282 = vld [vmem:[%s1 + $0xc] sm:$0xf]
      %v283 = vld [vmem:[%s1 + $0x10] sm:$0xf]
      %v284 = vld [vmem:[%s1 + $0x14] sm:$0xf]
      %v285 = vld [vmem:[%s1 + $0x18] sm:$0xf]
      %v286 = vld [vmem:[%s1 + $0x1c] sm:$0xf]
      %v287 = vld [vmem:[%s1 + $0x20] sm:$0xf]
      %v288 = vld [vmem:[%s1 + $0x24] sm:$0xf]
      %v289 = vld [vmem:[%s1 + $0x28] sm:$0xf]
      %v290 = vld [vmem:[%s1 + $0x2c] sm:$0xf]
      %v291 = vld [vmem:[%s1 + $0x30] sm:$0xf]
      %v292 = vld [vmem:[%s1 + $0x34] sm:$0xf]
      %v293 = vld [vmem:[%s1 + $0x38] sm:$0xf]
      %v294 = vld [vmem:[%s1 + $0x3c] sm:$0xf]
      %v295 = vld [vmem:[%s1 + $0x40] sm:$0xf]
      %v296 = vld [vmem:[%s1 + $0x44] sm:$0xf]
      %v297 = vld [vmem:[%s1 + $0x48] sm:$0xf]
      %v298 = vld [vmem:[%s1 + $0x4c] sm:$0xf]
      %v299 = vld [vmem:[%s1 + $0x50] sm:$0xf]
      %v300 = vld [vmem:[%s1 + $0x54] sm:$0xf]
      %v301 = vld [vmem:[%s1 + $0x58] sm:$0xf]
      %v302 = vld [vmem:[%s1 + $0x5c] sm:$0xf]
      %v303 = vld [vmem:[%s1 + $0x60] sm:$0xf]
      %v304 = vld [vmem:[%s1 + $0x64] sm:$0xf]
      %v305 = vld [vmem:[%s1 + $0x68] sm:$0xf]
      %v306 = vld [vmem:[%s1 + $0x6c] sm:$0xf]
      %v307 = vld [vmem:[%s1 + $0x70] sm:$0xf]
      %v308 = vld [vmem:[%s1 + $0x74] sm:$0xf]
      %v309 = vld [vmem:[%s1 + $0x78] sm:$0xf]
      %v310 = vld [vmem:[%s1 + $0x7c] sm:$0xf]
      %v311 = vld [vmem:[%s1 + $0x80] sm:$0xf]
      %v312 = vld [vmem:[%s1 + $0x84] sm:$0xf]
      %v313 = vld [vmem:[%s1 + $0x88] sm:$0xf]
      %v314 = vld [vmem:[%s1 + $0x8c] sm:$0xf]
      %v315 = vld [vmem:[%s1 + $0x90] sm:$0xf]
      %v316 = vld [vmem:[%s1 + $0x94] sm:$0xf]
      %v317 = vld [vmem:[%s1 + $0x98] sm:$0xf]
      %v318 = vld [vmem:[%s1 + $0x9c] sm:$0xf]
      %v319 = vld [vmem:[%s1 + $0xa0] sm:$0xf]
      %v320 = vld [vmem:[%s1 + $0xa4] sm:$0xf]
      %v321 = vld [vmem:[%s1 + $0xa8] sm:$0xf]
      %v322 = vld [vmem:[%s1 + $0xac] sm:$0xf]
      %v323 = vld [vmem:[%s1 + $0xb0] sm:$0xf]
      %v324 = vld [vmem:[%s1 + $0xb4] sm:$0xf]
      %v325 = vld [vmem:[%s1 + $0xb8] sm:$0xf]
      %v326 = vld [vmem:[%s1 + $0xbc] sm:$0xf]
      %v327 = vld [vmem:[%s1 + $0xc0] sm:$0xf]
      %v328 = vld [vmem:[%s1 + $0xc4] sm:$0xf]
      %v329 = vld [vmem:[%s1 + $0xc8] sm:$0xf]
      %v330 = vld [vmem:[%s1 + $0xcc] sm:$0xf]
      %v331 = vld [vmem:[%s1 + $0xd0] sm:$0xf]
      %v332 = vld [vmem:[%s1 + $0xd4] sm:$0xf]
      %v333 = vld [vmem:[%s1 + $0xd8] sm:$0xf]
      %v334 = vld [vmem:[%s1 + $0xdc] sm:$0xf]
      %v335 = vld [vmem:[%s1 + $0xe0] sm:$0xf]
      %v336 = vld [vmem:[%s1 + $0xe4] sm:$0xf]
      %v337 = vld [vmem:[%s1 + $0xe8] sm:$0xf]
      %v338 = vld [vmem:[%s1 + $0xec] sm:$0xf]
      %v339 = vld [vmem:[%s1 + $0xf0] sm:$0xf]
      %v340 = vld [vmem:[%s1 + $0xf4] sm:$0xf]
      %v341 = vld [vmem:[%s1 + $0xf8] sm:$0xf]
      %v342 = vld [vmem:[%s1 + $0xfc] sm:$0xf]
      %v343 = vld [vmem:[%s1 + $0x100] sm:$0xf]
      %v344 = vld [vmem:[%s1 + $0x104] sm:$0xf]
      %v345 = vld [vmem:[%s1 + $0x108] sm:$0xf]
      %v346 = vld [vmem:[%s1 + $0x10c] sm:$0xf]
      %v347 = vld [vmem:[%s1 + $0x110] sm:$0xf]
      %v348 = vld [vmem:[%s1 + $0x114] sm:$0xf]
      %v349 = vld [vmem:[%s1 + $0x118] sm:$0xf]
      %v350 = vld [vmem:[%s1 + $0x11c] sm:$0xf]
      %v351 = vld [vmem:[%s1 + $0x120] sm:$0xf]
      %v352 = vld [vmem:[%s1 + $0x124] sm:$0xf]
      %v353 = vld [vmem:[%s1 + $0x128] sm:$0xf]
      %v354 = vld [vmem:[%s1 + $0x12c] sm:$0xf]
      %v355 = vld [vmem:[%s1 + $0x130] sm:$0xf]
      %v356 = vld [vmem:[%s1 + $0x134] sm:$0xf]
      %v357 = vld [vmem:[%s1 + $0x138] sm:$0xf]
      %v358 = vld [vmem:[%s1 + $0x13c] sm:$0xf]
      %v359 = vld [vmem:[%s1 + $0x140] sm:$0xf]
      %v360 = vld [vmem:[%s1 + $0x144] sm:$0xf]
      %v361 = vld [vmem:[%s1 + $0x148] sm:$0xf]
      %v362 = vld [vmem:[%s1 + $0x14c] sm:$0xf]
      %v363 = vld [vmem:[%s1 + $0x150] sm:$0xf]
      %v364 = vld [vmem:[%s1 + $0x154] sm:$0xf]
      %v365 = vld [vmem:[%s1 + $0x158] sm:$0xf]
      %v366 = vld [vmem:[%s1 + $0x15c] sm:$0xf]
      %v367 = vld [vmem:[%s1 + $0x160] sm:$0xf]
      %v368 = vld [vmem:[%s1 + $0x164] sm:$0xf]
      %v369 = vld [vmem:[%s1 + $0x168] sm:$0xf]
      %v370 = vld [vmem:[%s1 + $0x16c] sm:$0xf]
      %v371 = vld [vmem:[%s1 + $0x170] sm:$0xf]
      %v372 = vld [vmem:[%s1 + $0x174] sm:$0xf]
      %v373 = vld [vmem:[%s1 + $0x178] sm:$0xf]
      %v374 = vld [vmem:[%s1 + $0x17c] sm:$0xf]
      %v375 = vld [vmem:[%s1 + $0x180] sm:$0xf]
      %v376 = vld [vmem:[%s1 + $0x184] sm:$0xf]
      %v377 = vld [vmem:[%s1 + $0x188] sm:$0xf]
      %v378 = vld [vmem:[%s1 + $0x18c] sm:$0xf]
      %v379 = vld [vmem:[%s1 + $0x190] sm:$0xf]
      %v380 = vld [vmem:[%s1 + $0x194] sm:$0xf]
      %v381 = vld [vmem:[%s1 + $0x198] sm:$0xf]
      %v382 = vld [vmem:[%s1 + $0x19c] sm:$0xf]
      %v383 = vld [vmem:[%s1 + $0x1a0] sm:$0xf]
      %v384 = vld [vmem:[%s1 + $0x1a4] sm:$0xf]
      %v385 = vld [vmem:[%s1 + $0x1a8] sm:$0xf]
      %v386 = vld [vmem:[%s1 + $0x1ac] sm:$0xf]
      %v387 = vld [vmem:[%s1 + $0x1b0] sm:$0xf]
      %v388 = vld [vmem:[%s1 + $0x1b4] sm:$0xf]
      %v389 = vld [vmem:[%s1 + $0x1b8] sm:$0xf]
      %v390 = vld [vmem:[%s1 + $0x1bc] sm:$0xf]
      %v391 = vld [vmem:[%s1 + $0x1c0] sm:$0xf]
      %v392 = vld [vmem:[%s1 + $0x1c4] sm:$0xf]
      %v393 = vld [vmem:[%s1 + $0x1c8] sm:$0xf]
      %v394 = vld [vmem:[%s1 + $0x1cc] sm:$0xf]
      %v395 = vld [vmem:[%s1 + $0x1d0] sm:$0xf]
      %v396 = vld [vmem:[%s1 + $0x1d4] sm:$0xf]
      %v397 = vld [vmem:[%s1 + $0x1d8] sm:$0xf]
      %v398 = vld [vmem:[%s1 + $0x1dc] sm:$0xf]
      %v399 = vld [vmem:[%s1 + $0x1e0] sm:$0xf]
      %v400 = vld [vmem:[%s1 + $0x1e4] sm:$0xf]
      %v401 = vld [vmem:[%s1 + $0x1e8] sm:$0xf]
      %v402 = vld [vmem:[%s1 + $0x1ec] sm:$0xf]
      %v403 = vld [vmem:[%s1 + $0x1f0] sm:$0xf]
      %v404 = vld [vmem:[%s1 + $0x1f4] sm:$0xf]
      %v405 = vld [vmem:[%s1 + $0x1f8] sm:$0xf]
      %v406 = vld [vmem:[%s1 + $0x1fc] sm:$0xf]
      %v535 = vunpack.c.l.b16 %v151
      %v536 = vunpack.c.h.b16 %v151
      %v537 = vunpack.c.l.b16 %v152
      %v538 = vunpack.c.h.b16 %v152
      %v539 = vunpack.c.l.b16 %v153
      %v540 = vunpack.c.h.b16 %v153
      %v541 = vunpack.c.l.b16 %v154
      %v542 = vunpack.c.h.b16 %v154
      %v543 = vunpack.c.l.b16 %v155
      %v544 = vunpack.c.h.b16 %v155
      %v545 = vunpack.c.l.b16 %v156
      %v546 = vunpack.c.h.b16 %v156
      %v547 = vunpack.c.l.b16 %v157
      %v548 = vunpack.c.h.b16 %v157
      %v549 = vunpack.c.l.b16 %v158
      %v550 = vunpack.c.h.b16 %v158
      %v551 = vunpack.c.l.b16 %v159
      %v552 = vunpack.c.h.b16 %v159
      %v553 = vunpack.c.l.b16 %v160
      %v554 = vunpack.c.h.b16 %v160
      %v555 = vunpack.c.l.b16 %v161
      %v556 = vunpack.c.h.b16 %v161
      %v557 = vunpack.c.l.b16 %v162
      %v558 = vunpack.c.h.b16 %v162
      %v559 = vunpack.c.l.b16 %v163
      %v560 = vunpack.c.h.b16 %v163
      %v561 = vunpack.c.l.b16 %v164
      %v562 = vunpack.c.h.b16 %v164
      %v563 = vunpack.c.l.b16 %v165
      %v564 = vunpack.c.h.b16 %v165
      %v565 = vunpack.c.l.b16 %v166
      %v566 = vunpack.c.h.b16 %v166
      %v567 = vunpack.c.l.b16 %v167
      %v568 = vunpack.c.h.b16 %v167
      %v569 = vunpack.c.l.b16 %v168
      %v570 = vunpack.c.h.b16 %v168
      %v571 = vunpack.c.l.b16 %v169
      %v572 = vunpack.c.h.b16 %v169
      %v573 = vunpack.c.l.b16 %v170
      %v574 = vunpack.c.h.b16 %v170
      %v575 = vunpack.c.l.b16 %v171
      %v576 = vunpack.c.h.b16 %v171
      %v577 = vunpack.c.l.b16 %v172
      %v578 = vunpack.c.h.b16 %v172
      %v579 = vunpack.c.l.b16 %v173
      %v580 = vunpack.c.h.b16 %v173
      %v581 = vunpack.c.l.b16 %v174
      %v582 = vunpack.c.h.b16 %v174
      %v583 = vunpack.c.l.b16 %v175
      %v584 = vunpack.c.h.b16 %v175
      %v585 = vunpack.c.l.b16 %v176
      %v586 = vunpack.c.h.b16 %v176
      %v587 = vunpack.c.l.b16 %v177
      %v588 = vunpack.c.h.b16 %v177
      %v589 = vunpack.c.l.b16 %v178
      %v590 = vunpack.c.h.b16 %v178
      %v591 = vunpack.c.l.b16 %v179
      %v592 = vunpack.c.h.b16 %v179
      %v593 = vunpack.c.l.b16 %v180
      %v594 = vunpack.c.h.b16 %v180
      %v595 = vunpack.c.l.b16 %v181
      %v596 = vunpack.c.h.b16 %v181
      %v597 = vunpack.c.l.b16 %v182
      %v598 = vunpack.c.h.b16 %v182
      %v599 = vunpack.c.l.b16 %v183
      %v600 = vunpack.c.h.b16 %v183
      %v601 = vunpack.c.l.b16 %v184
      %v602 = vunpack.c.h.b16 %v184
      %v603 = vunpack.c.l.b16 %v185
      %v604 = vunpack.c.h.b16 %v185
      %v605 = vunpack.c.l.b16 %v186
      %v606 = vunpack.c.h.b16 %v186
      %v607 = vunpack.c.l.b16 %v187
      %v608 = vunpack.c.h.b16 %v187
      %v609 = vunpack.c.l.b16 %v188
      %v610 = vunpack.c.h.b16 %v188
      %v611 = vunpack.c.l.b16 %v189
      %v612 = vunpack.c.h.b16 %v189
      %v613 = vunpack.c.l.b16 %v190
      %v614 = vunpack.c.h.b16 %v190
      %v615 = vunpack.c.l.b16 %v191
      %v616 = vunpack.c.h.b16 %v191
      %v617 = vunpack.c.l.b16 %v192
      %v618 = vunpack.c.h.b16 %v192
      %v619 = vunpack.c.l.b16 %v193
      %v620 = vunpack.c.h.b16 %v193
      %v621 = vunpack.c.l.b16 %v194
      %v622 = vunpack.c.h.b16 %v194
      %v623 = vunpack.c.l.b16 %v195
      %v624 = vunpack.c.h.b16 %v195
      %v625 = vunpack.c.l.b16 %v196
      %v626 = vunpack.c.h.b16 %v196
      %v627 = vunpack.c.l.b16 %v197
      %v628 = vunpack.c.h.b16 %v197
      %v629 = vunpack.c.l.b16 %v198
      %v630 = vunpack.c.h.b16 %v198
      %v631 = vunpack.c.l.b16 %v199
      %v632 = vunpack.c.h.b16 %v199
      %v633 = vunpack.c.l.b16 %v200
      %v634 = vunpack.c.h.b16 %v200
      %v635 = vunpack.c.l.b16 %v201
      %v636 = vunpack.c.h.b16 %v201
      %v637 = vunpack.c.l.b16 %v202
      %v638 = vunpack.c.h.b16 %v202
      %v639 = vunpack.c.l.b16 %v203
      %v640 = vunpack.c.h.b16 %v203
      %v641 = vunpack.c.l.b16 %v204
      %v642 = vunpack.c.h.b16 %v204
      %v643 = vunpack.c.l.b16 %v205
      %v644 = vunpack.c.h.b16 %v205
      %v645 = vunpack.c.l.b16 %v206
      %v646 = vunpack.c.h.b16 %v206
      %v647 = vunpack.c.l.b16 %v207
      %v648 = vunpack.c.h.b16 %v207
      %v649 = vunpack.c.l.b16 %v208
      %v650 = vunpack.c.h.b16 %v208
      %v651 = vunpack.c.l.b16 %v209
      %v652 = vunpack.c.h.b16 %v209
      %v653 = vunpack.c.l.b16 %v210
      %v654 = vunpack.c.h.b16 %v210
      %v655 = vunpack.c.l.b16 %v211
      %v656 = vunpack.c.h.b16 %v211
      %v657 = vunpack.c.l.b16 %v212
      %v658 = vunpack.c.h.b16 %v212
      %v659 = vunpack.c.l.b16 %v213
      %v660 = vunpack.c.h.b16 %v213
      %v661 = vunpack.c.l.b16 %v214
      %v662 = vunpack.c.h.b16 %v214
      %v663 = vunpack.c.l.b16 %v215
      %v664 = vunpack.c.h.b16 %v215
      %v665 = vunpack.c.l.b16 %v216
      %v666 = vunpack.c.h.b16 %v216
      %v667 = vunpack.c.l.b16 %v217
      %v668 = vunpack.c.h.b16 %v217
      %v669 = vunpack.c.l.b16 %v218
      %v670 = vunpack.c.h.b16 %v218
      %v671 = vunpack.c.l.b16 %v219
      %v672 = vunpack.c.h.b16 %v219
      %v673 = vunpack.c.l.b16 %v220
      %v674 = vunpack.c.h.b16 %v220
      %v675 = vunpack.c.l.b16 %v221
      %v676 = vunpack.c.h.b16 %v221
      %v677 = vunpack.c.l.b16 %v222
      %v678 = vunpack.c.h.b16 %v222
      %v679 = vunpack.c.l.b16 %v223
      %v680 = vunpack.c.h.b16 %v223
      %v681 = vunpack.c.l.b16 %v224
      %v682 = vunpack.c.h.b16 %v224
      %v683 = vunpack.c.l.b16 %v225
      %v684 = vunpack.c.h.b16 %v225
      %v685 = vunpack.c.l.b16 %v226
      %v686 = vunpack.c.h.b16 %v226
      %v687 = vunpack.c.l.b16 %v227
      %v688 = vunpack.c.h.b16 %v227
      %v689 = vunpack.c.l.b16 %v228
      %v690 = vunpack.c.h.b16 %v228
      %v691 = vunpack.c.l.b16 %v229
      %v692 = vunpack.c.h.b16 %v229
      %v693 = vunpack.c.l.b16 %v230
      %v694 = vunpack.c.h.b16 %v230
      %v695 = vunpack.c.l.b16 %v231
      %v696 = vunpack.c.h.b16 %v231
      %v697 = vunpack.c.l.b16 %v232
      %v698 = vunpack.c.h.b16 %v232
      %v699 = vunpack.c.l.b16 %v233
      %v700 = vunpack.c.h.b16 %v233
      %v701 = vunpack.c.l.b16 %v234
      %v702 = vunpack.c.h.b16 %v234
      %v703 = vunpack.c.l.b16 %v235
      %v704 = vunpack.c.h.b16 %v235
      %v705 = vunpack.c.l.b16 %v236
      %v706 = vunpack.c.h.b16 %v236
      %v707 = vunpack.c.l.b16 %v237
      %v708 = vunpack.c.h.b16 %v237
      %v709 = vunpack.c.l.b16 %v238
      %v710 = vunpack.c.h.b16 %v238
      %v711 = vunpack.c.l.b16 %v239
      %v712 = vunpack.c.h.b16 %v239
      %v713 = vunpack.c.l.b16 %v240
      %v714 = vunpack.c.h.b16 %v240
      %v715 = vunpack.c.l.b16 %v241
      %v716 = vunpack.c.h.b16 %v241
      %v717 = vunpack.c.l.b16 %v242
      %v718 = vunpack.c.h.b16 %v242
      %v719 = vunpack.c.l.b16 %v243
      %v720 = vunpack.c.h.b16 %v243
      %v721 = vunpack.c.l.b16 %v244
      %v722 = vunpack.c.h.b16 %v244
      %v723 = vunpack.c.l.b16 %v245
      %v724 = vunpack.c.h.b16 %v245
      %v725 = vunpack.c.l.b16 %v246
      %v726 = vunpack.c.h.b16 %v246
      %v727 = vunpack.c.l.b16 %v247
      %v728 = vunpack.c.h.b16 %v247
      %v729 = vunpack.c.l.b16 %v248
      %v730 = vunpack.c.h.b16 %v248
      %v731 = vunpack.c.l.b16 %v249
      %v732 = vunpack.c.h.b16 %v249
      %v733 = vunpack.c.l.b16 %v250
      %v734 = vunpack.c.h.b16 %v250
      %v735 = vunpack.c.l.b16 %v251
      %v736 = vunpack.c.h.b16 %v251
      %v737 = vunpack.c.l.b16 %v252
      %v738 = vunpack.c.h.b16 %v252
      %v739 = vunpack.c.l.b16 %v253
      %v740 = vunpack.c.h.b16 %v253
      %v741 = vunpack.c.l.b16 %v254
      %v742 = vunpack.c.h.b16 %v254
      %v743 = vunpack.c.l.b16 %v255
      %v744 = vunpack.c.h.b16 %v255
      %v745 = vunpack.c.l.b16 %v256
      %v746 = vunpack.c.h.b16 %v256
      %v747 = vunpack.c.l.b16 %v257
      %v748 = vunpack.c.h.b16 %v257
      %v749 = vunpack.c.l.b16 %v258
      %v750 = vunpack.c.h.b16 %v258
      %v751 = vunpack.c.l.b16 %v259
      %v752 = vunpack.c.h.b16 %v259
      %v753 = vunpack.c.l.b16 %v260
      %v754 = vunpack.c.h.b16 %v260
      %v755 = vunpack.c.l.b16 %v261
      %v756 = vunpack.c.h.b16 %v261
      %v757 = vunpack.c.l.b16 %v262
      %v758 = vunpack.c.h.b16 %v262
      %v759 = vunpack.c.l.b16 %v263
      %v760 = vunpack.c.h.b16 %v263
      %v761 = vunpack.c.l.b16 %v264
      %v762 = vunpack.c.h.b16 %v264
      %v763 = vunpack.c.l.b16 %v265
      %v764 = vunpack.c.h.b16 %v265
      %v765 = vunpack.c.l.b16 %v266
      %v766 = vunpack.c.h.b16 %v266
      %v767 = vunpack.c.l.b16 %v267
      %v768 = vunpack.c.h.b16 %v267
      %v769 = vunpack.c.l.b16 %v268
      %v770 = vunpack.c.h.b16 %v268
      %v771 = vunpack.c.l.b16 %v269
      %v772 = vunpack.c.h.b16 %v269
      %v773 = vunpack.c.l.b16 %v270
      %v774 = vunpack.c.h.b16 %v270
      %v775 = vunpack.c.l.b16 %v271
      %v776 = vunpack.c.h.b16 %v271
      %v777 = vunpack.c.l.b16 %v272
      %v778 = vunpack.c.h.b16 %v272
      %v779 = vunpack.c.l.b16 %v273
      %v780 = vunpack.c.h.b16 %v273
      %v781 = vunpack.c.l.b16 %v274
      %v782 = vunpack.c.h.b16 %v274
      %v783 = vunpack.c.l.b16 %v275
      %v784 = vunpack.c.h.b16 %v275
      %v785 = vunpack.c.l.b16 %v276
      %v786 = vunpack.c.h.b16 %v276
      %v787 = vunpack.c.l.b16 %v277
      %v788 = vunpack.c.h.b16 %v277
      %v789 = vunpack.c.l.b16 %v278
      %v790 = vunpack.c.h.b16 %v278
      %v791 = vpack.c.b16 %v543, %v535
      %v792 = vpack.c.b16 %v544, %v536
      %v793 = vpack.c.b16 %v545, %v537
      %v794 = vpack.c.b16 %v546, %v538
      %v795 = vpack.c.b16 %v547, %v539
      %v796 = vpack.c.b16 %v548, %v540
      %v797 = vpack.c.b16 %v549, %v541
      %v798 = vpack.c.b16 %v550, %v542
      %v799 = vpack.c.b16 %v559, %v551
      %v800 = vpack.c.b16 %v560, %v552
      %v801 = vpack.c.b16 %v561, %v553
      %v802 = vpack.c.b16 %v562, %v554
      %v803 = vpack.c.b16 %v563, %v555
      %v804 = vpack.c.b16 %v564, %v556
      %v805 = vpack.c.b16 %v565, %v557
      %v806 = vpack.c.b16 %v566, %v558
      %v807 = vpack.c.b16 %v575, %v567
      %v808 = vpack.c.b16 %v576, %v568
      %v809 = vpack.c.b16 %v577, %v569
      %v810 = vpack.c.b16 %v578, %v570
      %v811 = vpack.c.b16 %v579, %v571
      %v812 = vpack.c.b16 %v580, %v572
      %v813 = vpack.c.b16 %v581, %v573
      %v814 = vpack.c.b16 %v582, %v574
      %v815 = vpack.c.b16 %v591, %v583
      %v816 = vpack.c.b16 %v592, %v584
      %v817 = vpack.c.b16 %v593, %v585
      %v818 = vpack.c.b16 %v594, %v586
      %v819 = vpack.c.b16 %v595, %v587
      %v820 = vpack.c.b16 %v596, %v588
      %v821 = vpack.c.b16 %v597, %v589
      %v822 = vpack.c.b16 %v598, %v590
      %v823 = vpack.c.b16 %v607, %v599
      %v824 = vpack.c.b16 %v608, %v600
      %v825 = vpack.c.b16 %v609, %v601
      %v826 = vpack.c.b16 %v610, %v602
      %v827 = vpack.c.b16 %v611, %v603
      %v828 = vpack.c.b16 %v612, %v604
      %v829 = vpack.c.b16 %v613, %v605
      %v830 = vpack.c.b16 %v614, %v606
      %v831 = vpack.c.b16 %v623, %v615
      %v832 = vpack.c.b16 %v624, %v616
      %v833 = vpack.c.b16 %v625, %v617
      %v834 = vpack.c.b16 %v626, %v618
      %v835 = vpack.c.b16 %v627, %v619
      %v836 = vpack.c.b16 %v628, %v620
      %v837 = vpack.c.b16 %v629, %v621
      %v838 = vpack.c.b16 %v630, %v622
      %v839 = vpack.c.b16 %v639, %v631
      %v840 = vpack.c.b16 %v640, %v632
      %v841 = vpack.c.b16 %v641, %v633
      %v842 = vpack.c.b16 %v642, %v634
      %v843 = vpack.c.b16 %v643, %v635
      %v844 = vpack.c.b16 %v644, %v636
      %v845 = vpack.c.b16 %v645, %v637
      %v846 = vpack.c.b16 %v646, %v638
      %v847 = vpack.c.b16 %v655, %v647
      %v848 = vpack.c.b16 %v656, %v648
      %v849 = vpack.c.b16 %v657, %v649
      %v850 = vpack.c.b16 %v658, %v650
      %v851 = vpack.c.b16 %v659, %v651
      %v852 = vpack.c.b16 %v660, %v652
      %v853 = vpack.c.b16 %v661, %v653
      %v854 = vpack.c.b16 %v662, %v654
      %v855 = vpack.c.b16 %v671, %v663
      %v856 = vpack.c.b16 %v672, %v664
      %v857 = vpack.c.b16 %v673, %v665
      %v858 = vpack.c.b16 %v674, %v666
      %v859 = vpack.c.b16 %v675, %v667
      %v860 = vpack.c.b16 %v676, %v668
      %v861 = vpack.c.b16 %v677, %v669
      %v862 = vpack.c.b16 %v678, %v670
      %v863 = vpack.c.b16 %v687, %v679
      %v864 = vpack.c.b16 %v688, %v680
      %v865 = vpack.c.b16 %v689, %v681
      %v866 = vpack.c.b16 %v690, %v682
      %v867 = vpack.c.b16 %v691, %v683
      %v868 = vpack.c.b16 %v692, %v684
      %v869 = vpack.c.b16 %v693, %v685
      %v870 = vpack.c.b16 %v694, %v686
      %v871 = vpack.c.b16 %v703, %v695
      %v872 = vpack.c.b16 %v704, %v696
      %v873 = vpack.c.b16 %v705, %v697
      %v874 = vpack.c.b16 %v706, %v698
      %v875 = vpack.c.b16 %v707, %v699
      %v876 = vpack.c.b16 %v708, %v700
      %v877 = vpack.c.b16 %v709, %v701
      %v878 = vpack.c.b16 %v710, %v702
      %v879 = vpack.c.b16 %v719, %v711
      %v880 = vpack.c.b16 %v720, %v712
      %v881 = vpack.c.b16 %v721, %v713
      %v882 = vpack.c.b16 %v722, %v714
      %v883 = vpack.c.b16 %v723, %v715
      %v884 = vpack.c.b16 %v724, %v716
      %v885 = vpack.c.b16 %v725, %v717
      %v886 = vpack.c.b16 %v726, %v718
      %v887 = vpack.c.b16 %v735, %v727
      %v888 = vpack.c.b16 %v736, %v728
      %v889 = vpack.c.b16 %v737, %v729
      %v890 = vpack.c.b16 %v738, %v730
      %v891 = vpack.c.b16 %v739, %v731
      %v892 = vpack.c.b16 %v740, %v732
      %v893 = vpack.c.b16 %v741, %v733
      %v894 = vpack.c.b16 %v742, %v734
      %v895 = vpack.c.b16 %v751, %v743
      %v896 = vpack.c.b16 %v752, %v744
      %v897 = vpack.c.b16 %v753, %v745
      %v898 = vpack.c.b16 %v754, %v746
      %v899 = vpack.c.b16 %v755, %v747
      %v900 = vpack.c.b16 %v756, %v748
      %v901 = vpack.c.b16 %v757, %v749
      %v902 = vpack.c.b16 %v758, %v750
      %v903 = vpack.c.b16 %v767, %v759
      %v904 = vpack.c.b16 %v768, %v760
      %v905 = vpack.c.b16 %v769, %v761
      %v906 = vpack.c.b16 %v770, %v762
      %v907 = vpack.c.b16 %v771, %v763
      %v908 = vpack.c.b16 %v772, %v764
      %v909 = vpack.c.b16 %v773, %v765
      %v910 = vpack.c.b16 %v774, %v766
      %v911 = vpack.c.b16 %v783, %v775
      %v912 = vpack.c.b16 %v784, %v776
      %v913 = vpack.c.b16 %v785, %v777
      %v914 = vpack.c.b16 %v786, %v778
      %v915 = vpack.c.b16 %v787, %v779
      %v916 = vpack.c.b16 %v788, %v780
      %v917 = vpack.c.b16 %v789, %v781
      %v918 = vpack.c.b16 %v790, %v782
      %v1175 = vunpack.c.l.b16 %v279
      %v1176 = vunpack.c.l.b16 %v280
      %v1177 = vunpack.c.l.b16 %v281
      %v1178 = vunpack.c.l.b16 %v282
      %v1179 = vunpack.c.l.b16 %v283
      %v1180 = vunpack.c.l.b16 %v284
      %v1181 = vunpack.c.l.b16 %v285
      %v1182 = vunpack.c.l.b16 %v286
      %v1183 = vunpack.c.l.b16 %v287
      %v1184 = vunpack.c.l.b16 %v288
      %v1185 = vunpack.c.l.b16 %v289
      %v1186 = vunpack.c.l.b16 %v290
      %v1187 = vunpack.c.l.b16 %v291
      %v1188 = vunpack.c.l.b16 %v292
      %v1189 = vunpack.c.l.b16 %v293
      %v1190 = vunpack.c.l.b16 %v294
      %v1191 = vunpack.c.l.b16 %v295
      %v1192 = vunpack.c.l.b16 %v296
      %v1193 = vunpack.c.l.b16 %v297
      %v1194 = vunpack.c.l.b16 %v298
      %v1195 = vunpack.c.l.b16 %v299
      %v1196 = vunpack.c.l.b16 %v300
      %v1197 = vunpack.c.l.b16 %v301
      %v1198 = vunpack.c.l.b16 %v302
      %v1199 = vunpack.c.l.b16 %v303
      %v1200 = vunpack.c.l.b16 %v304
      %v1201 = vunpack.c.l.b16 %v305
      %v1202 = vunpack.c.l.b16 %v306
      %v1203 = vunpack.c.l.b16 %v307
      %v1204 = vunpack.c.l.b16 %v308
      %v1205 = vunpack.c.l.b16 %v309
      %v1206 = vunpack.c.l.b16 %v310
      %v1207 = vunpack.c.l.b16 %v311
      %v1208 = vunpack.c.l.b16 %v312
      %v1209 = vunpack.c.l.b16 %v313
      %v1210 = vunpack.c.l.b16 %v314
      %v1211 = vunpack.c.l.b16 %v315
      %v1212 = vunpack.c.l.b16 %v316
      %v1213 = vunpack.c.l.b16 %v317
      %v1214 = vunpack.c.l.b16 %v318
      %v1215 = vunpack.c.l.b16 %v319
      %v1216 = vunpack.c.l.b16 %v320
      %v1217 = vunpack.c.l.b16 %v321
      %v1218 = vunpack.c.l.b16 %v322
      %v1219 = vunpack.c.l.b16 %v323
      %v1220 = vunpack.c.l.b16 %v324
      %v1221 = vunpack.c.l.b16 %v325
      %v1222 = vunpack.c.l.b16 %v326
      %v1223 = vunpack.c.l.b16 %v327
      %v1224 = vunpack.c.l.b16 %v328
      %v1225 = vunpack.c.l.b16 %v329
      %v1226 = vunpack.c.l.b16 %v330
      %v1227 = vunpack.c.l.b16 %v331
      %v1228 = vunpack.c.l.b16 %v332
      %v1229 = vunpack.c.l.b16 %v333
      %v1230 = vunpack.c.l.b16 %v334
      %v1231 = vunpack.c.l.b16 %v335
      %v1232 = vunpack.c.l.b16 %v336
      %v1233 = vunpack.c.l.b16 %v337
      %v1234 = vunpack.c.l.b16 %v338
      %v1235 = vunpack.c.l.b16 %v339
      %v1236 = vunpack.c.l.b16 %v340
      %v1237 = vunpack.c.l.b16 %v341
      %v1238 = vunpack.c.l.b16 %v342
      %v1239 = vunpack.c.l.b16 %v343
      %v1240 = vunpack.c.l.b16 %v344
      %v1241 = vunpack.c.l.b16 %v345
      %v1242 = vunpack.c.l.b16 %v346
      %v1243 = vunpack.c.l.b16 %v347
      %v1244 = vunpack.c.l.b16 %v348
      %v1245 = vunpack.c.l.b16 %v349
      %v1246 = vunpack.c.l.b16 %v350
      %v1247 = vunpack.c.l.b16 %v351
      %v1248 = vunpack.c.l.b16 %v352
      %v1249 = vunpack.c.l.b16 %v353
      %v1250 = vunpack.c.l.b16 %v354
      %v1251 = vunpack.c.l.b16 %v355
      %v1252 = vunpack.c.l.b16 %v356
      %v1253 = vunpack.c.l.b16 %v357
      %v1254 = vunpack.c.l.b16 %v358
      %v1255 = vunpack.c.l.b16 %v359
      %v1256 = vunpack.c.l.b16 %v360
      %v1257 = vunpack.c.l.b16 %v361
      %v1258 = vunpack.c.l.b16 %v362
      %v1259 = vunpack.c.l.b16 %v363
      %v1260 = vunpack.c.l.b16 %v364
      %v1261 = vunpack.c.l.b16 %v365
      %v1262 = vunpack.c.l.b16 %v366
      %v1263 = vunpack.c.l.b16 %v367
      %v1264 = vunpack.c.l.b16 %v368
      %v1265 = vunpack.c.l.b16 %v369
      %v1266 = vunpack.c.l.b16 %v370
      %v1267 = vunpack.c.l.b16 %v371
      %v1268 = vunpack.c.l.b16 %v372
      %v1269 = vunpack.c.l.b16 %v373
      %v1270 = vunpack.c.l.b16 %v374
      %v1271 = vunpack.c.l.b16 %v375
      %v1272 = vunpack.c.l.b16 %v376
      %v1273 = vunpack.c.l.b16 %v377
      %v1274 = vunpack.c.l.b16 %v378
      %v1275 = vunpack.c.l.b16 %v379
      %v1276 = vunpack.c.l.b16 %v380
      %v1277 = vunpack.c.l.b16 %v381
      %v1278 = vunpack.c.l.b16 %v382
      %v1279 = vunpack.c.l.b16 %v383
      %v1280 = vunpack.c.l.b16 %v384
      %v1281 = vunpack.c.l.b16 %v385
      %v1282 = vunpack.c.l.b16 %v386
      %v1283 = vunpack.c.l.b16 %v387
      %v1284 = vunpack.c.l.b16 %v388
      %v1285 = vunpack.c.l.b16 %v389
      %v1286 = vunpack.c.l.b16 %v390
      %v1287 = vunpack.c.l.b16 %v391
      %v1288 = vunpack.c.l.b16 %v392
      %v1289 = vunpack.c.l.b16 %v393
      %v1290 = vunpack.c.l.b16 %v394
      %v1291 = vunpack.c.l.b16 %v395
      %v1292 = vunpack.c.l.b16 %v396
      %v1293 = vunpack.c.l.b16 %v397
      %v1294 = vunpack.c.l.b16 %v398
      %v1295 = vunpack.c.l.b16 %v399
      %v1296 = vunpack.c.l.b16 %v400
      %v1297 = vunpack.c.l.b16 %v401
      %v1298 = vunpack.c.l.b16 %v402
      %v1299 = vunpack.c.l.b16 %v403
      %v1300 = vunpack.c.l.b16 %v404
      %v1301 = vunpack.c.l.b16 %v405
      %v1302 = vunpack.c.l.b16 %v406
      %v1303 = vpack.c.b16 %v1176, %v1175
      %v1304 = vpack.c.b16 %v1178, %v1177
      %v1305 = vpack.c.b16 %v1180, %v1179
      %v1306 = vpack.c.b16 %v1182, %v1181
      %v1307 = vpack.c.b16 %v1184, %v1183
      %v1308 = vpack.c.b16 %v1186, %v1185
      %v1309 = vpack.c.b16 %v1188, %v1187
      %v1310 = vpack.c.b16 %v1190, %v1189
      %v1311 = vpack.c.b16 %v1192, %v1191
      %v1312 = vpack.c.b16 %v1194, %v1193
      %v1313 = vpack.c.b16 %v1196, %v1195
      %v1314 = vpack.c.b16 %v1198, %v1197
      %v1315 = vpack.c.b16 %v1200, %v1199
      %v1316 = vpack.c.b16 %v1202, %v1201
      %v1317 = vpack.c.b16 %v1204, %v1203
      %v1318 = vpack.c.b16 %v1206, %v1205
      %v1319 = vpack.c.b16 %v1208, %v1207
      %v1320 = vpack.c.b16 %v1210, %v1209
      %v1321 = vpack.c.b16 %v1212, %v1211
      %v1322 = vpack.c.b16 %v1214, %v1213
      %v1323 = vpack.c.b16 %v1216, %v1215
      %v1324 = vpack.c.b16 %v1218, %v1217
      %v1325 = vpack.c.b16 %v1220, %v1219
      %v1326 = vpack.c.b16 %v1222, %v1221
      %v1327 = vpack.c.b16 %v1224, %v1223
      %v1328 = vpack.c.b16 %v1226, %v1225
      %v1329 = vpack.c.b16 %v1228, %v1227
      %v1330 = vpack.c.b16 %v1230, %v1229
      %v1331 = vpack.c.b16 %v1232, %v1231
      %v1332 = vpack.c.b16 %v1234, %v1233
      %v1333 = vpack.c.b16 %v1236, %v1235
      %v1334 = vpack.c.b16 %v1238, %v1237
      %v1335 = vpack.c.b16 %v1240, %v1239
      %v1336 = vpack.c.b16 %v1242, %v1241
      %v1337 = vpack.c.b16 %v1244, %v1243
      %v1338 = vpack.c.b16 %v1246, %v1245
      %v1339 = vpack.c.b16 %v1248, %v1247
      %v1340 = vpack.c.b16 %v1250, %v1249
      %v1341 = vpack.c.b16 %v1252, %v1251
      %v1342 = vpack.c.b16 %v1254, %v1253
      %v1343 = vpack.c.b16 %v1256, %v1255
      %v1344 = vpack.c.b16 %v1258, %v1257
      %v1345 = vpack.c.b16 %v1260, %v1259
      %v1346 = vpack.c.b16 %v1262, %v1261
      %v1347 = vpack.c.b16 %v1264, %v1263
      %v1348 = vpack.c.b16 %v1266, %v1265
      %v1349 = vpack.c.b16 %v1268, %v1267
      %v1350 = vpack.c.b16 %v1270, %v1269
      %v1351 = vpack.c.b16 %v1272, %v1271
      %v1352 = vpack.c.b16 %v1274, %v1273
      %v1353 = vpack.c.b16 %v1276, %v1275
      %v1354 = vpack.c.b16 %v1278, %v1277
      %v1355 = vpack.c.b16 %v1280, %v1279
      %v1356 = vpack.c.b16 %v1282, %v1281
      %v1357 = vpack.c.b16 %v1284, %v1283
      %v1358 = vpack.c.b16 %v1286, %v1285
      %v1359 = vpack.c.b16 %v1288, %v1287
      %v1360 = vpack.c.b16 %v1290, %v1289
      %v1361 = vpack.c.b16 %v1292, %v1291
      %v1362 = vpack.c.b16 %v1294, %v1293
      %v1363 = vpack.c.b16 %v1296, %v1295
      %v1364 = vpack.c.b16 %v1298, %v1297
      %v1365 = vpack.c.b16 %v1300, %v1299
      %v1366 = vpack.c.b16 %v1302, %v1301
      %1431 = vmatprep.subr.bf16.mxu0 0
      %1432 = vmatpush1.bf16.msra.mxu0 %v1303
      %1433 = vmatprep.subr.bf16.mxu0 0
      %1434 = vmatpush1.bf16.msra.mxu0 %v1304
      %1435 = vmatprep.subr.bf16.mxu0 0
      %1436 = vmatpush1.bf16.msra.mxu0 %v1305
      %1437 = vmatprep.subr.bf16.mxu0 0
      %1438 = vmatpush1.bf16.msra.mxu0 %v1306
      %1439 = vmatprep.subr.bf16.mxu0 0
      %1440 = vmatpush1.bf16.msra.mxu0 %v1307
      %1441 = vmatprep.subr.bf16.mxu0 0
      %1442 = vmatpush1.bf16.msra.mxu0 %v1308
      %1443 = vmatprep.subr.bf16.mxu0 0
      %1444 = vmatpush1.bf16.msra.mxu0 %v1309
      %1445 = vmatprep.subr.bf16.mxu0 0
      %1446 = vmatpush1.bf16.msra.mxu0 %v1310
      %1447 = vmatprep.subr.bf16.mxu0 0
      %1448 = vmatpush1.bf16.msra.mxu0 %v1311
      %1449 = vmatprep.subr.bf16.mxu0 0
      %1450 = vmatpush1.bf16.msra.mxu0 %v1312
      %1451 = vmatprep.subr.bf16.mxu0 0
      %1452 = vmatpush1.bf16.msra.mxu0 %v1313
      %1453 = vmatprep.subr.bf16.mxu0 0
      %1454 = vmatpush1.bf16.msra.mxu0 %v1314
      %1455 = vmatprep.subr.bf16.mxu0 0
      %1456 = vmatpush1.bf16.msra.mxu0 %v1315
      %1457 = vmatprep.subr.bf16.mxu0 0
      %1458 = vmatpush1.bf16.msra.mxu0 %v1316
      %1459 = vmatprep.subr.bf16.mxu0 0
      %1460 = vmatpush1.bf16.msra.mxu0 %v1317
      %1461 = vmatprep.subr.bf16.mxu0 0
      %1462 = vmatpush1.bf16.msra.mxu0 %v1318
      %1463 = vmatprep.mubr.bf16.mxu0 %v792
      %1464 = vmatmul.mubr.bf16.gmra.mrb[0].mxu0 %v791
      %v1465 = vpop.f32.mrb[0].mxu0
      %v1466 = vadd.f32 0.0, %v1465
      %v1467 = vpop.f32.mrb[0].mxu0
      %v1468 = vpop.f32.mrb[0].mxu0
      %v1469 = vadd.f32 0.0, %v1468
      %v1470 = vpop.f32.mrb[0].mxu0
      %1471 = vmatprep.mubr.bf16.mxu0 %v800
      %1472 = vmatmul.mubr.bf16.gmra.mrb[0].mxu0 %v799
      %v1473 = vpop.f32.mrb[0].mxu0
      %v1474 = vadd.f32 0.0, %v1473
      %v1475 = vpop.f32.mrb[0].mxu0
      %v1476 = vpop.f32.mrb[0].mxu0
      %v1477 = vadd.f32 0.0, %v1476
      %v1478 = vpop.f32.mrb[0].mxu0
      %1479 = vmatprep.mubr.bf16.mxu0 %v808
      %1480 = vmatmul.mubr.bf16.gmra.mrb[0].mxu0 %v807
      %v1481 = vpop.f32.mrb[0].mxu0
      %v1482 = vadd.f32 0.0, %v1481
      %v1483 = vpop.f32.mrb[0].mxu0
      %v1484 = vpop.f32.mrb[0].mxu0
      %v1485 = vadd.f32 0.0, %v1484
      %v1486 = vpop.f32.mrb[0].mxu0
      %1487 = vmatprep.mubr.bf16.mxu0 %v816
      %1488 = vmatmul.mubr.bf16.gmra.mrb[0].mxu0 %v815
      %v1489 = vpop.f32.mrb[0].mxu0
      %v1490 = vadd.f32 0.0, %v1489
      %v1491 = vpop.f32.mrb[0].mxu0
      %v1492 = vpop.f32.mrb[0].mxu0
      %v1493 = vadd.f32 0.0, %v1492
      %v1494 = vpop.f32.mrb[0].mxu0
      %1495 = vmatprep.mubr.bf16.mxu0 %v824
      %1496 = vmatmul.mubr.bf16.gmra.mrb[0].mxu0 %v823
      %v1497 = vpop.f32.mrb[0].mxu0
      %v1498 = vadd.f32 0.0, %v1497
      %v1499 = vpop.f32.mrb[0].mxu0
      %v1500 = vpop.f32.mrb[0].mxu0
      %v1501 = vadd.f32 0.0, %v1500
      %v1502 = vpop.f32.mrb[0].mxu0
      %1503 = vmatprep.mubr.bf16.mxu0 %v832
      %1504 = vmatmul.mubr.bf16.gmra.mrb[0].mxu0 %v831
      %v1505 = vpop.f32.mrb[0].mxu0
      %v1506 = vadd.f32 0.0, %v1505
      %v1507 = vpop.f32.mrb[0].mxu0
      %v1508 = vpop.f32.mrb[0].mxu0
      %v1509 = vadd.f32 0.0, %v1508
      %v1510 = vpop.f32.mrb[0].mxu0
      %1511 = vmatprep.mubr.bf16.mxu0 %v840
      %1512 = vmatmul.mubr.bf16.gmra.mrb[0].mxu0 %v839
      %v1513 = vpop.f32.mrb[0].mxu0
      %v1514 = vadd.f32 0.0, %v1513
      %v1515 = vpop.f32.mrb[0].mxu0
      %v1516 = vpop.f32.mrb[0].mxu0
      %v1517 = vadd.f32 0.0, %v1516
      %v1518 = vpop.f32.mrb[0].mxu0
      %1519 = vmatprep.mubr.bf16.mxu0 %v848
      %1520 = vmatmul.mubr.bf16.gmra.mrb[0].mxu0 %v847
      %v1521 = vpop.f32.mrb[0].mxu0
      %v1522 = vadd.f32 0.0, %v1521
      %v1523 = vpop.f32.mrb[0].mxu0
      %v1524 = vpop.f32.mrb[0].mxu0
      %v1525 = vadd.f32 0.0, %v1524
      %v1526 = vpop.f32.mrb[0].mxu0
      %1527 = vmatprep.mubr.bf16.mxu0 %v856
      %1528 = vmatmul.mubr.bf16.gmra.mrb[0].mxu0 %v855
      %v1529 = vpop.f32.mrb[0].mxu0
      %v1530 = vadd.f32 0.0, %v1529
      %v1531 = vpop.f32.mrb[0].mxu0
      %v1532 = vpop.f32.mrb[0].mxu0
      %v1533 = vadd.f32 0.0, %v1532
      %v1534 = vpop.f32.mrb[0].mxu0
      %1535 = vmatprep.mubr.bf16.mxu0 %v864
      %1536 = vmatmul.mubr.bf16.gmra.mrb[0].mxu0 %v863
      %v1537 = vpop.f32.mrb[0].mxu0
      %v1538 = vadd.f32 0.0, %v1537
      %v1539 = vpop.f32.mrb[0].mxu0
      %v1540 = vpop.f32.mrb[0].mxu0
      %v1541 = vadd.f32 0.0, %v1540
      %v1542 = vpop.f32.mrb[0].mxu0
      %1543 = vmatprep.mubr.bf16.mxu0 %v872
      %1544 = vmatmul.mubr.bf16.gmra.mrb[0].mxu0 %v871
      %v1545 = vpop.f32.mrb[0].mxu0
      %v1546 = vadd.f32 0.0, %v1545
      %v1547 = vpop.f32.mrb[0].mxu0
      %v1548 = vpop.f32.mrb[0].mxu0
      %v1549 = vadd.f32 0.0, %v1548
      %v1550 = vpop.f32.mrb[0].mxu0
      %1551 = vmatprep.mubr.bf16.mxu0 %v880
      %1552 = vmatmul.mubr.bf16.gmra.mrb[0].mxu0 %v879
      %v1553 = vpop.f32.mrb[0].mxu0
      %v1554 = vadd.f32 0.0, %v1553
      %v1555 = vpop.f32.mrb[0].mxu0
      %v1556 = vpop.f32.mrb[0].mxu0
      %v1557 = vadd.f32 0.0, %v1556
      %v1558 = vpop.f32.mrb[0].mxu0
      %1559 = vmatprep.mubr.bf16.mxu0 %v888
      %1560 = vmatmul.mubr.bf16.gmra.mrb[0].mxu0 %v887
      %v1561 = vpop.f32.mrb[0].mxu0
      %v1562 = vadd.f32 0.0, %v1561
      %v1563 = vpop.f32.mrb[0].mxu0
      %v1564 = vpop.f32.mrb[0].mxu0
      %v1565 = vadd.f32 0.0, %v1564
      %v1566 = vpop.f32.mrb[0].mxu0
      %1567 = vmatprep.mubr.bf16.mxu0 %v896
      %1568 = vmatmul.mubr.bf16.gmra.mrb[0].mxu0 %v895
      %v1569 = vpop.f32.mrb[0].mxu0
      %v1570 = vadd.f32 0.0, %v1569
      %v1571 = vpop.f32.mrb[0].mxu0
      %v1572 = vpop.f32.mrb[0].mxu0
      %v1573 = vadd.f32 0.0, %v1572
      %v1574 = vpop.f32.mrb[0].mxu0
      %1575 = vmatprep.mubr.bf16.mxu0 %v904
      %1576 = vmatmul.mubr.bf16.gmra.mrb[0].mxu0 %v903
      %v1577 = vpop.f32.mrb[0].mxu0
      %v1578 = vadd.f32 0.0, %v1577
      %v1579 = vpop.f32.mrb[0].mxu0
      %v1580 = vpop.f32.mrb[0].mxu0
      %v1581 = vadd.f32 0.0, %v1580
      %v1582 = vpop.f32.mrb[0].mxu0
      %1583 = vmatprep.mubr.bf16.mxu0 %v912
      %1584 = vmatmul.mubr.bf16.gmra.mrb[0].mxu0 %v911
      %v1585 = vpop.f32.mrb[0].mxu0
      %v1586 = vadd.f32 0.0, %v1585
      %v1587 = vpop.f32.mrb[0].mxu0
      %v1588 = vpop.f32.mrb[0].mxu0
      %v1589 = vadd.f32 0.0, %v1588
      %v1590 = vpop.f32.mrb[0].mxu0
      %1591 = vdwg.mxu0
      %1592 = vmatprep.subr.bf16.mxu0 0
      %1593 = vmatpush1.bf16.msra.mxu0 %v1319
      %1594 = vmatprep.subr.bf16.mxu0 0
      %1595 = vmatpush1.bf16.msra.mxu0 %v1320
      %1596 = vmatprep.subr.bf16.mxu0 0
      %1597 = vmatpush1.bf16.msra.mxu0 %v1321
      %1598 = vmatprep.subr.bf16.mxu0 0
      %1599 = vmatpush1.bf16.msra.mxu0 %v1322
      %1600 = vmatprep.subr.bf16.mxu0 0
      %1601 = vmatpush1.bf16.msra.mxu0 %v1323
      %1602 = vmatprep.subr.bf16.mxu0 0
      %1603 = vmatpush1.bf16.msra.mxu0 %v1324
      %1604 = vmatprep.subr.bf16.mxu0 0
      %1605 = vmatpush1.bf16.msra.mxu0 %v1325
      %1606 = vmatprep.subr.bf16.mxu0 0
      %1607 = vmatpush1.bf16.msra.mxu0 %v1326
      %1608 = vmatprep.subr.bf16.mxu0 0
      %1609 = vmatpush1.bf16.msra.mxu0 %v1327
      %1610 = vmatprep.subr.bf16.mxu0 0
      %1611 = vmatpush1.bf16.msra.mxu0 %v1328
      %1612 = vmatprep.subr.bf16.mxu0 0
      %1613 = vmatpush1.bf16.msra.mxu0 %v1329
      %1614 = vmatprep.subr.bf16.mxu0 0
      %1615 = vmatpush1.bf16.msra.mxu0 %v1330
      %1616 = vmatprep.subr.bf16.mxu0 0
      %1617 = vmatpush1.bf16.msra.mxu0 %v1331
      %1618 = vmatprep.subr.bf16.mxu0 0
      %1619 = vmatpush1.bf16.msra.mxu0 %v1332
      %1620 = vmatprep.subr.bf16.mxu0 0
      %1621 = vmatpush1.bf16.msra.mxu0 %v1333
      %1622 = vmatprep.subr.bf16.mxu0 0
      %1623 = vmatpush1.bf16.msra.mxu0 %v1334
      %1624 = vmatprep.mubr.bf16.mxu0 %v794
      %1625 = vmatmul.mubr.bf16.gmra.mrb[0].mxu0 %v793
      %v1626 = vpop.f32.mrb[0].mxu0
      %v1627 = vadd.f32 %v1466, %v1626
      %v1628 = vpop.f32.mrb[0].mxu0
      %v1629 = vpop.f32.mrb[0].mxu0
      %v1630 = vadd.f32 %v1469, %v1629
      %v1631 = vpop.f32.mrb[0].mxu0
      %1632 = vmatprep.mubr.bf16.mxu0 %v802
      %1633 = vmatmul.mubr.bf16.gmra.mrb[0].mxu0 %v801
      %v1634 = vpop.f32.mrb[0].mxu0
      %v1635 = vadd.f32 %v1474, %v1634
      %v1636 = vpop.f32.mrb[0].mxu0
      %v1637 = vpop.f32.mrb[0].mxu0
      %v1638 = vadd.f32 %v1477, %v1637
      %v1639 = vpop.f32.mrb[0].mxu0
      %1640 = vmatprep.mubr.bf16.mxu0 %v810
      %1641 = vmatmul.mubr.bf16.gmra.mrb[0].mxu0 %v809
      %v1642 = vpop.f32.mrb[0].mxu0
      %v1643 = vadd.f32 %v1482, %v1642
      %v1644 = vpop.f32.mrb[0].mxu0
      %v1645 = vpop.f32.mrb[0].mxu0
      %v1646 = vadd.f32 %v1485, %v1645
      %v1647 = vpop.f32.mrb[0].mxu0
      %1648 = vmatprep.mubr.bf16.mxu0 %v818
      %1649 = vmatmul.mubr.bf16.gmra.mrb[0].mxu0 %v817
      %v1650 = vpop.f32.mrb[0].mxu0
      %v1651 = vadd.f32 %v1490, %v1650
      %v1652 = vpop.f32.mrb[0].mxu0
      %v1653 = vpop.f32.mrb[0].mxu0
      %v1654 = vadd.f32 %v1493, %v1653
      %v1655 = vpop.f32.mrb[0].mxu0
      %1656 = vmatprep.mubr.bf16.mxu0 %v826
      %1657 = vmatmul.mubr.bf16.gmra.mrb[0].mxu0 %v825
      %v1658 = vpop.f32.mrb[0].mxu0
      %v1659 = vadd.f32 %v1498, %v1658
      %v1660 = vpop.f32.mrb[0].mxu0
      %v1661 = vpop.f32.mrb[0].mxu0
      %v1662 = vadd.f32 %v1501, %v1661
      %v1663 = vpop.f32.mrb[0].mxu0
      %1664 = vmatprep.mubr.bf16.mxu0 %v834
      %1665 = vmatmul.mubr.bf16.gmra.mrb[0].mxu0 %v833
      %v1666 = vpop.f32.mrb[0].mxu0
      %v1667 = vadd.f32 %v1506, %v1666
      %v1668 = vpop.f32.mrb[0].mxu0
      %v1669 = vpop.f32.mrb[0].mxu0
      %v1670 = vadd.f32 %v1509, %v1669
      %v1671 = vpop.f32.mrb[0].mxu0
      %1672 = vmatprep.mubr.bf16.mxu0 %v842
      %1673 = vmatmul.mubr.bf16.gmra.mrb[0].mxu0 %v841
      %v1674 = vpop.f32.mrb[0].mxu0
      %v1675 = vadd.f32 %v1514, %v1674
      %v1676 = vpop.f32.mrb[0].mxu0
      %v1677 = vpop.f32.mrb[0].mxu0
      %v1678 = vadd.f32 %v1517, %v1677
      %v1679 = vpop.f32.mrb[0].mxu0
      %1680 = vmatprep.mubr.bf16.mxu0 %v850
      %1681 = vmatmul.mubr.bf16.gmra.mrb[0].mxu0 %v849
      %v1682 = vpop.f32.mrb[0].mxu0
      %v1683 = vadd.f32 %v1522, %v1682
      %v1684 = vpop.f32.mrb[0].mxu0
      %v1685 = vpop.f32.mrb[0].mxu0
      %v1686 = vadd.f32 %v1525, %v1685
      %v1687 = vpop.f32.mrb[0].mxu0
      %1688 = vmatprep.mubr.bf16.mxu0 %v858
      %1689 = vmatmul.mubr.bf16.gmra.mrb[0].mxu0 %v857
      %v1690 = vpop.f32.mrb[0].mxu0
      %v1691 = vadd.f32 %v1530, %v1690
      %v1692 = vpop.f32.mrb[0].mxu0
      %v1693 = vpop.f32.mrb[0].mxu0
      %v1694 = vadd.f32 %v1533, %v1693
      %v1695 = vpop.f32.mrb[0].mxu0
      %1696 = vmatprep.mubr.bf16.mxu0 %v866
      %1697 = vmatmul.mubr.bf16.gmra.mrb[0].mxu0 %v865
      %v1698 = vpop.f32.mrb[0].mxu0
      %v1699 = vadd.f32 %v1538, %v1698
      %v1700 = vpop.f32.mrb[0].mxu0
      %v1701 = vpop.f32.mrb[0].mxu0
      %v1702 = vadd.f32 %v1541, %v1701
      %v1703 = vpop.f32.mrb[0].mxu0
      %1704 = vmatprep.mubr.bf16.mxu0 %v874
      %1705 = vmatmul.mubr.bf16.gmra.mrb[0].mxu0 %v873
      %v1706 = vpop.f32.mrb[0].mxu0
      %v1707 = vadd.f32 %v1546, %v1706
      %v1708 = vpop.f32.mrb[0].mxu0
      %v1709 = vpop.f32.mrb[0].mxu0
      %v1710 = vadd.f32 %v1549, %v1709
      %v1711 = vpop.f32.mrb[0].mxu0
      %1712 = vmatprep.mubr.bf16.mxu0 %v882
      %1713 = vmatmul.mubr.bf16.gmra.mrb[0].mxu0 %v881
      %v1714 = vpop.f32.mrb[0].mxu0
      %v1715 = vadd.f32 %v1554, %v1714
      %v1716 = vpop.f32.mrb[0].mxu0
      %v1717 = vpop.f32.mrb[0].mxu0
      %v1718 = vadd.f32 %v1557, %v1717
      %v1719 = vpop.f32.mrb[0].mxu0
      %1720 = vmatprep.mubr.bf16.mxu0 %v890
      %1721 = vmatmul.mubr.bf16.gmra.mrb[0].mxu0 %v889
      %v1722 = vpop.f32.mrb[0].mxu0
      %v1723 = vadd.f32 %v1562, %v1722
      %v1724 = vpop.f32.mrb[0].mxu0
      %v1725 = vpop.f32.mrb[0].mxu0
      %v1726 = vadd.f32 %v1565, %v1725
      %v1727 = vpop.f32.mrb[0].mxu0
      %1728 = vmatprep.mubr.bf16.mxu0 %v898
      %1729 = vmatmul.mubr.bf16.gmra.mrb[0].mxu0 %v897
      %v1730 = vpop.f32.mrb[0].mxu0
      %v1731 = vadd.f32 %v1570, %v1730
      %v1732 = vpop.f32.mrb[0].mxu0
      %v1733 = vpop.f32.mrb[0].mxu0
      %v1734 = vadd.f32 %v1573, %v1733
      %v1735 = vpop.f32.mrb[0].mxu0
      %1736 = vmatprep.mubr.bf16.mxu0 %v906
      %1737 = vmatmul.mubr.bf16.gmra.mrb[0].mxu0 %v905
      %v1738 = vpop.f32.mrb[0].mxu0
      %v1739 = vadd.f32 %v1578, %v1738
      %v1740 = vpop.f32.mrb[0].mxu0
      %v1741 = vpop.f32.mrb[0].mxu0
      %v1742 = vadd.f32 %v1581, %v1741
      %v1743 = vpop.f32.mrb[0].mxu0
      %1744 = vmatprep.mubr.bf16.mxu0 %v914
      %1745 = vmatmul.mubr.bf16.gmra.mrb[0].mxu0 %v913
      %v1746 = vpop.f32.mrb[0].mxu0
      %v1747 = vadd.f32 %v1586, %v1746
      %v1748 = vpop.f32.mrb[0].mxu0
      %v1749 = vpop.f32.mrb[0].mxu0
      %v1750 = vadd.f32 %v1589, %v1749
      %v1751 = vpop.f32.mrb[0].mxu0
      %1752 = vdwg.mxu0
      %1753 = vmatprep.subr.bf16.mxu0 0
      %1754 = vmatpush1.bf16.msra.mxu0 %v1335
      %1755 = vmatprep.subr.bf16.mxu0 0
      %1756 = vmatpush1.bf16.msra.mxu0 %v1336
      %1757 = vmatprep.subr.bf16.mxu0 0
      %1758 = vmatpush1.bf16.msra.mxu0 %v1337
      %1759 = vmatprep.subr.bf16.mxu0 0
      %1760 = vmatpush1.bf16.msra.mxu0 %v1338
      %1761 = vmatprep.subr.bf16.mxu0 0
      %1762 = vmatpush1.bf16.msra.mxu0 %v1339
      %1763 = vmatprep.subr.bf16.mxu0 0
      %1764 = vmatpush1.bf16.msra.mxu0 %v1340
      %1765 = vmatprep.subr.bf16.mxu0 0
      %1766 = vmatpush1.bf16.msra.mxu0 %v1341
      %1767 = vmatprep.subr.bf16.mxu0 0
      %1768 = vmatpush1.bf16.msra.mxu0 %v1342
      %1769 = vmatprep.subr.bf16.mxu0 0
      %1770 = vmatpush1.bf16.msra.mxu0 %v1343
      %1771 = vmatprep.subr.bf16.mxu0 0
      %1772 = vmatpush1.bf16.msra.mxu0 %v1344
      %1773 = vmatprep.subr.bf16.mxu0 0
      %1774 = vmatpush1.bf16.msra.mxu0 %v1345
      %1775 = vmatprep.subr.bf16.mxu0 0
      %1776 = vmatpush1.bf16.msra.mxu0 %v1346
      %1777 = vmatprep.subr.bf16.mxu0 0
      %1778 = vmatpush1.bf16.msra.mxu0 %v1347
      %1779 = vmatprep.subr.bf16.mxu0 0
      %1780 = vmatpush1.bf16.msra.mxu0 %v1348
      %1781 = vmatprep.subr.bf16.mxu0 0
      %1782 = vmatpush1.bf16.msra.mxu0 %v1349
      %1783 = vmatprep.subr.bf16.mxu0 0
      %1784 = vmatpush1.bf16.msra.mxu0 %v1350
      %1785 = vmatprep.mubr.bf16.mxu0 %v796
      %1786 = vmatmul.mubr.bf16.gmra.mrb[0].mxu0 %v795
      %v1787 = vpop.f32.mrb[0].mxu0
      %v1788 = vadd.f32 %v1627, %v1787
      %v1789 = vpop.f32.mrb[0].mxu0
      %v1790 = vpop.f32.mrb[0].mxu0
      %v1791 = vadd.f32 %v1630, %v1790
      %v1792 = vpop.f32.mrb[0].mxu0
      %1793 = vmatprep.mubr.bf16.mxu0 %v804
      %1794 = vmatmul.mubr.bf16.gmra.mrb[0].mxu0 %v803
      %v1795 = vpop.f32.mrb[0].mxu0
      %v1796 = vadd.f32 %v1635, %v1795
      %v1797 = vpop.f32.mrb[0].mxu0
      %v1798 = vpop.f32.mrb[0].mxu0
      %v1799 = vadd.f32 %v1638, %v1798
      %v1800 = vpop.f32.mrb[0].mxu0
      %1801 = vmatprep.mubr.bf16.mxu0 %v812
      %1802 = vmatmul.mubr.bf16.gmra.mrb[0].mxu0 %v811
      %v1803 = vpop.f32.mrb[0].mxu0
      %v1804 = vadd.f32 %v1643, %v1803
      %v1805 = vpop.f32.mrb[0].mxu0
      %v1806 = vpop.f32.mrb[0].mxu0
      %v1807 = vadd.f32 %v1646, %v1806
      %v1808 = vpop.f32.mrb[0].mxu0
      %1809 = vmatprep.mubr.bf16.mxu0 %v820
      %1810 = vmatmul.mubr.bf16.gmra.mrb[0].mxu0 %v819
      %v1811 = vpop.f32.mrb[0].mxu0
      %v1812 = vadd.f32 %v1651, %v1811
      %v1813 = vpop.f32.mrb[0].mxu0
      %v1814 = vpop.f32.mrb[0].mxu0
      %v1815 = vadd.f32 %v1654, %v1814
      %v1816 = vpop.f32.mrb[0].mxu0
      %1817 = vmatprep.mubr.bf16.mxu0 %v828
      %1818 = vmatmul.mubr.bf16.gmra.mrb[0].mxu0 %v827
      %v1819 = vpop.f32.mrb[0].mxu0
      %v1820 = vadd.f32 %v1659, %v1819
      %v1821 = vpop.f32.mrb[0].mxu0
      %v1822 = vpop.f32.mrb[0].mxu0
      %v1823 = vadd.f32 %v1662, %v1822
      %v1824 = vpop.f32.mrb[0].mxu0
      %1825 = vmatprep.mubr.bf16.mxu0 %v836
      %1826 = vmatmul.mubr.bf16.gmra.mrb[0].mxu0 %v835
      %v1827 = vpop.f32.mrb[0].mxu0
      %v1828 = vadd.f32 %v1667, %v1827
      %v1829 = vpop.f32.mrb[0].mxu0
      %v1830 = vpop.f32.mrb[0].mxu0
      %v1831 = vadd.f32 %v1670, %v1830
      %v1832 = vpop.f32.mrb[0].mxu0
      %1833 = vmatprep.mubr.bf16.mxu0 %v844
      %1834 = vmatmul.mubr.bf16.gmra.mrb[0].mxu0 %v843
      %v1835 = vpop.f32.mrb[0].mxu0
      %v1836 = vadd.f32 %v1675, %v1835
      %v1837 = vpop.f32.mrb[0].mxu0
      %v1838 = vpop.f32.mrb[0].mxu0
      %v1839 = vadd.f32 %v1678, %v1838
      %v1840 = vpop.f32.mrb[0].mxu0
      %1841 = vmatprep.mubr.bf16.mxu0 %v852
      %1842 = vmatmul.mubr.bf16.gmra.mrb[0].mxu0 %v851
      %v1843 = vpop.f32.mrb[0].mxu0
      %v1844 = vadd.f32 %v1683, %v1843
      %v1845 = vpop.f32.mrb[0].mxu0
      %v1846 = vpop.f32.mrb[0].mxu0
      %v1847 = vadd.f32 %v1686, %v1846
      %v1848 = vpop.f32.mrb[0].mxu0
      %1849 = vmatprep.mubr.bf16.mxu0 %v860
      %1850 = vmatmul.mubr.bf16.gmra.mrb[0].mxu0 %v859
      %v1851 = vpop.f32.mrb[0].mxu0
      %v1852 = vadd.f32 %v1691, %v1851
      %v1853 = vpop.f32.mrb[0].mxu0
      %v1854 = vpop.f32.mrb[0].mxu0
      %v1855 = vadd.f32 %v1694, %v1854
      %v1856 = vpop.f32.mrb[0].mxu0
      %1857 = vmatprep.mubr.bf16.mxu0 %v868
      %1858 = vmatmul.mubr.bf16.gmra.mrb[0].mxu0 %v867
      %v1859 = vpop.f32.mrb[0].mxu0
      %v1860 = vadd.f32 %v1699, %v1859
      %v1861 = vpop.f32.mrb[0].mxu0
      %v1862 = vpop.f32.mrb[0].mxu0
      %v1863 = vadd.f32 %v1702, %v1862
      %v1864 = vpop.f32.mrb[0].mxu0
      %1865 = vmatprep.mubr.bf16.mxu0 %v876
      %1866 = vmatmul.mubr.bf16.gmra.mrb[0].mxu0 %v875
      %v1867 = vpop.f32.mrb[0].mxu0
      %v1868 = vadd.f32 %v1707, %v1867
      %v1869 = vpop.f32.mrb[0].mxu0
      %v1870 = vpop.f32.mrb[0].mxu0
      %v1871 = vadd.f32 %v1710, %v1870
      %v1872 = vpop.f32.mrb[0].mxu0
      %1873 = vmatprep.mubr.bf16.mxu0 %v884
      %1874 = vmatmul.mubr.bf16.gmra.mrb[0].mxu0 %v883
      %v1875 = vpop.f32.mrb[0].mxu0
      %v1876 = vadd.f32 %v1715, %v1875
      %v1877 = vpop.f32.mrb[0].mxu0
      %v1878 = vpop.f32.mrb[0].mxu0
      %v1879 = vadd.f32 %v1718, %v1878
      %v1880 = vpop.f32.mrb[0].mxu0
      %1881 = vmatprep.mubr.bf16.mxu0 %v892
      %1882 = vmatmul.mubr.bf16.gmra.mrb[0].mxu0 %v891
      %v1883 = vpop.f32.mrb[0].mxu0
      %v1884 = vadd.f32 %v1723, %v1883
      %v1885 = vpop.f32.mrb[0].mxu0
      %v1886 = vpop.f32.mrb[0].mxu0
      %v1887 = vadd.f32 %v1726, %v1886
      %v1888 = vpop.f32.mrb[0].mxu0
      %1889 = vmatprep.mubr.bf16.mxu0 %v900
      %1890 = vmatmul.mubr.bf16.gmra.mrb[0].mxu0 %v899
      %v1891 = vpop.f32.mrb[0].mxu0
      %v1892 = vadd.f32 %v1731, %v1891
      %v1893 = vpop.f32.mrb[0].mxu0
      %v1894 = vpop.f32.mrb[0].mxu0
      %v1895 = vadd.f32 %v1734, %v1894
      %v1896 = vpop.f32.mrb[0].mxu0
      %1897 = vmatprep.mubr.bf16.mxu0 %v908
      %1898 = vmatmul.mubr.bf16.gmra.mrb[0].mxu0 %v907
      %v1899 = vpop.f32.mrb[0].mxu0
      %v1900 = vadd.f32 %v1739, %v1899
      %v1901 = vpop.f32.mrb[0].mxu0
      %v1902 = vpop.f32.mrb[0].mxu0
      %v1903 = vadd.f32 %v1742, %v1902
      %v1904 = vpop.f32.mrb[0].mxu0
      %1905 = vmatprep.mubr.bf16.mxu0 %v916
      %1906 = vmatmul.mubr.bf16.gmra.mrb[0].mxu0 %v915
      %v1907 = vpop.f32.mrb[0].mxu0
      %v1908 = vadd.f32 %v1747, %v1907
      %v1909 = vpop.f32.mrb[0].mxu0
      %v1910 = vpop.f32.mrb[0].mxu0
      %v1911 = vadd.f32 %v1750, %v1910
      %v1912 = vpop.f32.mrb[0].mxu0
      %1913 = vdwg.mxu0
      %1914 = vmatprep.subr.bf16.mxu0 0
      %1915 = vmatpush1.bf16.msra.mxu0 %v1351
      %1916 = vmatprep.subr.bf16.mxu0 0
      %1917 = vmatpush1.bf16.msra.mxu0 %v1352
      %1918 = vmatprep.subr.bf16.mxu0 0
      %1919 = vmatpush1.bf16.msra.mxu0 %v1353
      %1920 = vmatprep.subr.bf16.mxu0 0
      %1921 = vmatpush1.bf16.msra.mxu0 %v1354
      %1922 = vmatprep.subr.bf16.mxu0 0
      %1923 = vmatpush1.bf16.msra.mxu0 %v1355
      %1924 = vmatprep.subr.bf16.mxu0 0
      %1925 = vmatpush1.bf16.msra.mxu0 %v1356
      %1926 = vmatprep.subr.bf16.mxu0 0
      %1927 = vmatpush1.bf16.msra.mxu0 %v1357
      %1928 = vmatprep.subr.bf16.mxu0 0
      %1929 = vmatpush1.bf16.msra.mxu0 %v1358
      %1930 = vmatprep.subr.bf16.mxu0 0
      %1931 = vmatpush1.bf16.msra.mxu0 %v1359
      %1932 = vmatprep.subr.bf16.mxu0 0
      %1933 = vmatpush1.bf16.msra.mxu0 %v1360
      %1934 = vmatprep.subr.bf16.mxu0 0
      %1935 = vmatpush1.bf16.msra.mxu0 %v1361
      %1936 = vmatprep.subr.bf16.mxu0 0
      %1937 = vmatpush1.bf16.msra.mxu0 %v1362
      %1938 = vmatprep.subr.bf16.mxu0 0
      %1939 = vmatpush1.bf16.msra.mxu0 %v1363
      %1940 = vmatprep.subr.bf16.mxu0 0
      %1941 = vmatpush1.bf16.msra.mxu0 %v1364
      %1942 = vmatprep.subr.bf16.mxu0 0
      %1943 = vmatpush1.bf16.msra.mxu0 %v1365
      %1944 = vmatprep.subr.bf16.mxu0 0
      %1945 = vmatpush1.bf16.msra.mxu0 %v1366
      %1946 = vmatprep.mubr.bf16.mxu0 %v798
      %1947 = vmatmul.mubr.bf16.gmra.mrb[0].mxu0 %v797
      %v1948 = vpop.f32.mrb[0].mxu0
      %v1949 = vadd.f32 %v1788, %v1948
      %v1950 = vpop.f32.mrb[0].mxu0
      %v1951 = vpop.f32.mrb[0].mxu0
      %v1952 = vadd.f32 %v1791, %v1951
      %v1953 = vpop.f32.mrb[0].mxu0
      %1954 = vmatprep.mubr.bf16.mxu0 %v806
      %1955 = vmatmul.mubr.bf16.gmra.mrb[0].mxu0 %v805
      %v1956 = vpop.f32.mrb[0].mxu0
      %v1957 = vadd.f32 %v1796, %v1956
      %v1958 = vpop.f32.mrb[0].mxu0
      %v1959 = vpop.f32.mrb[0].mxu0
      %v1960 = vadd.f32 %v1799, %v1959
      %v1961 = vpop.f32.mrb[0].mxu0
      %1962 = vmatprep.mubr.bf16.mxu0 %v814
      %1963 = vmatmul.mubr.bf16.gmra.mrb[0].mxu0 %v813
      %v1964 = vpop.f32.mrb[0].mxu0
      %v1965 = vadd.f32 %v1804, %v1964
      %v1966 = vpop.f32.mrb[0].mxu0
      %v1967 = vpop.f32.mrb[0].mxu0
      %v1968 = vadd.f32 %v1807, %v1967
      %v1969 = vpop.f32.mrb[0].mxu0
      %1970 = vmatprep.mubr.bf16.mxu0 %v822
      %1971 = vmatmul.mubr.bf16.gmra.mrb[0].mxu0 %v821
      %v1972 = vpop.f32.mrb[0].mxu0
      %v1973 = vadd.f32 %v1812, %v1972
      %v1974 = vpop.f32.mrb[0].mxu0
      %v1975 = vpop.f32.mrb[0].mxu0
      %v1976 = vadd.f32 %v1815, %v1975
      %v1977 = vpop.f32.mrb[0].mxu0
      %1978 = vmatprep.mubr.bf16.mxu0 %v830
      %1979 = vmatmul.mubr.bf16.gmra.mrb[0].mxu0 %v829
      %v1980 = vpop.f32.mrb[0].mxu0
      %v1981 = vadd.f32 %v1820, %v1980
      %v1982 = vpop.f32.mrb[0].mxu0
      %v1983 = vpop.f32.mrb[0].mxu0
      %v1984 = vadd.f32 %v1823, %v1983
      %v1985 = vpop.f32.mrb[0].mxu0
      %1986 = vmatprep.mubr.bf16.mxu0 %v838
      %1987 = vmatmul.mubr.bf16.gmra.mrb[0].mxu0 %v837
      %v1988 = vpop.f32.mrb[0].mxu0
      %v1989 = vadd.f32 %v1828, %v1988
      %v1990 = vpop.f32.mrb[0].mxu0
      %v1991 = vpop.f32.mrb[0].mxu0
      %v1992 = vadd.f32 %v1831, %v1991
      %v1993 = vpop.f32.mrb[0].mxu0
      %1994 = vmatprep.mubr.bf16.mxu0 %v846
      %1995 = vmatmul.mubr.bf16.gmra.mrb[0].mxu0 %v845
      %v1996 = vpop.f32.mrb[0].mxu0
      %v1997 = vadd.f32 %v1836, %v1996
      %v1998 = vpop.f32.mrb[0].mxu0
      %v1999 = vpop.f32.mrb[0].mxu0
      %v2000 = vadd.f32 %v1839, %v1999
      %v2001 = vpop.f32.mrb[0].mxu0
      %2002 = vmatprep.mubr.bf16.mxu0 %v854
      %2003 = vmatmul.mubr.bf16.gmra.mrb[0].mxu0 %v853
      %v2004 = vpop.f32.mrb[0].mxu0
      %v2005 = vadd.f32 %v1844, %v2004
      %v2006 = vpop.f32.mrb[0].mxu0
      %v2007 = vpop.f32.mrb[0].mxu0
      %v2008 = vadd.f32 %v1847, %v2007
      %v2009 = vpop.f32.mrb[0].mxu0
      %2010 = vmatprep.mubr.bf16.mxu0 %v862
      %2011 = vmatmul.mubr.bf16.gmra.mrb[0].mxu0 %v861
      %v2012 = vpop.f32.mrb[0].mxu0
      %v2013 = vadd.f32 %v1852, %v2012
      %v2014 = vpop.f32.mrb[0].mxu0
      %v2015 = vpop.f32.mrb[0].mxu0
      %v2016 = vadd.f32 %v1855, %v2015
      %v2017 = vpop.f32.mrb[0].mxu0
      %2018 = vmatprep.mubr.bf16.mxu0 %v870
      %2019 = vmatmul.mubr.bf16.gmra.mrb[0].mxu0 %v869
      %v2020 = vpop.f32.mrb[0].mxu0
      %v2021 = vadd.f32 %v1860, %v2020
      %v2022 = vpop.f32.mrb[0].mxu0
      %v2023 = vpop.f32.mrb[0].mxu0
      %v2024 = vadd.f32 %v1863, %v2023
      %v2025 = vpop.f32.mrb[0].mxu0
      %2026 = vmatprep.mubr.bf16.mxu0 %v878
      %2027 = vmatmul.mubr.bf16.gmra.mrb[0].mxu0 %v877
      %v2028 = vpop.f32.mrb[0].mxu0
      %v2029 = vadd.f32 %v1868, %v2028
      %v2030 = vpop.f32.mrb[0].mxu0
      %v2031 = vpop.f32.mrb[0].mxu0
      %v2032 = vadd.f32 %v1871, %v2031
      %v2033 = vpop.f32.mrb[0].mxu0
      %2034 = vmatprep.mubr.bf16.mxu0 %v886
      %2035 = vmatmul.mubr.bf16.gmra.mrb[0].mxu0 %v885
      %v2036 = vpop.f32.mrb[0].mxu0
      %v2037 = vadd.f32 %v1876, %v2036
      %v2038 = vpop.f32.mrb[0].mxu0
      %v2039 = vpop.f32.mrb[0].mxu0
      %v2040 = vadd.f32 %v1879, %v2039
      %v2041 = vpop.f32.mrb[0].mxu0
      %2042 = vmatprep.mubr.bf16.mxu0 %v894
      %2043 = vmatmul.mubr.bf16.gmra.mrb[0].mxu0 %v893
      %v2044 = vpop.f32.mrb[0].mxu0
      %v2045 = vadd.f32 %v1884, %v2044
      %v2046 = vpop.f32.mrb[0].mxu0
      %v2047 = vpop.f32.mrb[0].mxu0
      %v2048 = vadd.f32 %v1887, %v2047
      %v2049 = vpop.f32.mrb[0].mxu0
      %2050 = vmatprep.mubr.bf16.mxu0 %v902
      %2051 = vmatmul.mubr.bf16.gmra.mrb[0].mxu0 %v901
      %v2052 = vpop.f32.mrb[0].mxu0
      %v2053 = vadd.f32 %v1892, %v2052
      %v2054 = vpop.f32.mrb[0].mxu0
      %v2055 = vpop.f32.mrb[0].mxu0
      %v2056 = vadd.f32 %v1895, %v2055
      %v2057 = vpop.f32.mrb[0].mxu0
      %2058 = vmatprep.mubr.bf16.mxu0 %v910
      %2059 = vmatmul.mubr.bf16.gmra.mrb[0].mxu0 %v909
      %v2060 = vpop.f32.mrb[0].mxu0
      %v2061 = vadd.f32 %v1900, %v2060
      %v2062 = vpop.f32.mrb[0].mxu0
      %v2063 = vpop.f32.mrb[0].mxu0
      %v2064 = vadd.f32 %v1903, %v2063
      %v2065 = vpop.f32.mrb[0].mxu0
      %2066 = vmatprep.mubr.bf16.mxu0 %v918
      %2067 = vmatmul.mubr.bf16.gmra.mrb[0].mxu0 %v917
      %v2068 = vpop.f32.mrb[0].mxu0
      %v2069 = vadd.f32 %v1908, %v2068
      %v2070 = vpop.f32.mrb[0].mxu0
      %v2071 = vpop.f32.mrb[0].mxu0
      %v2072 = vadd.f32 %v1911, %v2071
      %v2073 = vpop.f32.mrb[0].mxu0
      %2074 = vdwg.mxu0
      %v2075 = vadd.f32 %v1949, %v1952
      %v2076 = vadd.f32 %v2075, %v1957
      %v2077 = vadd.f32 %v2076, %v1960
      %v2078 = vadd.f32 %v2077, %v1965
      %v2079 = vadd.f32 %v2078, %v1968
      %v2080 = vadd.f32 %v2079, %v1973
      %v2081 = vadd.f32 %v2080, %v1976
      %v2082 = vadd.f32 %v2081, %v1981
      %v2083 = vadd.f32 %v2082, %v1984
      %v2084 = vadd.f32 %v2083, %v1989
      %v2085 = vadd.f32 %v2084, %v1992
      %v2086 = vadd.f32 %v2085, %v1997
      %v2087 = vadd.f32 %v2086, %v2000
      %v2088 = vadd.f32 %v2087, %v2005
      %v2089 = vadd.f32 %v2088, %v2008
      %v2090 = vadd.f32 %v2089, %v2013
      %v2091 = vadd.f32 %v2090, %v2016
      %v2092 = vadd.f32 %v2091, %v2021
      %v2093 = vadd.f32 %v2092, %v2024
      %v2094 = vadd.f32 %v2093, %v2029
      %v2095 = vadd.f32 %v2094, %v2032
      %v2096 = vadd.f32 %v2095, %v2037
      %v2097 = vadd.f32 %v2096, %v2040
      %v2098 = vadd.f32 %v2097, %v2045
      %v2099 = vadd.f32 %v2098, %v2048
      %v2100 = vadd.f32 %v2099, %v2053
      %v2101 = vadd.f32 %v2100, %v2056
      %v2102 = vadd.f32 %v2101, %v2061
      %v2103 = vadd.f32 %v2102, %v2064
      %v2104 = vadd.f32 %v2103, %v2069
      %v2105 = vadd.f32 %v2104, %v2072
      %v2106 = vrot.slane %v2105, 4
      %v2107 = vadd.f32 %v2105, %v2106
      %v2108 = vrot.slane %v2107, 2
      %v2109 = vadd.f32 %v2107, %v2108
      %v2110 = vrot.slane %v2109, 1
      %v2111 = vadd.f32 %v2109, %v2110
      %v2112 = vmul.f32 %v1949, %v1949
      %v2113 = vmul.f32 %v1952, %v1952
      %v2114 = vmul.f32 %v1957, %v1957
      %v2115 = vmul.f32 %v1960, %v1960
      %v2116 = vmul.f32 %v1965, %v1965
      %v2117 = vmul.f32 %v1968, %v1968
      %v2118 = vmul.f32 %v1973, %v1973
      %v2119 = vmul.f32 %v1976, %v1976
      %v2120 = vmul.f32 %v1981, %v1981
      %v2121 = vmul.f32 %v1984, %v1984
      %v2122 = vmul.f32 %v1989, %v1989
      %v2123 = vmul.f32 %v1992, %v1992
      %v2124 = vmul.f32 %v1997, %v1997
      %v2125 = vmul.f32 %v2000, %v2000
      %v2126 = vmul.f32 %v2005, %v2005
      %v2127 = vmul.f32 %v2008, %v2008
      %v2128 = vmul.f32 %v2013, %v2013
      %v2129 = vmul.f32 %v2016, %v2016
      %v2130 = vmul.f32 %v2021, %v2021
      %v2131 = vmul.f32 %v2024, %v2024
      %v2132 = vmul.f32 %v2029, %v2029
      %v2133 = vmul.f32 %v2032, %v2032
      %v2134 = vmul.f32 %v2037, %v2037
      %v2135 = vmul.f32 %v2040, %v2040
      %v2136 = vmul.f32 %v2045, %v2045
      %v2137 = vmul.f32 %v2048, %v2048
      %v2138 = vmul.f32 %v2053, %v2053
      %v2139 = vmul.f32 %v2056, %v2056
      %v2140 = vmul.f32 %v2061, %v2061
      %v2141 = vmul.f32 %v2064, %v2064
      %v2142 = vmul.f32 %v2069, %v2069
      %v2143 = vmul.f32 %v2072, %v2072
      %v2144 = vadd.f32 %v2112, %v2113
      %v2145 = vadd.f32 %v2144, %v2114
      %v2146 = vadd.f32 %v2145, %v2115
      %v2147 = vadd.f32 %v2146, %v2116
      %v2148 = vadd.f32 %v2147, %v2117
      %v2149 = vadd.f32 %v2148, %v2118
      %v2150 = vadd.f32 %v2149, %v2119
      %v2151 = vadd.f32 %v2150, %v2120
      %v2152 = vadd.f32 %v2151, %v2121
      %v2153 = vadd.f32 %v2152, %v2122
      %v2154 = vadd.f32 %v2153, %v2123
      %v2155 = vadd.f32 %v2154, %v2124
      %v2156 = vadd.f32 %v2155, %v2125
      %v2157 = vadd.f32 %v2156, %v2126
      %v2158 = vadd.f32 %v2157, %v2127
      %v2159 = vadd.f32 %v2158, %v2128
      %v2160 = vadd.f32 %v2159, %v2129
      %v2161 = vadd.f32 %v2160, %v2130
      %v2162 = vadd.f32 %v2161, %v2131
      %v2163 = vadd.f32 %v2162, %v2132
      %v2164 = vadd.f32 %v2163, %v2133
      %v2165 = vadd.f32 %v2164, %v2134
      %v2166 = vadd.f32 %v2165, %v2135
      %v2167 = vadd.f32 %v2166, %v2136
      %v2168 = vadd.f32 %v2167, %v2137
      %v2169 = vadd.f32 %v2168, %v2138
      %v2170 = vadd.f32 %v2169, %v2139
      %v2171 = vadd.f32 %v2170, %v2140
      %v2172 = vadd.f32 %v2171, %v2141
      %v2173 = vadd.f32 %v2172, %v2142
      %v2174 = vadd.f32 %v2173, %v2143
      %v2175 = vrot.slane %v2174, 4
      %v2176 = vadd.f32 %v2174, %v2175
      %v2177 = vrot.slane %v2176, 2
      %v2178 = vadd.f32 %v2176, %v2177
      %v2179 = vrot.slane %v2178, 1
      %v2180 = vadd.f32 %v2178, %v2179
      %v2181 = vmul.f32 %v2111, 0.00390625
      %v2182 = vmul.f32 %v2180, 0.00390625
      %v2183 = vmul.f32 %v2181, %v2181
      %v2184 = vsub.f32 %v2182, %v2183
      %v2185 = vmax.f32 %v2184, 0.0
      %v2186 = vsub.f32 %v1949, %v2181
      %v2187 = vsub.f32 %v1952, %v2181
      %v2188 = vsub.f32 %v1957, %v2181
      %v2189 = vsub.f32 %v1960, %v2181
      %v2190 = vsub.f32 %v1965, %v2181
      %v2191 = vsub.f32 %v1968, %v2181
      %v2192 = vsub.f32 %v1973, %v2181
      %v2193 = vsub.f32 %v1976, %v2181
      %v2194 = vsub.f32 %v1981, %v2181
      %v2195 = vsub.f32 %v1984, %v2181
      %v2196 = vsub.f32 %v1989, %v2181
      %v2197 = vsub.f32 %v1992, %v2181
      %v2198 = vsub.f32 %v1997, %v2181
      %v2199 = vsub.f32 %v2000, %v2181
      %v2200 = vsub.f32 %v2005, %v2181
      %v2201 = vsub.f32 %v2008, %v2181
      %v2202 = vsub.f32 %v2013, %v2181
      %v2203 = vsub.f32 %v2016, %v2181
      %v2204 = vsub.f32 %v2021, %v2181
      %v2205 = vsub.f32 %v2024, %v2181
      %v2206 = vsub.f32 %v2029, %v2181
      %v2207 = vsub.f32 %v2032, %v2181
      %v2208 = vsub.f32 %v2037, %v2181
      %v2209 = vsub.f32 %v2040, %v2181
      %v2210 = vsub.f32 %v2045, %v2181
      %v2211 = vsub.f32 %v2048, %v2181
      %v2212 = vsub.f32 %v2053, %v2181
      %v2213 = vsub.f32 %v2056, %v2181
      %v2214 = vsub.f32 %v2061, %v2181
      %v2215 = vsub.f32 %v2064, %v2181
      %v2216 = vsub.f32 %v2069, %v2181
      %v2217 = vsub.f32 %v2072, %v2181
      %v2218 = vadd.f32 %v2185, 1e-05
      %v2219 = vrsqrt.pop %v2218
      %v2220 = vmul.f32 %v2186, %v2219
      %v2221 = vmul.f32 %v2187, %v2219
      %v2222 = vmul.f32 %v2188, %v2219
      %v2223 = vmul.f32 %v2189, %v2219
      %v2224 = vmul.f32 %v2190, %v2219
      %v2225 = vmul.f32 %v2191, %v2219
      %v2226 = vmul.f32 %v2192, %v2219
      %v2227 = vmul.f32 %v2193, %v2219
      %v2228 = vmul.f32 %v2194, %v2219
      %v2229 = vmul.f32 %v2195, %v2219
      %v2230 = vmul.f32 %v2196, %v2219
      %v2231 = vmul.f32 %v2197, %v2219
      %v2232 = vmul.f32 %v2198, %v2219
      %v2233 = vmul.f32 %v2199, %v2219
      %v2234 = vmul.f32 %v2200, %v2219
      %v2235 = vmul.f32 %v2201, %v2219
      %v2236 = vmul.f32 %v2202, %v2219
      %v2237 = vmul.f32 %v2203, %v2219
      %v2238 = vmul.f32 %v2204, %v2219
      %v2239 = vmul.f32 %v2205, %v2219
      %v2240 = vmul.f32 %v2206, %v2219
      %v2241 = vmul.f32 %v2207, %v2219
      %v2242 = vmul.f32 %v2208, %v2219
      %v2243 = vmul.f32 %v2209, %v2219
      %v2244 = vmul.f32 %v2210, %v2219
      %v2245 = vmul.f32 %v2211, %v2219
      %v2246 = vmul.f32 %v2212, %v2219
      %v2247 = vmul.f32 %v2213, %v2219
      %v2248 = vmul.f32 %v2214, %v2219
      %v2249 = vmul.f32 %v2215, %v2219
      %v2250 = vmul.f32 %v2216, %v2219
      %v2251 = vmul.f32 %v2217, %v2219
      %vm2252 = vcmp.gt.f32.partialorder %v2220, 0.0
      %vm2253 = vcmp.gt.f32.partialorder %v2221, 0.0
      %vm2254 = vcmp.gt.f32.partialorder %v2222, 0.0
      %vm2255 = vcmp.gt.f32.partialorder %v2223, 0.0
      %vm2256 = vcmp.gt.f32.partialorder %v2224, 0.0
      %vm2257 = vcmp.gt.f32.partialorder %v2225, 0.0
      %vm2258 = vcmp.gt.f32.partialorder %v2226, 0.0
      %vm2259 = vcmp.gt.f32.partialorder %v2227, 0.0
      %vm2260 = vcmp.gt.f32.partialorder %v2228, 0.0
      %vm2261 = vcmp.gt.f32.partialorder %v2229, 0.0
      %vm2262 = vcmp.gt.f32.partialorder %v2230, 0.0
      %vm2263 = vcmp.gt.f32.partialorder %v2231, 0.0
      %vm2264 = vcmp.gt.f32.partialorder %v2232, 0.0
      %vm2265 = vcmp.gt.f32.partialorder %v2233, 0.0
      %vm2266 = vcmp.gt.f32.partialorder %v2234, 0.0
      %vm2267 = vcmp.gt.f32.partialorder %v2235, 0.0
      %vm2268 = vcmp.gt.f32.partialorder %v2236, 0.0
      %vm2269 = vcmp.gt.f32.partialorder %v2237, 0.0
      %vm2270 = vcmp.gt.f32.partialorder %v2238, 0.0
      %vm2271 = vcmp.gt.f32.partialorder %v2239, 0.0
      %vm2272 = vcmp.gt.f32.partialorder %v2240, 0.0
      %vm2273 = vcmp.gt.f32.partialorder %v2241, 0.0
      %vm2274 = vcmp.gt.f32.partialorder %v2242, 0.0
      %vm2275 = vcmp.gt.f32.partialorder %v2243, 0.0
      %vm2276 = vcmp.gt.f32.partialorder %v2244, 0.0
      %vm2277 = vcmp.gt.f32.partialorder %v2245, 0.0
      %vm2278 = vcmp.gt.f32.partialorder %v2246, 0.0
      %vm2279 = vcmp.gt.f32.partialorder %v2247, 0.0
      %vm2280 = vcmp.gt.f32.partialorder %v2248, 0.0
      %vm2281 = vcmp.gt.f32.partialorder %v2249, 0.0
      %vm2282 = vcmp.gt.f32.partialorder %v2250, 0.0
      %vm2283 = vcmp.gt.f32.partialorder %v2251, 0.0
      %v2284 = vmul.f32 %v2220, 0.2
      %v2285 = vmul.f32 %v2221, 0.2
      %v2286 = vmul.f32 %v2222, 0.2
      %v2287 = vmul.f32 %v2223, 0.2
      %v2288 = vmul.f32 %v2224, 0.2
      %v2289 = vmul.f32 %v2225, 0.2
      %v2290 = vmul.f32 %v2226, 0.2
      %v2291 = vmul.f32 %v2227, 0.2
      %v2292 = vmul.f32 %v2228, 0.2
      %v2293 = vmul.f32 %v2229, 0.2
      %v2294 = vmul.f32 %v2230, 0.2
      %v2295 = vmul.f32 %v2231, 0.2
      %v2296 = vmul.f32 %v2232, 0.2
      %v2297 = vmul.f32 %v2233, 0.2
      %v2298 = vmul.f32 %v2234, 0.2
      %v2299 = vmul.f32 %v2235, 0.2
      %v2300 = vmul.f32 %v2236, 0.2
      %v2301 = vmul.f32 %v2237, 0.2
      %v2302 = vmul.f32 %v2238, 0.2
      %v2303 = vmul.f32 %v2239, 0.2
      %v2304 = vmul.f32 %v2240, 0.2
      %v2305 = vmul.f32 %v2241, 0.2
      %v2306 = vmul.f32 %v2242, 0.2
      %v2307 = vmul.f32 %v2243, 0.2
      %v2308 = vmul.f32 %v2244, 0.2
      %v2309 = vmul.f32 %v2245, 0.2
      %v2310 = vmul.f32 %v2246, 0.2
      %v2311 = vmul.f32 %v2247, 0.2
      %v2312 = vmul.f32 %v2248, 0.2
      %v2313 = vmul.f32 %v2249, 0.2
      %v2314 = vmul.f32 %v2250, 0.2
      %v2315 = vmul.f32 %v2251, 0.2
      %v2316 = vsel %vm2252, %v2220, %v2284
      %v2317 = vsel %vm2253, %v2221, %v2285
      %v2318 = vsel %vm2254, %v2222, %v2286
      %v2319 = vsel %vm2255, %v2223, %v2287
      %v2320 = vsel %vm2256, %v2224, %v2288
      %v2321 = vsel %vm2257, %v2225, %v2289
      %v2322 = vsel %vm2258, %v2226, %v2290
      %v2323 = vsel %vm2259, %v2227, %v2291
      %v2324 = vsel %vm2260, %v2228, %v2292
      %v2325 = vsel %vm2261, %v2229, %v2293
      %v2326 = vsel %vm2262, %v2230, %v2294
      %v2327 = vsel %vm2263, %v2231, %v2295
      %v2328 = vsel %vm2264, %v2232, %v2296
      %v2329 = vsel %vm2265, %v2233, %v2297
      %v2330 = vsel %vm2266, %v2234, %v2298
      %v2331 = vsel %vm2267, %v2235, %v2299
      %v2332 = vsel %vm2268, %v2236, %v2300
      %v2333 = vsel %vm2269, %v2237, %v2301
      %v2334 = vsel %vm2270, %v2238, %v2302
      %v2335 = vsel %vm2271, %v2239, %v2303
      %v2336 = vsel %vm2272, %v2240, %v2304
      %v2337 = vsel %vm2273, %v2241, %v2305
      %v2338 = vsel %vm2274, %v2242, %v2306
      %v2339 = vsel %vm2275, %v2243, %v2307
      %v2340 = vsel %vm2276, %v2244, %v2308
      %v2341 = vsel %vm2277, %v2245, %v2309
      %v2342 = vsel %vm2278, %v2246, %v2310
      %v2343 = vsel %vm2279, %v2247, %v2311
      %v2344 = vsel %vm2280, %v2248, %v2312
      %v2345 = vsel %vm2281, %v2249, %v2313
      %v2346 = vsel %vm2282, %v2250, %v2314
      %v2347 = vsel %vm2283, %v2251, %v2315
      %v2348 = vpack.c.bf16 %v2317, %v2316
      %v2349 = vpack.c.bf16 %v2319, %v2318
      %v2350 = vpack.c.bf16 %v2321, %v2320
      %v2351 = vpack.c.bf16 %v2323, %v2322
      %v2352 = vpack.c.bf16 %v2325, %v2324
      %v2353 = vpack.c.bf16 %v2327, %v2326
      %v2354 = vpack.c.bf16 %v2329, %v2328
      %v2355 = vpack.c.bf16 %v2331, %v2330
      %v2356 = vpack.c.bf16 %v2333, %v2332
      %v2357 = vpack.c.bf16 %v2335, %v2334
      %v2358 = vpack.c.bf16 %v2337, %v2336
      %v2359 = vpack.c.bf16 %v2339, %v2338
      %v2360 = vpack.c.bf16 %v2341, %v2340
      %v2361 = vpack.c.bf16 %v2343, %v2342
      %v2362 = vpack.c.bf16 %v2345, %v2344
      %v2363 = vpack.c.bf16 %v2347, %v2346
      %v2380 = vunpack.c.l.b16 %v2348
      %v2381 = vunpack.c.h.b16 %v2348
      %v2382 = vunpack.c.l.b16 %v2349
      %v2383 = vunpack.c.h.b16 %v2349
      %v2384 = vunpack.c.l.b16 %v2350
      %v2385 = vunpack.c.h.b16 %v2350
      %v2386 = vunpack.c.l.b16 %v2351
      %v2387 = vunpack.c.h.b16 %v2351
      %v2388 = vunpack.c.l.b16 %v2352
      %v2389 = vunpack.c.h.b16 %v2352
      %v2390 = vunpack.c.l.b16 %v2353
      %v2391 = vunpack.c.h.b16 %v2353
      %v2392 = vunpack.c.l.b16 %v2354
      %v2393 = vunpack.c.h.b16 %v2354
      %v2394 = vunpack.c.l.b16 %v2355
      %v2395 = vunpack.c.h.b16 %v2355
      %v2396 = vunpack.c.l.b16 %v2356
      %v2397 = vunpack.c.h.b16 %v2356
      %v2398 = vunpack.c.l.b16 %v2357
      %v2399 = vunpack.c.h.b16 %v2357
      %v2400 = vunpack.c.l.b16 %v2358
      %v2401 = vunpack.c.h.b16 %v2358
      %v2402 = vunpack.c.l.b16 %v2359
      %v2403 = vunpack.c.h.b16 %v2359
      %v2404 = vunpack.c.l.b16 %v2360
      %v2405 = vunpack.c.h.b16 %v2360
      %v2406 = vunpack.c.l.b16 %v2361
      %v2407 = vunpack.c.h.b16 %v2361
      %v2408 = vunpack.c.l.b16 %v2362
      %v2409 = vunpack.c.h.b16 %v2362
      %v2410 = vunpack.c.l.b16 %v2363
      %v2411 = vunpack.c.h.b16 %v2363
      %v2412 = vpack.c.b16 %v2380, %v2380
      %v2413 = vpack.c.b16 %v2381, %v2381
      %v2414 = vpack.c.b16 %v2382, %v2382
      %v2415 = vpack.c.b16 %v2383, %v2383
      %v2416 = vpack.c.b16 %v2384, %v2384
      %v2417 = vpack.c.b16 %v2385, %v2385
      %v2418 = vpack.c.b16 %v2386, %v2386
      %v2419 = vpack.c.b16 %v2387, %v2387
      %v2420 = vpack.c.b16 %v2388, %v2388
      %v2421 = vpack.c.b16 %v2389, %v2389
      %v2422 = vpack.c.b16 %v2390, %v2390
      %v2423 = vpack.c.b16 %v2391, %v2391
      %v2424 = vpack.c.b16 %v2392, %v2392
      %v2425 = vpack.c.b16 %v2393, %v2393
      %v2426 = vpack.c.b16 %v2394, %v2394
      %v2427 = vpack.c.b16 %v2395, %v2395
      %v2428 = vpack.c.b16 %v2396, %v2396
      %v2429 = vpack.c.b16 %v2397, %v2397
      %v2430 = vpack.c.b16 %v2398, %v2398
      %v2431 = vpack.c.b16 %v2399, %v2399
      %v2432 = vpack.c.b16 %v2400, %v2400
      %v2433 = vpack.c.b16 %v2401, %v2401
      %v2434 = vpack.c.b16 %v2402, %v2402
      %v2435 = vpack.c.b16 %v2403, %v2403
      %v2436 = vpack.c.b16 %v2404, %v2404
      %v2437 = vpack.c.b16 %v2405, %v2405
      %v2438 = vpack.c.b16 %v2406, %v2406
      %v2439 = vpack.c.b16 %v2407, %v2407
      %v2440 = vpack.c.b16 %v2408, %v2408
      %v2441 = vpack.c.b16 %v2409, %v2409
      %v2442 = vpack.c.b16 %v2410, %v2410
      %v2443 = vpack.c.b16 %v2411, %v2411
      %2476 = vst [vmem:[%s148] sm:$0xf] %v2412
      %2477 = vst [vmem:[%s148 + $0x4] sm:$0xf] %v2413
      %2478 = vst [vmem:[%s148 + $0x8] sm:$0xf] %v2414
      %2479 = vst [vmem:[%s148 + $0xc] sm:$0xf] %v2415
      %2480 = vst [vmem:[%s148 + $0x10] sm:$0xf] %v2416
      %2481 = vst [vmem:[%s148 + $0x14] sm:$0xf] %v2417
      %2482 = vst [vmem:[%s148 + $0x18] sm:$0xf] %v2418
      %2483 = vst [vmem:[%s148 + $0x1c] sm:$0xf] %v2419
      %2484 = vst [vmem:[%s148 + $0x20] sm:$0xf] %v2420
      %2485 = vst [vmem:[%s148 + $0x24] sm:$0xf] %v2421
      %2486 = vst [vmem:[%s148 + $0x28] sm:$0xf] %v2422
      %2487 = vst [vmem:[%s148 + $0x2c] sm:$0xf] %v2423
      %2488 = vst [vmem:[%s148 + $0x30] sm:$0xf] %v2424
      %2489 = vst [vmem:[%s148 + $0x34] sm:$0xf] %v2425
      %2490 = vst [vmem:[%s148 + $0x38] sm:$0xf] %v2426
      %2491 = vst [vmem:[%s148 + $0x3c] sm:$0xf] %v2427
      %2492 = vst [vmem:[%s148 + $0x40] sm:$0xf] %v2428
      %2493 = vst [vmem:[%s148 + $0x44] sm:$0xf] %v2429
      %2494 = vst [vmem:[%s148 + $0x48] sm:$0xf] %v2430
      %2495 = vst [vmem:[%s148 + $0x4c] sm:$0xf] %v2431
      %2496 = vst [vmem:[%s148 + $0x50] sm:$0xf] %v2432
      %2497 = vst [vmem:[%s148 + $0x54] sm:$0xf] %v2433
      %2498 = vst [vmem:[%s148 + $0x58] sm:$0xf] %v2434
      %2499 = vst [vmem:[%s148 + $0x5c] sm:$0xf] %v2435
      %2500 = vst [vmem:[%s148 + $0x60] sm:$0xf] %v2436
      %2501 = vst [vmem:[%s148 + $0x64] sm:$0xf] %v2437
      %2502 = vst [vmem:[%s148 + $0x68] sm:$0xf] %v2438
      %2503 = vst [vmem:[%s148 + $0x6c] sm:$0xf] %v2439
      %2504 = vst [vmem:[%s148 + $0x70] sm:$0xf] %v2440
      %2505 = vst [vmem:[%s148 + $0x74] sm:$0xf] %v2441
      %2506 = vst [vmem:[%s148 + $0x78] sm:$0xf] %v2442
      %2507 = vst [vmem:[%s148 + $0x7c] sm:$0xf] %v2443
      %s2508 = smul.u32 32, %s13
      %p2509 = scmp.lt.s32.totalorder %s2508, 63
      %s2510 = scalar_select %p2509, %s2508, 63
      %s2511 = smul.addr %s2510, 4
      %s2512 = scalar_lea.vmem %s2, %s2511
      // Predicated region
      $region29: #{discriminator_forward.6} parent=27 // pred_check
        %p2513 = pneg %p78
      $region30: #{discriminator_forward.6} parent=27 // pred_check_branch
        %2515 = sbr.rel (%p2513) target = $region32
      $region31: #{discriminator_forward.6} parent=27 // pred_region
        %s2516 = smul.u32 32, %s13
      $region32: #{discriminator_forward.6} parent=27 // pred_fallthru
        _
    $region28: #{discriminator_forward.6} parent=5 // pred_fallthru
      _
    %p2517 = scmp.le.s32.totalorder 2, %s8
    // Predicated region
    $region33: #{discriminator_forward.6} parent=5 // pred_check
      %p2518 = pneg %p2517
    $region34: #{discriminator_forward.6} parent=5 // pred_check_branch
      %2520 = sbr.rel (%p2518) target = $region36
    $region35: #{discriminator_forward.6} parent=5 // pred_region
      %s2521 = ssub.s32 %s8, 2
      // Predicated region
      $region37: #{discriminator_forward.6} parent=35 // pred_check
        %p2522 = pneg %p84
      $region38: #{discriminator_forward.6} parent=35 // pred_check_branch
        %2524 = sbr.rel (%p2522) target = $region40
      $region39: #{discriminator_forward.6} parent=35 // pred_region
        %s2525 = smul.u32 32, %s14
        %p2526 = scmp.lt.s32.totalorder %s2525, 63
        %s2527 = scalar_select %p2526, %s2525, 63
        %s2528 = smul.addr %s2527, 4
        %s2529 = scalar_lea.vmem %s2, %s2528
      $region40: #{discriminator_forward.6} parent=35 // pred_fallthru
        _
    $region36: #{discriminator_forward.6} parent=5 // pred_fallthru
      _
  $region6: #{discriminator_forward.6} parent=0 // loop_footer
    %s12 = sadd.s32 1, %s8
  $region7: #{discriminator_forward.6} parent=0 // loop_footer_branch
    %7 = sbr.rel target = $region3
  $region8: #{discriminator_forward.6} parent=0 // loop_exit
    _

// kernel: discriminator_forward.7
$region0: #{discriminator_forward.7}
  #allocation0 [shape = 'u32[]', space=smem, size = 0x4, offset = 0x4, fixed_abs, tag = 'smem constant byte address 0x4 - core index']
  #allocation1 [shape = 'u32[144,128]{1,0:T(1,128)}', space=vmem, size = 0x12000, scoped, tag = 'internal scratch']
  %s0 = inlined_call_operand.vmem [shape: bf16[128,512], index: 0, kind: input, shape index: {}]
  %s1 = inlined_call_operand.vmem [shape: bf16[512,128], index: 1, kind: input, shape index: {}]
  %s2 = inlined_call_operand.vmem [shape: bf16[128,128], index: 2, kind: output, shape index: {}]
  %s3 = sld [smem:[#allocation0]]
  $region18: #{discriminator_forward.7} parent=0
    _
  %s5 = ssub.s32 1, %s3
  %s6 = scalar_select 0, %s5, %s3
  // Predicated region
  $region2: #{discriminator_forward.7} parent=0 // pred_check
    _
  $region3: #{discriminator_forward.7} parent=0 // pred_check_branch
    %8 = sbr.rel (0) target = $region5
  $region4: #{discriminator_forward.7} parent=0 // pred_region
    _
  $region5: #{discriminator_forward.7} parent=0 // pred_fallthru
    _
  // Predicated region
  $region6: #{discriminator_forward.7} parent=0 // pred_check
    _
  $region7: #{discriminator_forward.7} parent=0 // pred_check_branch
    %10 = sbr.rel (0) target = $region9
  $region8: #{discriminator_forward.7} parent=0 // pred_region
    _
  $region9: #{discriminator_forward.7} parent=0 // pred_fallthru
    _
  %v12 = vld [vmem:[%s0] sm:$0xff]
  %v13 = vld [vmem:[%s0 + $0x8] sm:$0xff]
  %v14 = vld [vmem:[%s0 + $0x10] sm:$0xff]
  %v15 = vld [vmem:[%s0 + $0x18] sm:$0xff]
  %v16 = vld [vmem:[%s0 + $0x20] sm:$0xff]
  %v17 = vld [vmem:[%s0 + $0x28] sm:$0xff]
  %v18 = vld [vmem:[%s0 + $0x30] sm:$0xff]
  %v19 = vld [vmem:[%s0 + $0x38] sm:$0xff]
  %v20 = vld [vmem:[%s0 + $0x40] sm:$0xff]
  %v21 = vld [vmem:[%s0 + $0x48] sm:$0xff]
  %v22 = vld [vmem:[%s0 + $0x50] sm:$0xff]
  %v23 = vld [vmem:[%s0 + $0x58] sm:$0xff]
  %v24 = vld [vmem:[%s0 + $0x60] sm:$0xff]
  %v25 = vld [vmem:[%s0 + $0x68] sm:$0xff]
  %v26 = vld [vmem:[%s0 + $0x70] sm:$0xff]
  %v27 = vld [vmem:[%s0 + $0x78] sm:$0xff]
  %v28 = vld [vmem:[%s0 + $0x80] sm:$0xff]
  %v29 = vld [vmem:[%s0 + $0x88] sm:$0xff]
  %v30 = vld [vmem:[%s0 + $0x90] sm:$0xff]
  %v31 = vld [vmem:[%s0 + $0x98] sm:$0xff]
  %v32 = vld [vmem:[%s0 + $0xa0] sm:$0xff]
  %v33 = vld [vmem:[%s0 + $0xa8] sm:$0xff]
  %v34 = vld [vmem:[%s0 + $0xb0] sm:$0xff]
  %v35 = vld [vmem:[%s0 + $0xb8] sm:$0xff]
  %v36 = vld [vmem:[%s0 + $0xc0] sm:$0xff]
  %v37 = vld [vmem:[%s0 + $0xc8] sm:$0xff]
  %v38 = vld [vmem:[%s0 + $0xd0] sm:$0xff]
  %v39 = vld [vmem:[%s0 + $0xd8] sm:$0xff]
  %v40 = vld [vmem:[%s0 + $0xe0] sm:$0xff]
  %v41 = vld [vmem:[%s0 + $0xe8] sm:$0xff]
  %v42 = vld [vmem:[%s0 + $0xf0] sm:$0xff]
  %v43 = vld [vmem:[%s0 + $0xf8] sm:$0xff]
  %v44 = vld [vmem:[%s1] sm:$0xf]
  %v45 = vld [vmem:[%s1 + $0x4] sm:$0xf]
  %v46 = vld [vmem:[%s1 + $0x8] sm:$0xf]
  %v47 = vld [vmem:[%s1 + $0xc] sm:$0xf]
  %v48 = vld [vmem:[%s1 + $0x10] sm:$0xf]
  %v49 = vld [vmem:[%s1 + $0x14] sm:$0xf]
  %v50 = vld [vmem:[%s1 + $0x18] sm:$0xf]
  %v51 = vld [vmem:[%s1 + $0x1c] sm:$0xf]
  %v52 = vld [vmem:[%s1 + $0x20] sm:$0xf]
  %v53 = vld [vmem:[%s1 + $0x24] sm:$0xf]
  %v54 = vld [vmem:[%s1 + $0x28] sm:$0xf]
  %v55 = vld [vmem:[%s1 + $0x2c] sm:$0xf]
  %v56 = vld [vmem:[%s1 + $0x30] sm:$0xf]
  %v57 = vld [vmem:[%s1 + $0x34] sm:$0xf]
  %v58 = vld [vmem:[%s1 + $0x38] sm:$0xf]
  %v59 = vld [vmem:[%s1 + $0x3c] sm:$0xf]
  %v60 = vld [vmem:[%s1 + $0x40] sm:$0xf]
  %v61 = vld [vmem:[%s1 + $0x44] sm:$0xf]
  %v62 = vld [vmem:[%s1 + $0x48] sm:$0xf]
  %v63 = vld [vmem:[%s1 + $0x4c] sm:$0xf]
  %v64 = vld [vmem:[%s1 + $0x50] sm:$0xf]
  %v65 = vld [vmem:[%s1 + $0x54] sm:$0xf]
  %v66 = vld [vmem:[%s1 + $0x58] sm:$0xf]
  %v67 = vld [vmem:[%s1 + $0x5c] sm:$0xf]
  %v68 = vld [vmem:[%s1 + $0x60] sm:$0xf]
  %v69 = vld [vmem:[%s1 + $0x64] sm:$0xf]
  %v70 = vld [vmem:[%s1 + $0x68] sm:$0xf]
  %v71 = vld [vmem:[%s1 + $0x6c] sm:$0xf]
  %v72 = vld [vmem:[%s1 + $0x70] sm:$0xf]
  %v73 = vld [vmem:[%s1 + $0x74] sm:$0xf]
  %v74 = vld [vmem:[%s1 + $0x78] sm:$0xf]
  %v75 = vld [vmem:[%s1 + $0x7c] sm:$0xf]
  %v76 = vld [vmem:[%s1 + $0x80] sm:$0xf]
  %v77 = vld [vmem:[%s1 + $0x84] sm:$0xf]
  %v78 = vld [vmem:[%s1 + $0x88] sm:$0xf]
  %v79 = vld [vmem:[%s1 + $0x8c] sm:$0xf]
  %v80 = vld [vmem:[%s1 + $0x90] sm:$0xf]
  %v81 = vld [vmem:[%s1 + $0x94] sm:$0xf]
  %v82 = vld [vmem:[%s1 + $0x98] sm:$0xf]
  %v83 = vld [vmem:[%s1 + $0x9c] sm:$0xf]
  %v84 = vld [vmem:[%s1 + $0xa0] sm:$0xf]
  %v85 = vld [vmem:[%s1 + $0xa4] sm:$0xf]
  %v86 = vld [vmem:[%s1 + $0xa8] sm:$0xf]
  %v87 = vld [vmem:[%s1 + $0xac] sm:$0xf]
  %v88 = vld [vmem:[%s1 + $0xb0] sm:$0xf]
  %v89 = vld [vmem:[%s1 + $0xb4] sm:$0xf]
  %v90 = vld [vmem:[%s1 + $0xb8] sm:$0xf]
  %v91 = vld [vmem:[%s1 + $0xbc] sm:$0xf]
  %v92 = vld [vmem:[%s1 + $0xc0] sm:$0xf]
  %v93 = vld [vmem:[%s1 + $0xc4] sm:$0xf]
  %v94 = vld [vmem:[%s1 + $0xc8] sm:$0xf]
  %v95 = vld [vmem:[%s1 + $0xcc] sm:$0xf]
  %v96 = vld [vmem:[%s1 + $0xd0] sm:$0xf]
  %v97 = vld [vmem:[%s1 + $0xd4] sm:$0xf]
  %v98 = vld [vmem:[%s1 + $0xd8] sm:$0xf]
  %v99 = vld [vmem:[%s1 + $0xdc] sm:$0xf]
  %v100 = vld [vmem:[%s1 + $0xe0] sm:$0xf]
  %v101 = vld [vmem:[%s1 + $0xe4] sm:$0xf]
  %v102 = vld [vmem:[%s1 + $0xe8] sm:$0xf]
  %v103 = vld [vmem:[%s1 + $0xec] sm:$0xf]
  %v104 = vld [vmem:[%s1 + $0xf0] sm:$0xf]
  %v105 = vld [vmem:[%s1 + $0xf4] sm:$0xf]
  %v106 = vld [vmem:[%s1 + $0xf8] sm:$0xf]
  %v107 = vld [vmem:[%s1 + $0xfc] sm:$0xf]
  %v140 = vunpack.c.l.b16 %v12
  %v141 = vunpack.c.h.b16 %v12
  %v142 = vunpack.c.l.b16 %v13
  %v143 = vunpack.c.h.b16 %v13
  %v144 = vunpack.c.l.b16 %v14
  %v145 = vunpack.c.h.b16 %v14
  %v146 = vunpack.c.l.b16 %v15
  %v147 = vunpack.c.h.b16 %v15
  %v148 = vunpack.c.l.b16 %v16
  %v149 = vunpack.c.h.b16 %v16
  %v150 = vunpack.c.l.b16 %v17
  %v151 = vunpack.c.h.b16 %v17
  %v152 = vunpack.c.l.b16 %v18
  %v153 = vunpack.c.h.b16 %v18
  %v154 = vunpack.c.l.b16 %v19
  %v155 = vunpack.c.h.b16 %v19
  %v156 = vunpack.c.l.b16 %v20
  %v157 = vunpack.c.h.b16 %v20
  %v158 = vunpack.c.l.b16 %v21
  %v159 = vunpack.c.h.b16 %v21
  %v160 = vunpack.c.l.b16 %v22
  %v161 = vunpack.c.h.b16 %v22
  %v162 = vunpack.c.l.b16 %v23
  %v163 = vunpack.c.h.b16 %v23
  %v164 = vunpack.c.l.b16 %v24
  %v165 = vunpack.c.h.b16 %v24
  %v166 = vunpack.c.l.b16 %v25
  %v167 = vunpack.c.h.b16 %v25
  %v168 = vunpack.c.l.b16 %v26
  %v169 = vunpack.c.h.b16 %v26
  %v170 = vunpack.c.l.b16 %v27
  %v171 = vunpack.c.h.b16 %v27
  %v172 = vunpack.c.l.b16 %v28
  %v173 = vunpack.c.h.b16 %v28
  %v174 = vunpack.c.l.b16 %v29
  %v175 = vunpack.c.h.b16 %v29
  %v176 = vunpack.c.l.b16 %v30
  %v177 = vunpack.c.h.b16 %v30
  %v178 = vunpack.c.l.b16 %v31
  %v179 = vunpack.c.h.b16 %v31
  %v180 = vunpack.c.l.b16 %v32
  %v181 = vunpack.c.h.b16 %v32
  %v182 = vunpack.c.l.b16 %v33
  %v183 = vunpack.c.h.b16 %v33
  %v184 = vunpack.c.l.b16 %v34
  %v185 = vunpack.c.h.b16 %v34
  %v186 = vunpack.c.l.b16 %v35
  %v187 = vunpack.c.h.b16 %v35
  %v188 = vunpack.c.l.b16 %v36
  %v189 = vunpack.c.h.b16 %v36
  %v190 = vunpack.c.l.b16 %v37
  %v191 = vunpack.c.h.b16 %v37
  %v192 = vunpack.c.l.b16 %v38
  %v193 = vunpack.c.h.b16 %v38
  %v194 = vunpack.c.l.b16 %v39
  %v195 = vunpack.c.h.b16 %v39
  %v196 = vunpack.c.l.b16 %v40
  %v197 = vunpack.c.h.b16 %v40
  %v198 = vunpack.c.l.b16 %v41
  %v199 = vunpack.c.h.b16 %v41
  %v200 = vunpack.c.l.b16 %v42
  %v201 = vunpack.c.h.b16 %v42
  %v202 = vunpack.c.l.b16 %v43
  %v203 = vunpack.c.h.b16 %v43
  %v204 = vpack.c.b16 %v144, %v140
  %v205 = vpack.c.b16 %v145, %v141
  %v206 = vpack.c.b16 %v146, %v142
  %v207 = vpack.c.b16 %v147, %v143
  %v208 = vpack.c.b16 %v152, %v148
  %v209 = vpack.c.b16 %v153, %v149
  %v210 = vpack.c.b16 %v154, %v150
  %v211 = vpack.c.b16 %v155, %v151
  %v212 = vpack.c.b16 %v160, %v156
  %v213 = vpack.c.b16 %v161, %v157
  %v214 = vpack.c.b16 %v162, %v158
  %v215 = vpack.c.b16 %v163, %v159
  %v216 = vpack.c.b16 %v168, %v164
  %v217 = vpack.c.b16 %v169, %v165
  %v218 = vpack.c.b16 %v170, %v166
  %v219 = vpack.c.b16 %v171, %v167
  %v220 = vpack.c.b16 %v176, %v172
  %v221 = vpack.c.b16 %v177, %v173
  %v222 = vpack.c.b16 %v178, %v174
  %v223 = vpack.c.b16 %v179, %v175
  %v224 = vpack.c.b16 %v184, %v180
  %v225 = vpack.c.b16 %v185, %v181
  %v226 = vpack.c.b16 %v186, %v182
  %v227 = vpack.c.b16 %v187, %v183
  %v228 = vpack.c.b16 %v192, %v188
  %v229 = vpack.c.b16 %v193, %v189
  %v230 = vpack.c.b16 %v194, %v190
  %v231 = vpack.c.b16 %v195, %v191
  %v232 = vpack.c.b16 %v200, %v196
  %v233 = vpack.c.b16 %v201, %v197
  %v234 = vpack.c.b16 %v202, %v198
  %v235 = vpack.c.b16 %v203, %v199
  %v332 = vunpack.c.l.b16 %v44
  %v333 = vunpack.c.l.b16 %v45
  %v334 = vunpack.c.l.b16 %v46
  %v335 = vunpack.c.l.b16 %v47
  %v336 = vunpack.c.l.b16 %v48
  %v337 = vunpack.c.l.b16 %v49
  %v338 = vunpack.c.l.b16 %v50
  %v339 = vunpack.c.l.b16 %v51
  %v340 = vunpack.c.l.b16 %v52
  %v341 = vunpack.c.l.b16 %v53
  %v342 = vunpack.c.l.b16 %v54
  %v343 = vunpack.c.l.b16 %v55
  %v344 = vunpack.c.l.b16 %v56
  %v345 = vunpack.c.l.b16 %v57
  %v346 = vunpack.c.l.b16 %v58
  %v347 = vunpack.c.l.b16 %v59
  %v348 = vunpack.c.l.b16 %v60
  %v349 = vunpack.c.l.b16 %v61
  %v350 = vunpack.c.l.b16 %v62
  %v351 = vunpack.c.l.b16 %v63
  %v352 = vunpack.c.l.b16 %v64
  %v353 = vunpack.c.l.b16 %v65
  %v354 = vunpack.c.l.b16 %v66
  %v355 = vunpack.c.l.b16 %v67
  %v356 = vunpack.c.l.b16 %v68
  %v357 = vunpack.c.l.b16 %v69
  %v358 = vunpack.c.l.b16 %v70
  %v359 = vunpack.c.l.b16 %v71
  %v360 = vunpack.c.l.b16 %v72
  %v361 = vunpack.c.l.b16 %v73
  %v362 = vunpack.c.l.b16 %v74
  %v363 = vunpack.c.l.b16 %v75
  %v364 = vunpack.c.l.b16 %v76
  %v365 = vunpack.c.l.b16 %v77
  %v366 = vunpack.c.l.b16 %v78
  %v367 = vunpack.c.l.b16 %v79
  %v368 = vunpack.c.l.b16 %v80
  %v369 = vunpack.c.l.b16 %v81
  %v370 = vunpack.c.l.b16 %v82
  %v371 = vunpack.c.l.b16 %v83
  %v372 = vunpack.c.l.b16 %v84
  %v373 = vunpack.c.l.b16 %v85
  %v374 = vunpack.c.l.b16 %v86
  %v375 = vunpack.c.l.b16 %v87
  %v376 = vunpack.c.l.b16 %v88
  %v377 = vunpack.c.l.b16 %v89
  %v378 = vunpack.c.l.b16 %v90
  %v379 = vunpack.c.l.b16 %v91
  %v380 = vunpack.c.l.b16 %v92
  %v381 = vunpack.c.l.b16 %v93
  %v382 = vunpack.c.l.b16 %v94
  %v383 = vunpack.c.l.b16 %v95
  %v384 = vunpack.c.l.b16 %v96
  %v385 = vunpack.c.l.b16 %v97
  %v386 = vunpack.c.l.b16 %v98
  %v387 = vunpack.c.l.b16 %v99
  %v388 = vunpack.c.l.b16 %v100
  %v389 = vunpack.c.l.b16 %v101
  %v390 = vunpack.c.l.b16 %v102
  %v391 = vunpack.c.l.b16 %v103
  %v392 = vunpack.c.l.b16 %v104
  %v393 = vunpack.c.l.b16 %v105
  %v394 = vunpack.c.l.b16 %v106
  %v395 = vunpack.c.l.b16 %v107
  %v396 = vpack.c.b16 %v333, %v332
  %v397 = vpack.c.b16 %v335, %v334
  %v398 = vpack.c.b16 %v337, %v336
  %v399 = vpack.c.b16 %v339, %v338
  %v400 = vpack.c.b16 %v341, %v340
  %v401 = vpack.c.b16 %v343, %v342
  %v402 = vpack.c.b16 %v345, %v344
  %v403 = vpack.c.b16 %v347, %v346
  %v404 = vpack.c.b16 %v349, %v348
  %v405 = vpack.c.b16 %v351, %v350
  %v406 = vpack.c.b16 %v353, %v352
  %v407 = vpack.c.b16 %v355, %v354
  %v408 = vpack.c.b16 %v357, %v356
  %v409 = vpack.c.b16 %v359, %v358
  %v410 = vpack.c.b16 %v361, %v360
  %v411 = vpack.c.b16 %v363, %v362
  %v412 = vpack.c.b16 %v365, %v364
  %v413 = vpack.c.b16 %v367, %v366
  %v414 = vpack.c.b16 %v369, %v368
  %v415 = vpack.c.b16 %v371, %v370
  %v416 = vpack.c.b16 %v373, %v372
  %v417 = vpack.c.b16 %v375, %v374
  %v418 = vpack.c.b16 %v377, %v376
  %v419 = vpack.c.b16 %v379, %v378
  %v420 = vpack.c.b16 %v381, %v380
  %v421 = vpack.c.b16 %v383, %v382
  %v422 = vpack.c.b16 %v385, %v384
  %v423 = vpack.c.b16 %v387, %v386
  %v424 = vpack.c.b16 %v389, %v388
  %v425 = vpack.c.b16 %v391, %v390
  %v426 = vpack.c.b16 %v393, %v392
  %v427 = vpack.c.b16 %v395, %v394
  %460 = vmatprep.subr.bf16.mxu0 0
  %461 = vmatpush1.bf16.msra.mxu0 %v396
  %462 = vmatprep.subr.bf16.mxu0 0
  %463 = vmatpush1.bf16.msra.mxu0 %v397
  %464 = vmatprep.subr.bf16.mxu0 0
  %465 = vmatpush1.bf16.msra.mxu0 %v398
  %466 = vmatprep.subr.bf16.mxu0 0
  %467 = vmatpush1.bf16.msra.mxu0 %v399
  %468 = vmatprep.subr.bf16.mxu0 0
  %469 = vmatpush1.bf16.msra.mxu0 %v400
  %470 = vmatprep.subr.bf16.mxu0 0
  %471 = vmatpush1.bf16.msra.mxu0 %v401
  %472 = vmatprep.subr.bf16.mxu0 0
  %473 = vmatpush1.bf16.msra.mxu0 %v402
  %474 = vmatprep.subr.bf16.mxu0 0
  %475 = vmatpush1.bf16.msra.mxu0 %v403
  %476 = vmatprep.subr.bf16.mxu0 0
  %477 = vmatpush1.bf16.msra.mxu0 %v404
  %478 = vmatprep.subr.bf16.mxu0 0
  %479 = vmatpush1.bf16.msra.mxu0 %v405
  %480 = vmatprep.subr.bf16.mxu0 0
  %481 = vmatpush1.bf16.msra.mxu0 %v406
  %482 = vmatprep.subr.bf16.mxu0 0
  %483 = vmatpush1.bf16.msra.mxu0 %v407
  %484 = vmatprep.subr.bf16.mxu0 0
  %485 = vmatpush1.bf16.msra.mxu0 %v408
  %486 = vmatprep.subr.bf16.mxu0 0
  %487 = vmatpush1.bf16.msra.mxu0 %v409
  %488 = vmatprep.subr.bf16.mxu0 0
  %489 = vmatpush1.bf16.msra.mxu0 %v410
  %490 = vmatprep.subr.bf16.mxu0 0
  %491 = vmatpush1.bf16.msra.mxu0 %v411
  %492 = vmatprep.mubr.bf16.mxu0 %v205
  %493 = vmatmul.mubr.bf16.gmra.mrb[0].mxu0 %v204
  %v494 = vpop.f32.mrb[0].mxu0
  %v495 = vadd.f32 0.0, %v494
  %v496 = vpop.f32.mrb[0].mxu0
  %v497 = vpop.f32.mrb[0].mxu0
  %v498 = vadd.f32 0.0, %v497
  %v499 = vpop.f32.mrb[0].mxu0
  %500 = vmatprep.mubr.bf16.mxu0 %v209
  %501 = vmatmul.mubr.bf16.gmra.mrb[0].mxu0 %v208
  %v502 = vpop.f32.mrb[0].mxu0
  %v503 = vadd.f32 0.0, %v502
  %v504 = vpop.f32.mrb[0].mxu0
  %v505 = vpop.f32.mrb[0].mxu0
  %v506 = vadd.f32 0.0, %v505
  %v507 = vpop.f32.mrb[0].mxu0
  %508 = vmatprep.mubr.bf16.mxu0 %v213
  %509 = vmatmul.mubr.bf16.gmra.mrb[0].mxu0 %v212
  %v510 = vpop.f32.mrb[0].mxu0
  %v511 = vadd.f32 0.0, %v510
  %v512 = vpop.f32.mrb[0].mxu0
  %v513 = vpop.f32.mrb[0].mxu0
  %v514 = vadd.f32 0.0, %v513
  %v515 = vpop.f32.mrb[0].mxu0
  %516 = vmatprep.mubr.bf16.mxu0 %v217
  %517 = vmatmul.mubr.bf16.gmra.mrb[0].mxu0 %v216
  %v518 = vpop.f32.mrb[0].mxu0
  %v519 = vadd.f32 0.0, %v518
  %v520 = vpop.f32.mrb[0].mxu0
  %v521 = vpop.f32.mrb[0].mxu0
  %v522 = vadd.f32 0.0, %v521
  %v523 = vpop.f32.mrb[0].mxu0
  %524 = vmatprep.mubr.bf16.mxu0 %v221
  %525 = vmatmul.mubr.bf16.gmra.mrb[0].mxu0 %v220
  %v526 = vpop.f32.mrb[0].mxu0
  %v527 = vadd.f32 0.0, %v526
  %v528 = vpop.f32.mrb[0].mxu0
  %v529 = vpop.f32.mrb[0].mxu0
  %v530 = vadd.f32 0.0, %v529
  %v531 = vpop.f32.mrb[0].mxu0
  %532 = vmatprep.mubr.bf16.mxu0 %v225
  %533 = vmatmul.mubr.bf16.gmra.mrb[0].mxu0 %v224
  %v534 = vpop.f32.mrb[0].mxu0
  %v535 = vadd.f32 0.0, %v534
  %v536 = vpop.f32.mrb[0].mxu0
  %v537 = vpop.f32.mrb[0].mxu0
  %v538 = vadd.f32 0.0, %v537
  %v539 = vpop.f32.mrb[0].mxu0
  %540 = vmatprep.mubr.bf16.mxu0 %v229
  %541 = vmatmul.mubr.bf16.gmra.mrb[0].mxu0 %v228
  %v542 = vpop.f32.mrb[0].mxu0
  %v543 = vadd.f32 0.0, %v542
  %v544 = vpop.f32.mrb[0].mxu0
  %v545 = vpop.f32.mrb[0].mxu0
  %v546 = vadd.f32 0.0, %v545
  %v547 = vpop.f32.mrb[0].mxu0
  %548 = vmatprep.mubr.bf16.mxu0 %v233
  %549 = vmatmul.mubr.bf16.gmra.mrb[0].mxu0 %v232
  %v550 = vpop.f32.mrb[0].mxu0
  %v551 = vadd.f32 0.0, %v550
  %v552 = vpop.f32.mrb[0].mxu0
  %v553 = vpop.f32.mrb[0].mxu0
  %v554 = vadd.f32 0.0, %v553
  %v555 = vpop.f32.mrb[0].mxu0
  %556 = vdwg.mxu0
  %557 = vmatprep.subr.bf16.mxu0 0
  %558 = vmatpush1.bf16.msra.mxu0 %v412
  %559 = vmatprep.subr.bf16.mxu0 0
  %560 = vmatpush1.bf16.msra.mxu0 %v413
  %561 = vmatprep.subr.bf16.mxu0 0
  %562 = vmatpush1.bf16.msra.mxu0 %v414
  %563 = vmatprep.subr.bf16.mxu0 0
  %564 = vmatpush1.bf16.msra.mxu0 %v415
  %565 = vmatprep.subr.bf16.mxu0 0
  %566 = vmatpush1.bf16.msra.mxu0 %v416
  %567 = vmatprep.subr.bf16.mxu0 0
  %568 = vmatpush1.bf16.msra.mxu0 %v417
  %569 = vmatprep.subr.bf16.mxu0 0
  %570 = vmatpush1.bf16.msra.mxu0 %v418
  %571 = vmatprep.subr.bf16.mxu0 0
  %572 = vmatpush1.bf16.msra.mxu0 %v419
  %573 = vmatprep.subr.bf16.mxu0 0
  %574 = vmatpush1.bf16.msra.mxu0 %v420
  %575 = vmatprep.subr.bf16.mxu0 0
  %576 = vmatpush1.bf16.msra.mxu0 %v421
  %577 = vmatprep.subr.bf16.mxu0 0
  %578 = vmatpush1.bf16.msra.mxu0 %v422
  %579 = vmatprep.subr.bf16.mxu0 0
  %580 = vmatpush1.bf16.msra.mxu0 %v423
  %581 = vmatprep.subr.bf16.mxu0 0
  %582 = vmatpush1.bf16.msra.mxu0 %v424
  %583 = vmatprep.subr.bf16.mxu0 0
  %584 = vmatpush1.bf16.msra.mxu0 %v425
  %585 = vmatprep.subr.bf16.mxu0 0
  %586 = vmatpush1.bf16.msra.mxu0 %v426
  %587 = vmatprep.subr.bf16.mxu0 0
  %588 = vmatpush1.bf16.msra.mxu0 %v427
  %589 = vmatprep.mubr.bf16.mxu0 %v207
  %590 = vmatmul.mubr.bf16.gmra.mrb[0].mxu0 %v206
  %v591 = vpop.f32.mrb[0].mxu0
  %v592 = vadd.f32 %v495, %v591
  %v593 = vpop.f32.mrb[0].mxu0
  %v594 = vpop.f32.mrb[0].mxu0
  %v595 = vadd.f32 %v498, %v594
  %v596 = vpop.f32.mrb[0].mxu0
  %597 = vmatprep.mubr.bf16.mxu0 %v211
  %598 = vmatmul.mubr.bf16.gmra.mrb[0].mxu0 %v210
  %v599 = vpop.f32.mrb[0].mxu0
  %v600 = vadd.f32 %v503, %v599
  %v601 = vpop.f32.mrb[0].mxu0
  %v602 = vpop.f32.mrb[0].mxu0
  %v603 = vadd.f32 %v506, %v602
  %v604 = vpop.f32.mrb[0].mxu0
  %605 = vmatprep.mubr.bf16.mxu0 %v215
  %606 = vmatmul.mubr.bf16.gmra.mrb[0].mxu0 %v214
  %v607 = vpop.f32.mrb[0].mxu0
  %v608 = vadd.f32 %v511, %v607
  %v609 = vpop.f32.mrb[0].mxu0
  %v610 = vpop.f32.mrb[0].mxu0
  %v611 = vadd.f32 %v514, %v610
  %v612 = vpop.f32.mrb[0].mxu0
  %613 = vmatprep.mubr.bf16.mxu0 %v219
  %614 = vmatmul.mubr.bf16.gmra.mrb[0].mxu0 %v218
  %v615 = vpop.f32.mrb[0].mxu0
  %v616 = vadd.f32 %v519, %v615
  %v617 = vpop.f32.mrb[0].mxu0
  %v618 = vpop.f32.mrb[0].mxu0
  %v619 = vadd.f32 %v522, %v618
  %v620 = vpop.f32.mrb[0].mxu0
  %621 = vmatprep.mubr.bf16.mxu0 %v223
  %622 = vmatmul.mubr.bf16.gmra.mrb[0].mxu0 %v222
  %v623 = vpop.f32.mrb[0].mxu0
  %v624 = vadd.f32 %v527, %v623
  %v625 = vpop.f32.mrb[0].mxu0
  %v626 = vpop.f32.mrb[0].mxu0
  %v627 = vadd.f32 %v530, %v626
  %v628 = vpop.f32.mrb[0].mxu0
  %629 = vmatprep.mubr.bf16.mxu0 %v227
  %630 = vmatmul.mubr.bf16.gmra.mrb[0].mxu0 %v226
  %v631 = vpop.f32.mrb[0].mxu0
  %v632 = vadd.f32 %v535, %v631
  %v633 = vpop.f32.mrb[0].mxu0
  %v634 = vpop.f32.mrb[0].mxu0
  %v635 = vadd.f32 %v538, %v634
  %v636 = vpop.f32.mrb[0].mxu0
  %637 = vmatprep.mubr.bf16.mxu0 %v231
  %638 = vmatmul.mubr.bf16.gmra.mrb[0].mxu0 %v230
  %v639 = vpop.f32.mrb[0].mxu0
  %v640 = vadd.f32 %v543, %v639
  %v641 = vpop.f32.mrb[0].mxu0
  %v642 = vpop.f32.mrb[0].mxu0
  %v643 = vadd.f32 %v546, %v642
  %v644 = vpop.f32.mrb[0].mxu0
  %645 = vmatprep.mubr.bf16.mxu0 %v235
  %646 = vmatmul.mubr.bf16.gmra.mrb[0].mxu0 %v234
  %v647 = vpop.f32.mrb[0].mxu0
  %v648 = vadd.f32 %v551, %v647
  %v649 = vpop.f32.mrb[0].mxu0
  %v650 = vpop.f32.mrb[0].mxu0
  %v651 = vadd.f32 %v554, %v650
  %v652 = vpop.f32.mrb[0].mxu0
  %653 = vdwg.mxu0
  %v654 = vadd.f32 %v592, %v595
  %v655 = vadd.f32 %v654, %v600
  %v656 = vadd.f32 %v655, %v603
  %v657 = vadd.f32 %v656, %v608
  %v658 = vadd.f32 %v657, %v611
  %v659 = vadd.f32 %v658, %v616
  %v660 = vadd.f32 %v659, %v619
  %v661 = vrot.slane %v660, 4
  %v662 = vadd.f32 %v660, %v661
  %v663 = vrot.slane %v662, 2
  %v664 = vadd.f32 %v662, %v663
  %v665 = vrot.slane %v664, 1
  %v666 = vadd.f32 %v664, %v665
  %v667 = vadd.f32 %v624, %v627
  %v668 = vadd.f32 %v667, %v632
  %v669 = vadd.f32 %v668, %v635
  %v670 = vadd.f32 %v669, %v640
  %v671 = vadd.f32 %v670, %v643
  %v672 = vadd.f32 %v671, %v648
  %v673 = vadd.f32 %v672, %v651
  %v674 = vrot.slane %v673, 4
  %v675 = vadd.f32 %v673, %v674
  %v676 = vrot.slane %v675, 2
  %v677 = vadd.f32 %v675, %v676
  %v678 = vrot.slane %v677, 1
  %v679 = vadd.f32 %v677, %v678
  %v680 = vmul.f32 %v592, %v592
  %v681 = vmul.f32 %v595, %v595
  %v682 = vmul.f32 %v600, %v600
  %v683 = vmul.f32 %v603, %v603
  %v684 = vmul.f32 %v608, %v608
  %v685 = vmul.f32 %v611, %v611
  %v686 = vmul.f32 %v616, %v616
  %v687 = vmul.f32 %v619, %v619
  %v688 = vmul.f32 %v624, %v624
  %v689 = vmul.f32 %v627, %v627
  %v690 = vmul.f32 %v632, %v632
  %v691 = vmul.f32 %v635, %v635
  %v692 = vmul.f32 %v640, %v640
  %v693 = vmul.f32 %v643, %v643
  %v694 = vmul.f32 %v648, %v648
  %v695 = vmul.f32 %v651, %v651
  %v696 = vadd.f32 %v680, %v681
  %v697 = vadd.f32 %v696, %v682
  %v698 = vadd.f32 %v697, %v683
  %v699 = vadd.f32 %v698, %v684
  %v700 = vadd.f32 %v699, %v685
  %v701 = vadd.f32 %v700, %v686
  %v702 = vadd.f32 %v701, %v687
  %v703 = vrot.slane %v702, 4
  %v704 = vadd.f32 %v702, %v703
  %v705 = vrot.slane %v704, 2
  %v706 = vadd.f32 %v704, %v705
  %v707 = vrot.slane %v706, 1
  %v708 = vadd.f32 %v706, %v707
  %v709 = vadd.f32 %v688, %v689
  %v710 = vadd.f32 %v709, %v690
  %v711 = vadd.f32 %v710, %v691
  %v712 = vadd.f32 %v711, %v692
  %v713 = vadd.f32 %v712, %v693
  %v714 = vadd.f32 %v713, %v694
  %v715 = vadd.f32 %v714, %v695
  %v716 = vrot.slane %v715, 4
  %v717 = vadd.f32 %v715, %v716
  %v718 = vrot.slane %v717, 2
  %v719 = vadd.f32 %v717, %v718
  %v720 = vrot.slane %v719, 1
  %v721 = vadd.f32 %v719, %v720
  %v722 = vmul.f32 %v666, 0.015625
  %v723 = vmul.f32 %v679, 0.015625
  %v724 = vmul.f32 %v708, 0.015625
  %v725 = vmul.f32 %v721, 0.015625
  %v726 = vmul.f32 %v722, %v722
  %v727 = vmul.f32 %v723, %v723
  %v728 = vsub.f32 %v724, %v726
  %v729 = vsub.f32 %v725, %v727
  %v730 = vmax.f32 %v728, 0.0
  %v731 = vmax.f32 %v729, 0.0
  %v732 = vsub.f32 %v592, %v722
  %v733 = vsub.f32 %v595, %v722
  %v734 = vsub.f32 %v600, %v722
  %v735 = vsub.f32 %v603, %v722
  %v736 = vsub.f32 %v608, %v722
  %v737 = vsub.f32 %v611, %v722
  %v738 = vsub.f32 %v616, %v722
  %v739 = vsub.f32 %v619, %v722
  %v740 = vsub.f32 %v624, %v723
  %v741 = vsub.f32 %v627, %v723
  %v742 = vsub.f32 %v632, %v723
  %v743 = vsub.f32 %v635, %v723
  %v744 = vsub.f32 %v640, %v723
  %v745 = vsub.f32 %v643, %v723
  %v746 = vsub.f32 %v648, %v723
  %v747 = vsub.f32 %v651, %v723
  %v748 = vadd.f32 %v730, 1e-05
  %v749 = vadd.f32 %v731, 1e-05
  %v750 = vrsqrt.pop %v748
  %v751 = vrsqrt.pop %v749
  %v752 = vmul.f32 %v732, %v750
  %v753 = vmul.f32 %v733, %v750
  %v754 = vmul.f32 %v734, %v750
  %v755 = vmul.f32 %v735, %v750
  %v756 = vmul.f32 %v736, %v750
  %v757 = vmul.f32 %v737, %v750
  %v758 = vmul.f32 %v738, %v750
  %v759 = vmul.f32 %v739, %v750
  %v760 = vmul.f32 %v740, %v751
  %v761 = vmul.f32 %v741, %v751
  %v762 = vmul.f32 %v742, %v751
  %v763 = vmul.f32 %v743, %v751
  %v764 = vmul.f32 %v744, %v751
  %v765 = vmul.f32 %v745, %v751
  %v766 = vmul.f32 %v746, %v751
  %v767 = vmul.f32 %v747, %v751
  %vm768 = vcmp.gt.f32.partialorder %v752, 0.0
  %vm769 = vcmp.gt.f32.partialorder %v753, 0.0
  %vm770 = vcmp.gt.f32.partialorder %v754, 0.0
  %vm771 = vcmp.gt.f32.partialorder %v755, 0.0
  %vm772 = vcmp.gt.f32.partialorder %v756, 0.0
  %vm773 = vcmp.gt.f32.partialorder %v757, 0.0
  %vm774 = vcmp.gt.f32.partialorder %v758, 0.0
  %vm775 = vcmp.gt.f32.partialorder %v759, 0.0
  %vm776 = vcmp.gt.f32.partialorder %v760, 0.0
  %vm777 = vcmp.gt.f32.partialorder %v761, 0.0
  %vm778 = vcmp.gt.f32.partialorder %v762, 0.0
  %vm779 = vcmp.gt.f32.partialorder %v763, 0.0
  %vm780 = vcmp.gt.f32.partialorder %v764, 0.0
  %vm781 = vcmp.gt.f32.partialorder %v765, 0.0
  %vm782 = vcmp.gt.f32.partialorder %v766, 0.0
  %vm783 = vcmp.gt.f32.partialorder %v767, 0.0
  %v784 = vmul.f32 %v752, 0.2
  %v785 = vmul.f32 %v753, 0.2
  %v786 = vmul.f32 %v754, 0.2
  %v787 = vmul.f32 %v755, 0.2
  %v788 = vmul.f32 %v756, 0.2
  %v789 = vmul.f32 %v757, 0.2
  %v790 = vmul.f32 %v758, 0.2
  %v791 = vmul.f32 %v759, 0.2
  %v792 = vmul.f32 %v760, 0.2
  %v793 = vmul.f32 %v761, 0.2
  %v794 = vmul.f32 %v762, 0.2
  %v795 = vmul.f32 %v763, 0.2
  %v796 = vmul.f32 %v764, 0.2
  %v797 = vmul.f32 %v765, 0.2
  %v798 = vmul.f32 %v766, 0.2
  %v799 = vmul.f32 %v767, 0.2
  %v800 = vsel %vm768, %v752, %v784
  %v801 = vsel %vm769, %v753, %v785
  %v802 = vsel %vm770, %v754, %v786
  %v803 = vsel %vm771, %v755, %v787
  %v804 = vsel %vm772, %v756, %v788
  %v805 = vsel %vm773, %v757, %v789
  %v806 = vsel %vm774, %v758, %v790
  %v807 = vsel %vm775, %v759, %v791
  %v808 = vsel %vm776, %v760, %v792
  %v809 = vsel %vm777, %v761, %v793
  %v810 = vsel %vm778, %v762, %v794
  %v811 = vsel %vm779, %v763, %v795
  %v812 = vsel %vm780, %v764, %v796
  %v813 = vsel %vm781, %v765, %v797
  %v814 = vsel %vm782, %v766, %v798
  %v815 = vsel %vm783, %v767, %v799
  %v816 = vpack.c.bf16 %v801, %v800
  %v817 = vpack.c.bf16 %v803, %v802
  %v818 = vpack.c.bf16 %v805, %v804
  %v819 = vpack.c.bf16 %v807, %v806
  %v820 = vpack.c.bf16 %v809, %v808
  %v821 = vpack.c.bf16 %v811, %v810
  %v822 = vpack.c.bf16 %v813, %v812
  %v823 = vpack.c.bf16 %v815, %v814
  %v832 = vunpack.c.l.b16 %v816
  %v833 = vunpack.c.h.b16 %v816
  %v834 = vunpack.c.l.b16 %v817
  %v835 = vunpack.c.h.b16 %v817
  %v836 = vunpack.c.l.b16 %v818
  %v837 = vunpack.c.h.b16 %v818
  %v838 = vunpack.c.l.b16 %v819
  %v839 = vunpack.c.h.b16 %v819
  %v840 = vunpack.c.l.b16 %v820
  %v841 = vunpack.c.h.b16 %v820
  %v842 = vunpack.c.l.b16 %v821
  %v843 = vunpack.c.h.b16 %v821
  %v844 = vunpack.c.l.b16 %v822
  %v845 = vunpack.c.h.b16 %v822
  %v846 = vunpack.c.l.b16 %v823
  %v847 = vunpack.c.h.b16 %v823
  %v848 = vpack.c.b16 %v832, %v832
  %v849 = vpack.c.b16 %v833, %v833
  %v850 = vpack.c.b16 %v834, %v834
  %v851 = vpack.c.b16 %v835, %v835
  %v852 = vpack.c.b16 %v836, %v836
  %v853 = vpack.c.b16 %v837, %v837
  %v854 = vpack.c.b16 %v838, %v838
  %v855 = vpack.c.b16 %v839, %v839
  %v856 = vpack.c.b16 %v840, %v840
  %v857 = vpack.c.b16 %v841, %v841
  %v858 = vpack.c.b16 %v842, %v842
  %v859 = vpack.c.b16 %v843, %v843
  %v860 = vpack.c.b16 %v844, %v844
  %v861 = vpack.c.b16 %v845, %v845
  %v862 = vpack.c.b16 %v846, %v846
  %v863 = vpack.c.b16 %v847, %v847
  %880 = vst [vmem:[%s2] sm:$0xf] %v848
  %881 = vst [vmem:[%s2 + $0x4] sm:$0xf] %v849
  %882 = vst [vmem:[%s2 + $0x8] sm:$0xf] %v850
  %883 = vst [vmem:[%s2 + $0xc] sm:$0xf] %v851
  %884 = vst [vmem:[%s2 + $0x10] sm:$0xf] %v852
  %885 = vst [vmem:[%s2 + $0x14] sm:$0xf] %v853
  %886 = vst [vmem:[%s2 + $0x18] sm:$0xf] %v854
  %887 = vst [vmem:[%s2 + $0x1c] sm:$0xf] %v855
  %888 = vst [vmem:[%s2 + $0x20] sm:$0xf] %v856
  %889 = vst [vmem:[%s2 + $0x24] sm:$0xf] %v857
  %890 = vst [vmem:[%s2 + $0x28] sm:$0xf] %v858
  %891 = vst [vmem:[%s2 + $0x2c] sm:$0xf] %v859
  %892 = vst [vmem:[%s2 + $0x30] sm:$0xf] %v860
  %893 = vst [vmem:[%s2 + $0x34] sm:$0xf] %v861
  %894 = vst [vmem:[%s2 + $0x38] sm:$0xf] %v862
  %895 = vst [vmem:[%s2 + $0x3c] sm:$0xf] %v863
  // Predicated region
  $region10: #{discriminator_forward.7} parent=0 // pred_check
    _
  $region11: #{discriminator_forward.7} parent=0 // pred_check_branch
    %897 = sbr.rel (0) target = $region13
  $region12: #{discriminator_forward.7} parent=0 // pred_region
    _
  $region13: #{discriminator_forward.7} parent=0 // pred_fallthru
    _
  // Predicated region
  $region14: #{discriminator_forward.7} parent=0 // pred_check
    _
  $region15: #{discriminator_forward.7} parent=0 // pred_check_branch
    %899 = sbr.rel (0) target = $region17
  $region16: #{discriminator_forward.7} parent=0 // pred_region
    _
  $region17: #{discriminator_forward.7} parent=0 // pred_fallthru
    _

// kernel: discriminator_forward.8
$region0: #{discriminator_forward.8}
  #allocation0 [shape = 'u32[]', space=smem, size = 0x4, offset = 0x4, fixed_abs, tag = 'smem constant byte address 0x4 - core index']
  #allocation1 [shape = 'u32[144,128]{1,0:T(1,128)}', space=vmem, size = 0x12000, scoped, tag = 'internal scratch']
  %s0 = inlined_call_operand.vmem [shape: bf16[32,256], index: 0, kind: input, shape index: {}]
  %s1 = inlined_call_operand.vmem [shape: bf16[256,128], index: 1, kind: input, shape index: {}]
  %s2 = inlined_call_operand.vmem [shape: bf16[32,128], index: 2, kind: output, shape index: {}]
  %s3 = sld [smem:[#allocation0]]
  $region18: #{discriminator_forward.8} parent=0
    _
  %s5 = ssub.s32 1, %s3
  %s6 = scalar_select 0, %s5, %s3
  // Predicated region
  $region2: #{discriminator_forward.8} parent=0 // pred_check
    _
  $region3: #{discriminator_forward.8} parent=0 // pred_check_branch
    %8 = sbr.rel (0) target = $region5
  $region4: #{discriminator_forward.8} parent=0 // pred_region
    _
  $region5: #{discriminator_forward.8} parent=0 // pred_fallthru
    _
  // Predicated region
  $region6: #{discriminator_forward.8} parent=0 // pred_check
    _
  $region7: #{discriminator_forward.8} parent=0 // pred_check_branch
    %10 = sbr.rel (0) target = $region9
  $region8: #{discriminator_forward.8} parent=0 // pred_region
    _
  $region9: #{discriminator_forward.8} parent=0 // pred_fallthru
    _
  %v12 = vld [vmem:[%s0] sm:$0xff]
  %v13 = vld [vmem:[%s0 + $0x8] sm:$0xff]
  %v14 = vld [vmem:[%s0 + $0x10] sm:$0xff]
  %v15 = vld [vmem:[%s0 + $0x18] sm:$0xff]
  %v16 = vld [vmem:[%s1] sm:$0xf]
  %v17 = vld [vmem:[%s1 + $0x4] sm:$0xf]
  %v18 = vld [vmem:[%s1 + $0x8] sm:$0xf]
  %v19 = vld [vmem:[%s1 + $0xc] sm:$0xf]
  %v20 = vld [vmem:[%s1 + $0x10] sm:$0xf]
  %v21 = vld [vmem:[%s1 + $0x14] sm:$0xf]
  %v22 = vld [vmem:[%s1 + $0x18] sm:$0xf]
  %v23 = vld [vmem:[%s1 + $0x1c] sm:$0xf]
  %v24 = vld [vmem:[%s1 + $0x20] sm:$0xf]
  %v25 = vld [vmem:[%s1 + $0x24] sm:$0xf]
  %v26 = vld [vmem:[%s1 + $0x28] sm:$0xf]
  %v27 = vld [vmem:[%s1 + $0x2c] sm:$0xf]
  %v28 = vld [vmem:[%s1 + $0x30] sm:$0xf]
  %v29 = vld [vmem:[%s1 + $0x34] sm:$0xf]
  %v30 = vld [vmem:[%s1 + $0x38] sm:$0xf]
  %v31 = vld [vmem:[%s1 + $0x3c] sm:$0xf]
  %v32 = vld [vmem:[%s1 + $0x40] sm:$0xf]
  %v33 = vld [vmem:[%s1 + $0x44] sm:$0xf]
  %v34 = vld [vmem:[%s1 + $0x48] sm:$0xf]
  %v35 = vld [vmem:[%s1 + $0x4c] sm:$0xf]
  %v36 = vld [vmem:[%s1 + $0x50] sm:$0xf]
  %v37 = vld [vmem:[%s1 + $0x54] sm:$0xf]
  %v38 = vld [vmem:[%s1 + $0x58] sm:$0xf]
  %v39 = vld [vmem:[%s1 + $0x5c] sm:$0xf]
  %v40 = vld [vmem:[%s1 + $0x60] sm:$0xf]
  %v41 = vld [vmem:[%s1 + $0x64] sm:$0xf]
  %v42 = vld [vmem:[%s1 + $0x68] sm:$0xf]
  %v43 = vld [vmem:[%s1 + $0x6c] sm:$0xf]
  %v44 = vld [vmem:[%s1 + $0x70] sm:$0xf]
  %v45 = vld [vmem:[%s1 + $0x74] sm:$0xf]
  %v46 = vld [vmem:[%s1 + $0x78] sm:$0xf]
  %v47 = vld [vmem:[%s1 + $0x7c] sm:$0xf]
  %v52 = vunpack.c.l.b16 %v12
  %v53 = vunpack.c.h.b16 %v12
  %v54 = vunpack.c.l.b16 %v13
  %v55 = vunpack.c.h.b16 %v13
  %v56 = vunpack.c.l.b16 %v14
  %v57 = vunpack.c.h.b16 %v14
  %v58 = vunpack.c.l.b16 %v15
  %v59 = vunpack.c.h.b16 %v15
  %v60 = vpack.c.b16 %v54, %v52
  %v61 = vpack.c.b16 %v55, %v53
  %v62 = vpack.c.b16 %v58, %v56
  %v63 = vpack.c.b16 %v59, %v57
  %v100 = vunpack.c.l.b16 %v16
  %v101 = vunpack.c.l.b16 %v17
  %v102 = vunpack.c.l.b16 %v18
  %v103 = vunpack.c.l.b16 %v19
  %v104 = vunpack.c.l.b16 %v20
  %v105 = vunpack.c.l.b16 %v21
  %v106 = vunpack.c.l.b16 %v22
  %v107 = vunpack.c.l.b16 %v23
  %v108 = vunpack.c.l.b16 %v24
  %v109 = vunpack.c.l.b16 %v25
  %v110 = vunpack.c.l.b16 %v26
  %v111 = vunpack.c.l.b16 %v27
  %v112 = vunpack.c.l.b16 %v28
  %v113 = vunpack.c.l.b16 %v29
  %v114 = vunpack.c.l.b16 %v30
  %v115 = vunpack.c.l.b16 %v31
  %v116 = vunpack.c.l.b16 %v32
  %v117 = vunpack.c.l.b16 %v33
  %v118 = vunpack.c.l.b16 %v34
  %v119 = vunpack.c.l.b16 %v35
  %v120 = vunpack.c.l.b16 %v36
  %v121 = vunpack.c.l.b16 %v37
  %v122 = vunpack.c.l.b16 %v38
  %v123 = vunpack.c.l.b16 %v39
  %v124 = vunpack.c.l.b16 %v40
  %v125 = vunpack.c.l.b16 %v41
  %v126 = vunpack.c.l.b16 %v42
  %v127 = vunpack.c.l.b16 %v43
  %v128 = vunpack.c.l.b16 %v44
  %v129 = vunpack.c.l.b16 %v45
  %v130 = vunpack.c.l.b16 %v46
  %v131 = vunpack.c.l.b16 %v47
  %v132 = vpack.c.b16 %v101, %v100
  %v133 = vpack.c.b16 %v103, %v102
  %v134 = vpack.c.b16 %v105, %v104
  %v135 = vpack.c.b16 %v107, %v106
  %v136 = vpack.c.b16 %v109, %v108
  %v137 = vpack.c.b16 %v111, %v110
  %v138 = vpack.c.b16 %v113, %v112
  %v139 = vpack.c.b16 %v115, %v114
  %v140 = vpack.c.b16 %v117, %v116
  %v141 = vpack.c.b16 %v119, %v118
  %v142 = vpack.c.b16 %v121, %v120
  %v143 = vpack.c.b16 %v123, %v122
  %v144 = vpack.c.b16 %v125, %v124
  %v145 = vpack.c.b16 %v127, %v126
  %v146 = vpack.c.b16 %v129, %v128
  %v147 = vpack.c.b16 %v131, %v130
  %164 = vmatprep.subr.bf16.mxu0 0
  %165 = vmatpush1.bf16.msra.mxu0 %v132
  %166 = vmatprep.subr.bf16.mxu0 0
  %167 = vmatpush1.bf16.msra.mxu0 %v133
  %168 = vmatprep.subr.bf16.mxu0 0
  %169 = vmatpush1.bf16.msra.mxu0 %v134
  %170 = vmatprep.subr.bf16.mxu0 0
  %171 = vmatpush1.bf16.msra.mxu0 %v135
  %172 = vmatprep.subr.bf16.mxu0 0
  %173 = vmatpush1.bf16.msra.mxu0 %v136
  %174 = vmatprep.subr.bf16.mxu0 0
  %175 = vmatpush1.bf16.msra.mxu0 %v137
  %176 = vmatprep.subr.bf16.mxu0 0
  %177 = vmatpush1.bf16.msra.mxu0 %v138
  %178 = vmatprep.subr.bf16.mxu0 0
  %179 = vmatpush1.bf16.msra.mxu0 %v139
  %180 = vmatprep.subr.bf16.mxu0 0
  %181 = vmatpush1.bf16.msra.mxu0 %v140
  %182 = vmatprep.subr.bf16.mxu0 0
  %183 = vmatpush1.bf16.msra.mxu0 %v141
  %184 = vmatprep.subr.bf16.mxu0 0
  %185 = vmatpush1.bf16.msra.mxu0 %v142
  %186 = vmatprep.subr.bf16.mxu0 0
  %187 = vmatpush1.bf16.msra.mxu0 %v143
  %188 = vmatprep.subr.bf16.mxu0 0
  %189 = vmatpush1.bf16.msra.mxu0 %v144
  %190 = vmatprep.subr.bf16.mxu0 0
  %191 = vmatpush1.bf16.msra.mxu0 %v145
  %192 = vmatprep.subr.bf16.mxu0 0
  %193 = vmatpush1.bf16.msra.mxu0 %v146
  %194 = vmatprep.subr.bf16.mxu0 0
  %195 = vmatpush1.bf16.msra.mxu0 %v147
  %196 = vmatprep.mubr.bf16.mxu0 %v61
  %197 = vmatmul.mubr.bf16.gmra.mrb[0].mxu0 %v60
  %v198 = vpop.f32.mrb[0].mxu0
  %v199 = vadd.f32 0.0, %v198
  %v200 = vpop.f32.mrb[0].mxu0
  %v201 = vpop.f32.mrb[0].mxu0
  %v202 = vadd.f32 0.0, %v201
  %v203 = vpop.f32.mrb[0].mxu0
  %204 = vmatprep.mubr.bf16.mxu0 %v63
  %205 = vmatmul.mubr.bf16.gmra.mrb[0].mxu0 %v62
  %v206 = vpop.f32.mrb[0].mxu0
  %v207 = vadd.f32 0.0, %v206
  %v208 = vpop.f32.mrb[0].mxu0
  %v209 = vpop.f32.mrb[0].mxu0
  %v210 = vadd.f32 0.0, %v209
  %v211 = vpop.f32.mrb[0].mxu0
  %212 = vdwg.mxu0
  %v213 = vadd.f32 %v199, %v202
  %v214 = vrot.slane %v213, 4
  %v215 = vadd.f32 %v213, %v214
  %v216 = vrot.slane %v215, 2
  %v217 = vadd.f32 %v215, %v216
  %v218 = vrot.slane %v217, 1
  %v219 = vadd.f32 %v217, %v218
  %v220 = vadd.f32 %v207, %v210
  %v221 = vrot.slane %v220, 4
  %v222 = vadd.f32 %v220, %v221
  %v223 = vrot.slane %v222, 2
  %v224 = vadd.f32 %v222, %v223
  %v225 = vrot.slane %v224, 1
  %v226 = vadd.f32 %v224, %v225
  %v227 = vmul.f32 %v199, %v199
  %v228 = vmul.f32 %v202, %v202
  %v229 = vmul.f32 %v207, %v207
  %v230 = vmul.f32 %v210, %v210
  %v231 = vadd.f32 %v227, %v228
  %v232 = vrot.slane %v231, 4
  %v233 = vadd.f32 %v231, %v232
  %v234 = vrot.slane %v233, 2
  %v235 = vadd.f32 %v233, %v234
  %v236 = vrot.slane %v235, 1
  %v237 = vadd.f32 %v235, %v236
  %v238 = vadd.f32 %v229, %v230
  %v239 = vrot.slane %v238, 4
  %v240 = vadd.f32 %v238, %v239
  %v241 = vrot.slane %v240, 2
  %v242 = vadd.f32 %v240, %v241
  %v243 = vrot.slane %v242, 1
  %v244 = vadd.f32 %v242, %v243
  %v245 = vmul.f32 %v219, 0.0625
  %v246 = vmul.f32 %v226, 0.0625
  %v247 = vmul.f32 %v237, 0.0625
  %v248 = vmul.f32 %v244, 0.0625
  %v249 = vmul.f32 %v245, %v245
  %v250 = vmul.f32 %v246, %v246
  %v251 = vsub.f32 %v247, %v249
  %v252 = vsub.f32 %v248, %v250
  %v253 = vmax.f32 %v251, 0.0
  %v254 = vmax.f32 %v252, 0.0
  %v255 = vsub.f32 %v199, %v245
  %v256 = vsub.f32 %v202, %v245
  %v257 = vsub.f32 %v207, %v246
  %v258 = vsub.f32 %v210, %v246
  %v259 = vadd.f32 %v253, 1e-05
  %v260 = vadd.f32 %v254, 1e-05
  %v261 = vrsqrt.pop %v259
  %v262 = vrsqrt.pop %v260
  %v263 = vmul.f32 %v255, %v261
  %v264 = vmul.f32 %v256, %v261
  %v265 = vmul.f32 %v257, %v262
  %v266 = vmul.f32 %v258, %v262
  %vm267 = vcmp.gt.f32.partialorder %v263, 0.0
  %vm268 = vcmp.gt.f32.partialorder %v264, 0.0
  %vm269 = vcmp.gt.f32.partialorder %v265, 0.0
  %vm270 = vcmp.gt.f32.partialorder %v266, 0.0
  %v271 = vmul.f32 %v263, 0.2
  %v272 = vmul.f32 %v264, 0.2
  %v273 = vmul.f32 %v265, 0.2
  %v274 = vmul.f32 %v266, 0.2
  %v275 = vsel %vm267, %v263, %v271
  %v276 = vsel %vm268, %v264, %v272
  %v277 = vsel %vm269, %v265, %v273
  %v278 = vsel %vm270, %v266, %v274
  %v279 = vpack.c.bf16 %v276, %v275
  %v280 = vpack.c.bf16 %v278, %v277
  %v283 = vunpack.c.l.b16 %v279
  %v284 = vunpack.c.h.b16 %v279
  %v285 = vunpack.c.l.b16 %v280
  %v286 = vunpack.c.h.b16 %v280
  %v287 = vpack.c.b16 %v283, %v283
  %v288 = vpack.c.b16 %v284, %v284
  %v289 = vpack.c.b16 %v285, %v285
  %v290 = vpack.c.b16 %v286, %v286
  %295 = vst [vmem:[%s2] sm:$0xf] %v287
  %296 = vst [vmem:[%s2 + $0x4] sm:$0xf] %v288
  %297 = vst [vmem:[%s2 + $0x8] sm:$0xf] %v289
  %298 = vst [vmem:[%s2 + $0xc] sm:$0xf] %v290
  // Predicated region
  $region10: #{discriminator_forward.8} parent=0 // pred_check
    _
  $region11: #{discriminator_forward.8} parent=0 // pred_check_branch
    %300 = sbr.rel (0) target = $region13
  $region12: #{discriminator_forward.8} parent=0 // pred_region
    _
  $region13: #{discriminator_forward.8} parent=0 // pred_fallthru
    _
  // Predicated region
  $region14: #{discriminator_forward.8} parent=0 // pred_check
    _
  $region15: #{discriminator_forward.8} parent=0 // pred_check_branch
    %302 = sbr.rel (0) target = $region17
  $region16: #{discriminator_forward.8} parent=0 // pred_region
    _
  $region17: #{discriminator_forward.8} parent=0 // pred_fallthru
    _

// kernel: discriminator_forward.9
$region0: #{discriminator_forward.9}
  #allocation0 [shape = 'u32[]', space=smem, size = 0x4, offset = 0x4, fixed_abs, tag = 'smem constant byte address 0x4 - core index']
  #allocation1 [shape = 'u32[144,128]{1,0:T(1,128)}', space=vmem, size = 0x12000, scoped, tag = 'internal scratch']
  %s0 = inlined_call_operand.vmem [shape: bf16[32,128], index: 0, kind: input, shape index: {}]
  %s1 = inlined_call_operand.vmem [shape: bf16[128,128], index: 1, kind: input, shape index: {}]
  %s2 = inlined_call_operand.vmem [shape: f32[1,128], index: 2, kind: input, shape index: {}]
  %s3 = inlined_call_operand.vmem [shape: f32[32,128], index: 3, kind: output, shape index: {}]
  %s4 = sld [smem:[#allocation0]]
  $region22: #{discriminator_forward.9} parent=0
    _
  %s6 = ssub.s32 1, %s4
  %s7 = scalar_select 0, %s6, %s4
  // Predicated region
  $region2: #{discriminator_forward.9} parent=0 // pred_check
    _
  $region3: #{discriminator_forward.9} parent=0 // pred_check_branch
    %9 = sbr.rel (0) target = $region5
  $region4: #{discriminator_forward.9} parent=0 // pred_region
    _
  $region5: #{discriminator_forward.9} parent=0 // pred_fallthru
    _
  // Predicated region
  $region6: #{discriminator_forward.9} parent=0 // pred_check
    _
  $region7: #{discriminator_forward.9} parent=0 // pred_check_branch
    %11 = sbr.rel (0) target = $region9
  $region8: #{discriminator_forward.9} parent=0 // pred_region
    _
  $region9: #{discriminator_forward.9} parent=0 // pred_fallthru
    _
  // Predicated region
  $region10: #{discriminator_forward.9} parent=0 // pred_check
    _
  $region11: #{discriminator_forward.9} parent=0 // pred_check_branch
    %13 = sbr.rel (0) target = $region13
  $region12: #{discriminator_forward.9} parent=0 // pred_region
    _
  $region13: #{discriminator_forward.9} parent=0 // pred_fallthru
    _
  %v15 = vld [vmem:[%s0] sm:$0xf]
  %v16 = vld [vmem:[%s0 + $0x4] sm:$0xf]
  %v17 = vld [vmem:[%s0 + $0x8] sm:$0xf]
  %v18 = vld [vmem:[%s0 + $0xc] sm:$0xf]
  %v19 = vld [vmem:[%s1] sm:$0xf]
  %v20 = vld [vmem:[%s1 + $0x4] sm:$0xf]
  %v21 = vld [vmem:[%s1 + $0x8] sm:$0xf]
  %v22 = vld [vmem:[%s1 + $0xc] sm:$0xf]
  %v23 = vld [vmem:[%s1 + $0x10] sm:$0xf]
  %v24 = vld [vmem:[%s1 + $0x14] sm:$0xf]
  %v25 = vld [vmem:[%s1 + $0x18] sm:$0xf]
  %v26 = vld [vmem:[%s1 + $0x1c] sm:$0xf]
  %v27 = vld [vmem:[%s1 + $0x20] sm:$0xf]
  %v28 = vld [vmem:[%s1 + $0x24] sm:$0xf]
  %v29 = vld [vmem:[%s1 + $0x28] sm:$0xf]
  %v30 = vld [vmem:[%s1 + $0x2c] sm:$0xf]
  %v31 = vld [vmem:[%s1 + $0x30] sm:$0xf]
  %v32 = vld [vmem:[%s1 + $0x34] sm:$0xf]
  %v33 = vld [vmem:[%s1 + $0x38] sm:$0xf]
  %v34 = vld [vmem:[%s1 + $0x3c] sm:$0xf]
  %v35 = vld [vmem:[%s2] sm:$0x1]
  %v37 = vlaneseq
  %v38 = vshrl.u32 %v37, 7
  %v39 = vsub.s32 0, %v38
  %v40 = vrot.slane %v35, %v39
  %v46 = vunpack.c.l.b16 %v15
  %v47 = vunpack.c.l.b16 %v16
  %v48 = vunpack.c.l.b16 %v17
  %v49 = vunpack.c.l.b16 %v18
  %v50 = vpack.c.b16 %v47, %v46
  %v51 = vpack.c.b16 %v49, %v48
  %v70 = vunpack.c.l.b16 %v19
  %v71 = vunpack.c.l.b16 %v20
  %v72 = vunpack.c.l.b16 %v21
  %v73 = vunpack.c.l.b16 %v22
  %v74 = vunpack.c.l.b16 %v23
  %v75 = vunpack.c.l.b16 %v24
  %v76 = vunpack.c.l.b16 %v25
  %v77 = vunpack.c.l.b16 %v26
  %v78 = vunpack.c.l.b16 %v27
  %v79 = vunpack.c.l.b16 %v28
  %v80 = vunpack.c.l.b16 %v29
  %v81 = vunpack.c.l.b16 %v30
  %v82 = vunpack.c.l.b16 %v31
  %v83 = vunpack.c.l.b16 %v32
  %v84 = vunpack.c.l.b16 %v33
  %v85 = vunpack.c.l.b16 %v34
  %v86 = vpack.c.b16 %v71, %v70
  %v87 = vpack.c.b16 %v73, %v72
  %v88 = vpack.c.b16 %v75, %v74
  %v89 = vpack.c.b16 %v77, %v76
  %v90 = vpack.c.b16 %v79, %v78
  %v91 = vpack.c.b16 %v81, %v80
  %v92 = vpack.c.b16 %v83, %v82
  %v93 = vpack.c.b16 %v85, %v84
  %102 = vmatprep.subr.bf16.mxu0 0
  %103 = vmatpush1.bf16.msra.mxu0 %v86
  %104 = vmatprep.subr.bf16.mxu0 0
  %105 = vmatpush1.bf16.msra.mxu0 %v87
  %106 = vmatprep.subr.bf16.mxu0 0
  %107 = vmatpush1.bf16.msra.mxu0 %v88
  %108 = vmatprep.subr.bf16.mxu0 0
  %109 = vmatpush1.bf16.msra.mxu0 %v89
  %110 = vmatprep.subr.bf16.mxu0 0
  %111 = vmatpush1.bf16.msra.mxu0 %v90
  %112 = vmatprep.subr.bf16.mxu0 0
  %113 = vmatpush1.bf16.msra.mxu0 %v91
  %114 = vmatprep.subr.bf16.mxu0 0
  %115 = vmatpush1.bf16.msra.mxu0 %v92
  %116 = vmatprep.subr.bf16.mxu0 0
  %117 = vmatpush1.bf16.msra.mxu0 %v93
  %118 = vmatprep.subr.bf16.mxu0 0
  %119 = vmatpush1.bf16.msra.mxu0 0
  %120 = vmatprep.subr.bf16.mxu0 0
  %121 = vmatpush1.bf16.msra.mxu0 0
  %122 = vmatprep.subr.bf16.mxu0 0
  %123 = vmatpush1.bf16.msra.mxu0 0
  %124 = vmatprep.subr.bf16.mxu0 0
  %125 = vmatpush1.bf16.msra.mxu0 0
  %126 = vmatprep.subr.bf16.mxu0 0
  %127 = vmatpush1.bf16.msra.mxu0 0
  %128 = vmatprep.subr.bf16.mxu0 0
  %129 = vmatpush1.bf16.msra.mxu0 0
  %130 = vmatprep.subr.bf16.mxu0 0
  %131 = vmatpush1.bf16.msra.mxu0 0
  %132 = vmatprep.subr.bf16.mxu0 0
  %133 = vmatpush1.bf16.msra.mxu0 0
  %134 = vmatprep.mubr.bf16.mxu0 0
  %135 = vmatmul.mubr.bf16.gmra.mrb[0].mxu0 %v50
  %v136 = vpop.f32.mrb[0].mxu0
  %v137 = vadd.f32 %v40, %v136
  %v138 = vpop.f32.mrb[0].mxu0
  %v139 = vpop.f32.mrb[0].mxu0
  %v140 = vadd.f32 %v40, %v139
  %v141 = vpop.f32.mrb[0].mxu0
  %142 = vmatprep.mubr.bf16.mxu0 0
  %143 = vmatmul.mubr.bf16.gmra.mrb[0].mxu0 %v51
  %v144 = vpop.f32.mrb[0].mxu0
  %v145 = vadd.f32 %v40, %v144
  %v146 = vpop.f32.mrb[0].mxu0
  %v147 = vpop.f32.mrb[0].mxu0
  %v148 = vadd.f32 %v40, %v147
  %v149 = vpop.f32.mrb[0].mxu0
  %150 = vdwg.mxu0
  %v151 = vand.u32 2147483647, %v137
  %v152 = vand.u32 2147483647, %v140
  %v153 = vand.u32 2147483647, %v145
  %v154 = vand.u32 2147483647, %v148
  %v155 = vsub.f32 0.0, %v151
  %v156 = vsub.f32 0.0, %v152
  %v157 = vsub.f32 0.0, %v153
  %v158 = vsub.f32 0.0, %v154
  %v159 = vmul.f32 %v155, 1.442695
  %v160 = vpow.pop %v159
  %v161 = vmul.f32 %v156, 1.442695
  %v162 = vpow.pop %v161
  %v163 = vmul.f32 %v157, 1.442695
  %v164 = vpow.pop %v163
  %v165 = vmul.f32 %v158, 1.442695
  %v166 = vpow.pop %v165
  %vm167 = vcmp.ge.f32.partialorder %v137, 0.0
  %vm168 = vcmp.ge.f32.partialorder %v140, 0.0
  %vm169 = vcmp.ge.f32.partialorder %v145, 0.0
  %vm170 = vcmp.ge.f32.partialorder %v148, 0.0
  %v171 = vadd.f32 %v160, 1.0
  %v172 = vadd.f32 %v162, 1.0
  %v173 = vadd.f32 %v164, 1.0
  %v174 = vadd.f32 %v166, 1.0
  %v175 = vrcp.pop %v171
  %v176 = vmul.f32 1.0, %v175
  %v177 = vrcp.pop %v172
  %v178 = vmul.f32 1.0, %v177
  %v179 = vrcp.pop %v173
  %v180 = vmul.f32 1.0, %v179
  %v181 = vrcp.pop %v174
  %v182 = vmul.f32 1.0, %v181
  %v183 = vmul.f32 %v160, %v175
  %v184 = vmul.f32 %v162, %v177
  %v185 = vmul.f32 %v164, %v179
  %v186 = vmul.f32 %v166, %v181
  %v187 = vsel %vm167, %v176, %v183
  %v188 = vsel %vm168, %v178, %v184
  %v189 = vsel %vm169, %v180, %v185
  %v190 = vsel %vm170, %v182, %v186
  %191 = vst [vmem:[%s3] sm:$0xff] %v187
  %192 = vst [vmem:[%s3 + $0x8] sm:$0xff] %v188
  %193 = vst [vmem:[%s3 + $0x10] sm:$0xff] %v189
  %194 = vst [vmem:[%s3 + $0x18] sm:$0xff] %v190
  // Predicated region
  $region14: #{discriminator_forward.9} parent=0 // pred_check
    _
  $region15: #{discriminator_forward.9} parent=0 // pred_check_branch
    %196 = sbr.rel (0) target = $region17
  $region16: #{discriminator_forward.9} parent=0 // pred_region
    _
  $region17: #{discriminator_forward.9} parent=0 // pred_fallthru
    _
  // Predicated region
  $region18: #{discriminator_forward.9} parent=0 // pred_check
    _
  $region19: #{discriminator_forward.9} parent=0 // pred_check_branch
    %198 = sbr.rel (0) target = $region21
  $region20: #{discriminator_forward.9} parent=0 // pred_region
    _
  $region21: #{discriminator_forward.9} parent=0 // pred_fallthru
    _

</llo_original>
